<compile_context>
chip_gen: v5e
topology: v5e:2x2
jax: 0.10.0
libtpu: 0.0.40
codegen_flags: <defaults>
</compile_context>

<pallas_src>
import functools
import math

import jax
import jax.numpy as jnp
from jax import lax
from jax.experimental import pallas as pl
from jax.experimental.pallas import tpu as pltpu


def _round_up(x, m):
    return -(-x // m) * m


# ---------------------------------------------------------------------------
# Kernel
# ---------------------------------------------------------------------------
def _flash_causal_kernel(q_tab_ref, k_tab_ref,          # scalar prefetch (SMEM)
                         q_ref, k_ref, v_ref,           # VMEM input tiles
                         o_ref,                         # VMEM output tile
                         m_ref, l_ref, acc_ref, qs_ref,  # VMEM scratch
                         *, scale, block_q, block_k):
    """One (bh, t) step of the triangular flash-attention schedule.

    q_ref  : (1, bq, D) query tile of row q_tab[t]
    k_ref  : (1, bk, D) key tile   of column k_tab[t]
    v_ref  : (1, bk, D) value tile
    o_ref  : (1, bq, D) output tile (resident across the row's k steps)
    m_ref  : (bq, 1) f32 running row max
    l_ref  : (bq, 1) f32 running softmax denominator
    acc_ref: (bq, D) f32 running un-normalized output
    qs_ref : (bq, D) pre-scaled query tile in the MXU compute dtype
    """
    t = pl.program_id(1)
    qi = q_tab_ref[t]                       # q-tile index of this step
    ki = k_tab_ref[t]                       # k-tile index of this step
    q_start = qi * block_q                  # absolute first query row
    k_start = ki * block_k                  # absolute first key column

    is_first = ki == 0                                        # first k step of the row
    is_last = (k_start + block_k) >= (q_start + block_q)      # tile holding the row's last diagonal
    needs_mask = (k_start + block_k - 1) > q_start            # tile crosses the diagonal

    @pl.when(is_first)
    def _init():
        m_ref[...] = jnp.full(m_ref.shape, -jnp.inf, m_ref.dtype)
        l_ref[...] = jnp.zeros(l_ref.shape, l_ref.dtype)
        acc_ref[...] = jnp.zeros(acc_ref.shape, acc_ref.dtype)
        # Hoist the 1/sqrt(D) scaling of q out of the k loop (once per q row),
        # folded into the compute-dtype cast.
        qs_ref[...] = (q_ref[0].astype(jnp.float32) * scale).astype(qs_ref.dtype)

    def _update(apply_mask):
        cd = qs_ref.dtype
        q = qs_ref[...]                              # (bq, D), pre-scaled
        k = k_ref[0].astype(cd)                      # (bk, D)
        # NT contraction (both last dims) -> no materialized K transpose.
        s = lax.dot_general(q, k, (((1,), (1,)), ((), ())),
                            preferred_element_type=jnp.float32)   # (bq, bk) f32
        if apply_mask:
            rows = q_start + lax.broadcasted_iota(jnp.int32, s.shape, 0)
            cols = k_start + lax.broadcasted_iota(jnp.int32, s.shape, 1)
            s = jnp.where(cols <= rows, s, -jnp.inf)

        m_prev = m_ref[...]                          # (bq, 1)
        m_new = jnp.maximum(m_prev, jnp.max(s, axis=-1, keepdims=True))
        alpha = jnp.exp(m_prev - m_new)              # (bq, 1)
        p = jnp.exp(s - m_new)                       # (bq, bk)
        l_ref[...] = alpha * l_ref[...] + jnp.sum(p, axis=-1, keepdims=True)
        acc_ref[...] = alpha * acc_ref[...] + jnp.dot(
            p.astype(cd), v_ref[0].astype(cd),
            preferred_element_type=jnp.float32)
        m_ref[...] = m_new

    # Fully visible tiles: no iota/where work at all.
    @pl.when(jnp.logical_not(needs_mask))
    def _full_tile():
        _update(apply_mask=False)

    # Tiles crossing the causal diagonal: mask with absolute positions.
    @pl.when(needs_mask)
    def _diag_tile():
        _update(apply_mask=True)

    # Last k step of this q row -> normalize and store.  Exact division (the
    # output may be f32); it runs once per q row so its cost is negligible.
    @pl.when(is_last)
    def _finalize():
        o_ref[0] = (acc_ref[...] / l_ref[...]).astype(o_ref.dtype)


# ---------------------------------------------------------------------------
# Wrapper
# ---------------------------------------------------------------------------
def _build_schedule(num_q_tiles, block_q, block_k):
    """Triangular (q_tile, k_tile) visit order: per q row, k = 0 .. diag."""
    q_idx, k_idx = [], []
    for qi in range(num_q_tiles):
        last_k = (qi * block_q + block_q - 1) // block_k
        for ki in range(last_k + 1):
            q_idx.append(qi)
            k_idx.append(ki)
    return (jnp.asarray(q_idx, dtype=jnp.int32),
            jnp.asarray(k_idx, dtype=jnp.int32))


def causal_flash_attention(q, k, v, *, block_q=128, block_k=256,
                           compute_dtype=None, interpret=False):
    """Full-sequence causal attention.  q/k/v: (B, H, S, D).

    compute_dtype: dtype fed to the MXU.  Defaults to the input dtype (bf16
    inputs take the fast bf16 MXU path automatically); pass jnp.bfloat16 to
    force it for f32 inputs at a small precision cost.
    """
    B, H, S, D = q.shape
    assert k.shape == q.shape and v.shape == q.shape
    assert block_q % 8 == 0 and block_k % 8 == 0
    out_dtype = q.dtype
    cd = jnp.dtype(out_dtype if compute_dtype is None else compute_dtype)

    # Capped, decoupled tiles; shrink for short sequences (kept multiples of
    # 16 so bf16 sublane packing stays legal).
    bq = min(block_q, _round_up(S, 16))
    bk = min(block_k, _round_up(S, 16))
    s_pad = _round_up(S, math.lcm(bq, bk))

    BH = B * H
    qf = q.reshape(BH, S, D)
    kf = k.reshape(BH, S, D)
    vf = v.reshape(BH, S, D)
    if s_pad != S:
        # Padded keys land at positions >= S > every real query index, so the
        # causal mask already hides them; padded query rows are sliced off.
        pad = ((0, 0), (0, s_pad - S), (0, 0))
        qf = jnp.pad(qf, pad)
        kf = jnp.pad(kf, pad)
        vf = jnp.pad(vf, pad)

    num_q_tiles = s_pad // bq
    q_tab, k_tab = _build_schedule(num_q_tiles, bq, bk)
    num_steps = int(q_tab.shape[0])           # nt*(nt+1)/2-ish, no dead steps

    kernel = functools.partial(_flash_causal_kernel,
                               scale=1.0 / math.sqrt(D),
                               block_q=bq, block_k=bk)

    grid_spec = pltpu.PrefetchScalarGridSpec(
        num_scalar_prefetch=2,
        grid=(BH, num_steps),
        in_specs=[
            pl.BlockSpec((1, bq, D), lambda b, t, qt, kt: (b, qt[t], 0)),
            pl.BlockSpec((1, bk, D), lambda b, t, qt, kt: (b, kt[t], 0)),
            pl.BlockSpec((1, bk, D), lambda b, t, qt, kt: (b, kt[t], 0)),
        ],
        out_specs=pl.BlockSpec((1, bq, D), lambda b, t, qt, kt: (b, qt[t], 0)),
        scratch_shapes=[
            pltpu.VMEM((bq, 1), jnp.float32),   # m  (running row max)
            pltpu.VMEM((bq, 1), jnp.float32),   # l  (softmax denominator)
            pltpu.VMEM((bq, D), jnp.float32),   # acc (f32 accumulator)
            pltpu.VMEM((bq, D), cd),            # pre-scaled q (hoisted)
        ],
    )

    out = pl.pallas_call(
        kernel,
        out_shape=jax.ShapeDtypeStruct((BH, s_pad, D), out_dtype),
        grid_spec=grid_spec,
        compiler_params=pltpu.CompilerParams(
            # bh shards across TensorCores (megacore); the triangular step
            # axis is the reduction axis.
            dimension_semantics=("parallel", "arbitrary"),
            vmem_limit_bytes=32 * 1024 * 1024,
        ),
        interpret=interpret,
    )(q_tab, k_tab, qf, kf, vf)

    return out[:, :S, :].reshape(B, H, S, D)


# ---------------------------------------------------------------------------
# Handler (mirrors the PyTorch module)
# ---------------------------------------------------------------------------
class _DenseAttention:
    """Stand-in for nano_sparse_attn DenseAttention (dense causal, no params)."""
    name = "dense"

    def info(self):
        return {"name": self.name}


class InferenceHandler:
    """JAX/Pallas port of nano_sparse_attn InferenceHandler (dense -> dense)."""

    def __init__(self, prefill_attention=None, generation_attention=None,
                 block_q=128, block_k=256, compute_dtype=None):
        self.prefill_attention = prefill_attention or _DenseAttention()
        self.generation_attention = generation_attention or _DenseAttention()
        self.name = f"{self.prefill_attention.name}_to_{self.generation_attention.name}"
        self.output_length = None
        self._block_q = block_q
        self._block_k = block_k
        self._compute_dtype = compute_dtype

    def set_output_length(self, output_length):
        self.output_length = output_length

    def info(self):
        return {"prefill": self.prefill_attention.info(),
                "generation": self.generation_attention.info()}

    def __call__(self, queries, keys, values, layer_idx=None):
        del layer_idx  # dense attention ignores it
        input_length = queries.shape[-2] - self.output_length
        assert input_length > 0, "Input length must be > 0"
        # Dense prefill + dense generation over [prefill | generation] K/V is
        # exactly full-sequence causal attention -> fuse both stages into one
        # flash kernel.
        # TODO(synk): if a *sparse* prefill/generation attention module is
        # plugged in, dispatch to a dedicated kernel instead of this fusion.
        return causal_flash_attention(
            queries, keys, values,
            block_q=self._block_q, block_k=self._block_k,
            compute_dtype=self._compute_dtype)


# ---------------------------------------------------------------------------
# Pure-JAX references (literal port of the two-stage PyTorch forward)
# ---------------------------------------------------------------------------
def _masked_attention(q, k, v, mask, out_dtype):
    D = q.shape[-1]
    s = jnp.einsum("bhqd,bhkd->bhqk", q.astype(jnp.float32),
                   k.astype(jnp.float32),
                   precision=jax.lax.Precision.HIGHEST) / math.sqrt(D)
    s = jnp.where(mask, s, -jnp.inf)
    p = jax.nn.softmax(s, axis=-1)
    return jnp.einsum("bhqk,bhkd->bhqd", p, v.astype(jnp.float32),
                      precision=jax.lax.Precision.HIGHEST).astype(out_dtype)


def _reference_two_stage(q, k, v, output_length):
    """Dense-causal prefill, then generation queries over [prefill|generation]
    keys (causal inside the generation part), concatenated -- exactly the
    PyTorch module's forward with DenseAttention modules."""
    S = q.shape[-2]
    il = S - output_length
    ol = output_length
    pre_mask = jnp.tril(jnp.ones((il, il), dtype=bool))
    pre = _masked_attention(q[..., :il, :], k[..., :il, :], v[..., :il, :],
                            pre_mask, q.dtype)
    gen_mask = jnp.concatenate(
        [jnp.ones((ol, il), dtype=bool), jnp.tril(jnp.ones((ol, ol), dtype=bool))],
        axis=-1)
    gen = _masked_attention(q[..., il:, :], k, v, gen_mask, q.dtype)
    return jnp.concatenate([pre, gen], axis=-2)


# ---------------------------------------------------------------------------
# Demo / self-test
# ---------------------------------------------------------------------------
if __name__ == "__main__":
    batch, heads, seq, head_dim = 2, 2, 256, 128   # lane-dense head_dim
    output_length = 64

    key = jax.random.PRNGKey(0)
    kq, kk, kv = jax.random.split(key, 3)
    q = jax.random.normal(kq, (batch, heads, seq, head_dim), dtype=jnp.float32)
    k = jax.random.normal(kk, (batch, heads, seq, head_dim), dtype=jnp.float32)
    v = jax.random.normal(kv, (batch, heads, seq, head_dim), dtype=jnp.float32)

    handler = InferenceHandler()
    handler.set_output_length(output_length)

    # 1) f32 inputs: exact semantics (exact reciprocal in the finalize step).
    out = jax.block_until_ready(handler(q, k, v))
    ref = _reference_two_stage(q, k, v, output_length)
    assert out.shape == (batch, heads, seq, head_dim)
    assert jnp.allclose(out, ref, atol=2e-3, rtol=2e-3), "f32 mismatch vs reference"

    # 2) bf16 inputs: bf16 MXU path with f32 accumulation.
    qb, kb, vb = (x.astype(jnp.bfloat16) for x in (q, k, v))
    out_b = jax.block_until_ready(handler(qb, kb, vb))
    ref_b = _reference_two_stage(qb, kb, vb, output_length)
    assert jnp.allclose(out_b.astype(jnp.float32), ref_b.astype(jnp.float32),
                        atol=3e-2, rtol=3e-2), "bf16 mismatch vs reference"

    # 3) Non-divisible sequence length (padding path) with block_q != block_k
    #    (exercises the partial-diagonal masking and multi-k-tile rows).
    s2 = 200
    q2, k2, v2 = (x[..., :s2, :] for x in (q, k, v))
    out2 = jax.block_until_ready(
        causal_flash_attention(q2, k2, v2, block_q=64, block_k=128))
    ref2 = _reference_two_stage(q2, k2, v2, 40)
    assert jnp.allclose(out2, ref2, atol=2e-3, rtol=2e-3), "padded mismatch vs reference"

    print("KERNEL_OK")
</pallas_src>

<mosaic_0001>
module attributes {stable_mosaic.version = 11 : i64} {
  func.func @_flash_causal_kernel(%arg0: i32, %arg1: i32, %arg2: memref<2xi32, #tpu.memory_space<smem>>, %arg3: memref<2xi32, #tpu.memory_space<smem>>, %arg4: memref<1x128x128xf32, #tpu.memory_space<vmem>>, %arg5: memref<1x256x128xf32, #tpu.memory_space<vmem>>, %arg6: memref<1x256x128xf32, #tpu.memory_space<vmem>>, %arg7: memref<1x128x128xf32, #tpu.memory_space<vmem>>, %arg8: memref<128x1xf32, #tpu.memory_space<vmem>>, %arg9: memref<128x1xf32, #tpu.memory_space<vmem>>, %arg10: memref<128x128xf32, #tpu.memory_space<vmem>>, %arg11: memref<128x128xf32, #tpu.memory_space<vmem>>) attributes {dimension_semantics = [#tpu.dimension_semantics<parallel>, #tpu.dimension_semantics<arbitrary>], iteration_bounds = array<i64: 4, 2>, scalar_prefetch = 2 : i64, scratch_operands = 4 : i64, tpu.core_type = #tpu.core_type<tc>, window_params = [{transform_indices = @transform_0, window_bounds = array<i64: 1, 128, 128>}, {transform_indices = @transform_1, window_bounds = array<i64: 1, 256, 128>}, {transform_indices = @transform_2, window_bounds = array<i64: 1, 256, 128>}, {transform_indices = @transform_3, window_bounds = array<i64: 1, 128, 128>}]} {
    %0 = arith.index_cast %arg1 : i32 to index
    %1 = memref.load %arg2[%0] : memref<2xi32, #tpu.memory_space<smem>>
    %2 = arith.index_cast %arg1 : i32 to index
    %3 = memref.load %arg3[%2] : memref<2xi32, #tpu.memory_space<smem>>
    %c128_i32 = arith.constant 128 : i32
    %4 = arith.muli %1, %c128_i32 : i32
    %c256_i32 = arith.constant 256 : i32
    %5 = arith.muli %3, %c256_i32 : i32
    %c0_i32 = arith.constant 0 : i32
    %6 = arith.cmpi eq, %3, %c0_i32 : i32
    %c256_i32_0 = arith.constant 256 : i32
    %7 = arith.addi %5, %c256_i32_0 : i32
    %c128_i32_1 = arith.constant 128 : i32
    %8 = arith.addi %4, %c128_i32_1 : i32
    %9 = arith.cmpi sge, %7, %8 : i32
    %c256_i32_2 = arith.constant 256 : i32
    %10 = arith.addi %5, %c256_i32_2 : i32
    %c1_i32 = arith.constant 1 : i32
    %11 = arith.subi %10, %c1_i32 : i32
    %12 = arith.cmpi sgt, %11, %4 : i32
    %13 = arith.extui %6 : i1 to i32
    %c0_i32_3 = arith.constant 0 : i32
    %14 = arith.cmpi ne, %13, %c0_i32_3 : i32
    scf.if %14 {
      %cst = arith.constant 0xFF800000 : f32
      %22 = vector.broadcast %cst : f32 to vector<128x1xf32>
      %c0 = arith.constant 0 : index
      %c0_7 = arith.constant 0 : index
      %23 = vector.load %arg8[%c0, %c0_7] : memref<128x1xf32, #tpu.memory_space<vmem>>, vector<128x1xf32>
      tpu.vector_store %arg8[%c0, %c0_7], %22 {strides = array<i32>} : memref<128x1xf32, #tpu.memory_space<vmem>>, vector<128x1xf32>,
      %cst_8 = arith.constant 0.000000e+00 : f32
      %24 = vector.broadcast %cst_8 : f32 to vector<128x1xf32>
      %c0_9 = arith.constant 0 : index
      %c0_10 = arith.constant 0 : index
      %25 = vector.load %arg9[%c0_9, %c0_10] : memref<128x1xf32, #tpu.memory_space<vmem>>, vector<128x1xf32>
      tpu.vector_store %arg9[%c0_9, %c0_10], %24 {strides = array<i32>} : memref<128x1xf32, #tpu.memory_space<vmem>>, vector<128x1xf32>,
      %cst_11 = arith.constant 0.000000e+00 : f32
      %26 = vector.broadcast %cst_11 : f32 to vector<128x128xf32>
      %c0_12 = arith.constant 0 : index
      %c0_13 = arith.constant 0 : index
      %27 = vector.load %arg10[%c0_12, %c0_13] : memref<128x128xf32, #tpu.memory_space<vmem>>, vector<128x128xf32>
      tpu.vector_store %arg10[%c0_12, %c0_13], %26 {strides = array<i32>} : memref<128x128xf32, #tpu.memory_space<vmem>>, vector<128x128xf32>,
      %c0_14 = arith.constant 0 : index
      %c0_15 = arith.constant 0 : index
      %c0_16 = arith.constant 0 : index
      %28 = vector.load %arg4[%c0_14, %c0_15, %c0_16] : memref<1x128x128xf32, #tpu.memory_space<vmem>>, vector<1x128x128xf32>
      %29 = vector.shape_cast %28 : vector<1x128x128xf32> to vector<128x128xf32>
      %cst_17 = arith.constant 0.0883883461 : f32
      %30 = vector.broadcast %cst_17 : f32 to vector<128x128xf32>
      %31 = arith.mulf %29, %30 : vector<128x128xf32>
      %c0_18 = arith.constant 0 : index
      %c0_19 = arith.constant 0 : index
      %32 = vector.load %arg11[%c0_18, %c0_19] : memref<128x128xf32, #tpu.memory_space<vmem>>, vector<128x128xf32>
      tpu.vector_store %arg11[%c0_18, %c0_19], %31 {strides = array<i32>} : memref<128x128xf32, #tpu.memory_space<vmem>>, vector<128x128xf32>,
    } else {
    }
    %true = arith.constant true
    %15 = arith.xori %12, %true : i1
    %16 = arith.extui %15 : i1 to i32
    %c0_i32_4 = arith.constant 0 : i32
    %17 = arith.cmpi ne, %16, %c0_i32_4 : i32
    scf.if %17 {
      %c0 = arith.constant 0 : index
      %c0_7 = arith.constant 0 : index
      %22 = vector.load %arg11[%c0, %c0_7] : memref<128x128xf32, #tpu.memory_space<vmem>>, vector<128x128xf32>
      %c0_8 = arith.constant 0 : index
      %c0_9 = arith.constant 0 : index
      %c0_10 = arith.constant 0 : index
      %23 = vector.load %arg5[%c0_8, %c0_9, %c0_10] : memref<1x256x128xf32, #tpu.memory_space<vmem>>, vector<1x256x128xf32>
      %24 = vector.shape_cast %23 : vector<1x256x128xf32> to vector<256x128xf32>
      %cst = arith.constant dense<0.000000e+00> : vector<128x256xf32>
      %25 = tpu.matmul %22, %24, %cst {dimension_numbers = #tpu.dot_dimension_numbers<[1], [1], [0], [0], [0, 0, 1, 0], [], []>} : vector<128x128xf32>, vector<256x128xf32>, vector<128x256xf32> -> vector<128x256xf32>
      %c0_11 = arith.constant 0 : index
      %c0_12 = arith.constant 0 : index
      %26 = vector.load %arg8[%c0_11, %c0_12] : memref<128x1xf32, #tpu.memory_space<vmem>>, vector<128x1xf32>
      %cst_13 = arith.constant dense<0xFF800000> : vector<128xf32>
      %27 = vector.multi_reduction <maximumf>, %25, %cst_13 [1] : vector<128x256xf32> to vector<128xf32>
      %28 = vector.shape_cast %27 : vector<128xf32> to vector<128x1xf32>
      %29 = arith.maximumf %26, %28 : vector<128x1xf32>
      %30 = arith.subf %26, %29 : vector<128x1xf32>
      %31 = math.exp %30 : vector<128x1xf32>
      %32 = vector.broadcast %29 : vector<128x1xf32> to vector<128x256xf32>
      %33 = arith.subf %25, %32 : vector<128x256xf32>
      %34 = math.exp %33 : vector<128x256xf32>
      %c0_14 = arith.constant 0 : index
      %c0_15 = arith.constant 0 : index
      %35 = vector.load %arg9[%c0_14, %c0_15] : memref<128x1xf32, #tpu.memory_space<vmem>>, vector<128x1xf32>
      %36 = arith.mulf %31, %35 : vector<128x1xf32>
      %cst_16 = arith.constant dense<0.000000e+00> : vector<128xf32>
      %37 = vector.multi_reduction <add>, %34, %cst_16 [1] : vector<128x256xf32> to vector<128xf32>
      %38 = vector.shape_cast %37 : vector<128xf32> to vector<128x1xf32>
      %39 = arith.addf %36, %38 : vector<128x1xf32>
      %c0_17 = arith.constant 0 : index
      %c0_18 = arith.constant 0 : index
      %40 = vector.load %arg9[%c0_17, %c0_18] : memref<128x1xf32, #tpu.memory_space<vmem>>, vector<128x1xf32>
      tpu.vector_store %arg9[%c0_17, %c0_18], %39 {strides = array<i32>} : memref<128x1xf32, #tpu.memory_space<vmem>>, vector<128x1xf32>,
      %c0_19 = arith.constant 0 : index
      %c0_20 = arith.constant 0 : index
      %41 = vector.load %arg10[%c0_19, %c0_20] : memref<128x128xf32, #tpu.memory_space<vmem>>, vector<128x128xf32>
      %42 = vector.broadcast %31 : vector<128x1xf32> to vector<128x128xf32>
      %43 = arith.mulf %42, %41 : vector<128x128xf32>
      %c0_21 = arith.constant 0 : index
      %c0_22 = arith.constant 0 : index
      %c0_23 = arith.constant 0 : index
      %44 = vector.load %arg6[%c0_21, %c0_22, %c0_23] : memref<1x256x128xf32, #tpu.memory_space<vmem>>, vector<1x256x128xf32>
      %45 = vector.shape_cast %44 : vector<1x256x128xf32> to vector<256x128xf32>
      %cst_24 = arith.constant dense<0.000000e+00> : vector<128x128xf32>
      %46 = tpu.matmul %34, %45, %cst_24 {dimension_numbers = #tpu.dot_dimension_numbers<[1], [0], [0], [1], [0, 0, 1, 1], [], []>} : vector<128x256xf32>, vector<256x128xf32>, vector<128x128xf32> -> vector<128x128xf32>
      %47 = arith.addf %43, %46 : vector<128x128xf32>
      %c0_25 = arith.constant 0 : index
      %c0_26 = arith.constant 0 : index
      %48 = vector.load %arg10[%c0_25, %c0_26] : memref<128x128xf32, #tpu.memory_space<vmem>>, vector<128x128xf32>
      tpu.vector_store %arg10[%c0_25, %c0_26], %47 {strides = array<i32>} : memref<128x128xf32, #tpu.memory_space<vmem>>, vector<128x128xf32>,
      %c0_27 = arith.constant 0 : index
      %c0_28 = arith.constant 0 : index
      %49 = vector.load %arg8[%c0_27, %c0_28] : memref<128x1xf32, #tpu.memory_space<vmem>>, vector<128x1xf32>
      tpu.vector_store %arg8[%c0_27, %c0_28], %29 {strides = array<i32>} : memref<128x1xf32, #tpu.memory_space<vmem>>, vector<128x1xf32>,
    } else {
    }
    %18 = arith.extui %12 : i1 to i32
    %c0_i32_5 = arith.constant 0 : i32
    %19 = arith.cmpi ne, %18, %c0_i32_5 : i32
    scf.if %19 {
      %c0 = arith.constant 0 : index
      %c0_7 = arith.constant 0 : index
      %22 = vector.load %arg11[%c0, %c0_7] : memref<128x128xf32, #tpu.memory_space<vmem>>, vector<128x128xf32>
      %c0_8 = arith.constant 0 : index
      %c0_9 = arith.constant 0 : index
      %c0_10 = arith.constant 0 : index
      %23 = vector.load %arg5[%c0_8, %c0_9, %c0_10] : memref<1x256x128xf32, #tpu.memory_space<vmem>>, vector<1x256x128xf32>
      %24 = vector.shape_cast %23 : vector<1x256x128xf32> to vector<256x128xf32>
      %cst = arith.constant dense<0.000000e+00> : vector<128x256xf32>
      %25 = tpu.matmul %22, %24, %cst {dimension_numbers = #tpu.dot_dimension_numbers<[1], [1], [0], [0], [0, 0, 1, 0], [], []>} : vector<128x128xf32>, vector<256x128xf32>, vector<128x256xf32> -> vector<128x256xf32>
      %26 = tpu.iota {dimensions = array<i32: 0>} : vector<128x256xi32>
      %27 = vector.broadcast %4 : i32 to vector<128x256xi32>
      %28 = arith.addi %27, %26 : vector<128x256xi32>
      %29 = tpu.iota {dimensions = array<i32: 1>} : vector<128x256xi32>
      %30 = vector.broadcast %5 : i32 to vector<128x256xi32>
      %31 = arith.addi %30, %29 : vector<128x256xi32>
      %32 = arith.cmpi sle, %31, %28 : vector<128x256xi32>
      %cst_11 = arith.constant 0xFF800000 : f32
      %33 = vector.broadcast %cst_11 : f32 to vector<128x256xf32>
      %34 = arith.select %32, %25, %33 : vector<128x256xi1>, vector<128x256xf32>
      %c0_12 = arith.constant 0 : index
      %c0_13 = arith.constant 0 : index
      %35 = vector.load %arg8[%c0_12, %c0_13] : memref<128x1xf32, #tpu.memory_space<vmem>>, vector<128x1xf32>
      %cst_14 = arith.constant dense<0xFF800000> : vector<128xf32>
      %36 = vector.multi_reduction <maximumf>, %34, %cst_14 [1] : vector<128x256xf32> to vector<128xf32>
      %37 = vector.shape_cast %36 : vector<128xf32> to vector<128x1xf32>
      %38 = arith.maximumf %35, %37 : vector<128x1xf32>
      %39 = arith.subf %35, %38 : vector<128x1xf32>
      %40 = math.exp %39 : vector<128x1xf32>
      %41 = vector.broadcast %38 : vector<128x1xf32> to vector<128x256xf32>
      %42 = arith.subf %34, %41 : vector<128x256xf32>
      %43 = math.exp %42 : vector<128x256xf32>
      %c0_15 = arith.constant 0 : index
      %c0_16 = arith.constant 0 : index
      %44 = vector.load %arg9[%c0_15, %c0_16] : memref<128x1xf32, #tpu.memory_space<vmem>>, vector<128x1xf32>
      %45 = arith.mulf %40, %44 : vector<128x1xf32>
      %cst_17 = arith.constant dense<0.000000e+00> : vector<128xf32>
      %46 = vector.multi_reduction <add>, %43, %cst_17 [1] : vector<128x256xf32> to vector<128xf32>
      %47 = vector.shape_cast %46 : vector<128xf32> to vector<128x1xf32>
      %48 = arith.addf %45, %47 : vector<128x1xf32>
      %c0_18 = arith.constant 0 : index
      %c0_19 = arith.constant 0 : index
      %49 = vector.load %arg9[%c0_18, %c0_19] : memref<128x1xf32, #tpu.memory_space<vmem>>, vector<128x1xf32>
      tpu.vector_store %arg9[%c0_18, %c0_19], %48 {strides = array<i32>} : memref<128x1xf32, #tpu.memory_space<vmem>>, vector<128x1xf32>,
      %c0_20 = arith.constant 0 : index
      %c0_21 = arith.constant 0 : index
      %50 = vector.load %arg10[%c0_20, %c0_21] : memref<128x128xf32, #tpu.memory_space<vmem>>, vector<128x128xf32>
      %51 = vector.broadcast %40 : vector<128x1xf32> to vector<128x128xf32>
      %52 = arith.mulf %51, %50 : vector<128x128xf32>
      %c0_22 = arith.constant 0 : index
      %c0_23 = arith.constant 0 : index
      %c0_24 = arith.constant 0 : index
      %53 = vector.load %arg6[%c0_22, %c0_23, %c0_24] : memref<1x256x128xf32, #tpu.memory_space<vmem>>, vector<1x256x128xf32>
      %54 = vector.shape_cast %53 : vector<1x256x128xf32> to vector<256x128xf32>
      %cst_25 = arith.constant dense<0.000000e+00> : vector<128x128xf32>
      %55 = tpu.matmul %43, %54, %cst_25 {dimension_numbers = #tpu.dot_dimension_numbers<[1], [0], [0], [1], [0, 0, 1, 1], [], []>} : vector<128x256xf32>, vector<256x128xf32>, vector<128x128xf32> -> vector<128x128xf32>
      %56 = arith.addf %52, %55 : vector<128x128xf32>
      %c0_26 = arith.constant 0 : index
      %c0_27 = arith.constant 0 : index
      %57 = vector.load %arg10[%c0_26, %c0_27] : memref<128x128xf32, #tpu.memory_space<vmem>>, vector<128x128xf32>
      tpu.vector_store %arg10[%c0_26, %c0_27], %56 {strides = array<i32>} : memref<128x128xf32, #tpu.memory_space<vmem>>, vector<128x128xf32>,
      %c0_28 = arith.constant 0 : index
      %c0_29 = arith.constant 0 : index
      %58 = vector.load %arg8[%c0_28, %c0_29] : memref<128x1xf32, #tpu.memory_space<vmem>>, vector<128x1xf32>
      tpu.vector_store %arg8[%c0_28, %c0_29], %38 {strides = array<i32>} : memref<128x1xf32, #tpu.memory_space<vmem>>, vector<128x1xf32>,
    } else {
    }
    %20 = arith.extui %9 : i1 to i32
    %c0_i32_6 = arith.constant 0 : i32
    %21 = arith.cmpi ne, %20, %c0_i32_6 : i32
    scf.if %21 {
      %c0 = arith.constant 0 : index
      %c0_7 = arith.constant 0 : index
      %22 = vector.load %arg10[%c0, %c0_7] : memref<128x128xf32, #tpu.memory_space<vmem>>, vector<128x128xf32>
      %c0_8 = arith.constant 0 : index
      %c0_9 = arith.constant 0 : index
      %23 = vector.load %arg9[%c0_8, %c0_9] : memref<128x1xf32, #tpu.memory_space<vmem>>, vector<128x1xf32>
      %24 = vector.broadcast %23 : vector<128x1xf32> to vector<128x128xf32>
      %25 = arith.divf %22, %24 : vector<128x128xf32>
      %c0_10 = arith.constant 0 : index
      %c0_11 = arith.constant 0 : index
      %c0_12 = arith.constant 0 : index
      %26 = vector.load %arg7[%c0_10, %c0_11, %c0_12] : memref<1x128x128xf32, #tpu.memory_space<vmem>>, vector<1x128x128xf32>
      %27 = vector.shape_cast %26 : vector<1x128x128xf32> to vector<128x128xf32>
      %28 = vector.shape_cast %25 : vector<128x128xf32> to vector<1x128x128xf32>
      tpu.vector_store %arg7[%c0_10, %c0_11, %c0_12], %28 {strides = array<i32>} : memref<1x128x128xf32, #tpu.memory_space<vmem>>, vector<1x128x128xf32>,
    } else {
    }
    return
  }
  func.func @transform_0(%arg0: i32, %arg1: i32, %arg2: memref<2xi32, #tpu.memory_space<smem>>, %arg3: memref<2xi32, #tpu.memory_space<smem>>) -> (i32, i32, i32) {
    %0 = arith.index_cast %arg1 : i32 to index
    %1 = memref.load %arg2[%0] : memref<2xi32, #tpu.memory_space<smem>>
    %c0_i32 = arith.constant 0 : i32
    %c0_i32_0 = arith.constant 0 : i32
    return %arg0, %1, %c0_i32 : i32, i32, i32
  }
  func.func @transform_1(%arg0: i32, %arg1: i32, %arg2: memref<2xi32, #tpu.memory_space<smem>>, %arg3: memref<2xi32, #tpu.memory_space<smem>>) -> (i32, i32, i32) {
    %0 = arith.index_cast %arg1 : i32 to index
    %1 = memref.load %arg3[%0] : memref<2xi32, #tpu.memory_space<smem>>
    %c0_i32 = arith.constant 0 : i32
    %c0_i32_0 = arith.constant 0 : i32
    return %arg0, %1, %c0_i32 : i32, i32, i32
  }
  func.func @transform_2(%arg0: i32, %arg1: i32, %arg2: memref<2xi32, #tpu.memory_space<smem>>, %arg3: memref<2xi32, #tpu.memory_space<smem>>) -> (i32, i32, i32) {
    %0 = arith.index_cast %arg1 : i32 to index
    %1 = memref.load %arg3[%0] : memref<2xi32, #tpu.memory_space<smem>>
    %c0_i32 = arith.constant 0 : i32
    %c0_i32_0 = arith.constant 0 : i32
    return %arg0, %1, %c0_i32 : i32, i32, i32
  }
  func.func @transform_3(%arg0: i32, %arg1: i32, %arg2: memref<2xi32, #tpu.memory_space<smem>>, %arg3: memref<2xi32, #tpu.memory_space<smem>>) -> (i32, i32, i32) {
    %0 = arith.index_cast %arg1 : i32 to index
    %1 = memref.load %arg2[%0] : memref<2xi32, #tpu.memory_space<smem>>
    %c0_i32 = arith.constant 0 : i32
    %c0_i32_0 = arith.constant 0 : i32
    return %arg0, %1, %c0_i32 : i32, i32, i32
  }
}

</mosaic_0001>

<llo_original>
// kernel: tpu_custom_call.1
$region0: #{tpu_custom_call.1}
  #allocation0 [shape = 'u32[]', space=smem, size = 0x4, offset = 0x4, fixed_abs, tag = 'smem constant byte address 0x4 - core index']
  #allocation1 [shape = 'u32[72,128]{1,0:T(1,128)}', space=vmem, size = 0x9000, scoped, tag = 'internal scratch']
  #allocation2 [shape = 'f32[128,1]{1,0:T(8,128)}', space=vmem, size = 0x10000, scoped, tag = 'scratch operand']
  #allocation3 [shape = 'f32[128,1]{1,0:T(8,128)}', space=vmem, size = 0x10000, scoped, tag = 'scratch operand']
  #allocation4 [shape = 'f32[128,128]{1,0:T(8,128)}', space=vmem, size = 0x10000, scoped, tag = 'scratch operand']
  #allocation5 [shape = 'f32[128,128]{1,0:T(8,128)}', space=vmem, size = 0x10000, scoped, tag = 'scratch operand']
  #allocation6 [shape = 's32[1]{0}', space=sflag, size = 0x4, scoped, tag = 'scoped memory for tpu_custom_call.1']
  #allocation7 [shape = 'u8[512]{0}', space=smem, size = 0x200, scoped, tag = 'prefetched SMEM operand 0']
  #allocation8 [shape = 'u8[512]{0}', space=smem, size = 0x200, scoped, tag = 'prefetched SMEM operand 1']
  %s0 = inlined_call_operand.hbm [shape: s32[2], index: 0, kind: input, shape index: {}]
  %s1 = inlined_call_operand.hbm [shape: s32[2], index: 1, kind: input, shape index: {}]
  %s2 = inlined_call_operand.hbm [shape: f32[4,256,128], index: 2, kind: input, shape index: {}]
  %s3 = inlined_call_operand.hbm [shape: f32[4,256,128], index: 3, kind: input, shape index: {}]
  %s4 = inlined_call_operand.hbm [shape: f32[4,256,128], index: 4, kind: input, shape index: {}]
  %s5 = inlined_call_operand.hbm [shape: f32[4,256,128], index: 5, kind: output, shape index: {}]
  %s6 = sld [smem:[#allocation0]]
  $region73: #{tpu_custom_call.1} parent=0
    _
  %s8 = ssub.s32 1, %s6
  %s9 = scalar_select 0, %s8, %s6
  %s11 = sshll.u32 %s0, 4
  %s12 = int_to_ptr.hbm [resolvable:$true] %s11
  %14 = dma.hbm_to_smem %s12, 16, [#allocation7], [#allocation6]
  %s16 = sshll.u32 %s1, 4
  %s17 = int_to_ptr.hbm [resolvable:$true] %s16
  %19 = dma.hbm_to_smem %s17, 16, [#allocation8], [#allocation6]
  %21 = dma.done [#allocation6], 32
  %22 = sfence
  $region1: #{tpu_custom_call.1} parent=0
    #allocation9 [shape = 'u8[131072]{0}', space=vmem, size = 0x20000, scoped, tag = 'input window, operand 2']
    #allocation10 [shape = 's32[2]{0}', space=sflag, size = 0x8, scoped, tag = 'scoped memory for tpu_custom_call.1']
    #allocation11 [shape = 's32[2]{0}', space=sflag, size = 0x8, scoped, tag = 'scoped memory for tpu_custom_call.1']
    #allocation12 [shape = 'u8[262144]{0}', space=vmem, size = 0x40000, scoped, tag = 'input window, operand 3']
    #allocation13 [shape = 's32[2]{0}', space=sflag, size = 0x8, scoped, tag = 'scoped memory for tpu_custom_call.1']
    #allocation14 [shape = 'u8[262144]{0}', space=vmem, size = 0x40000, scoped, tag = 'input window, operand 4']
    #allocation15 [shape = 'u8[131072]{0}', space=vmem, size = 0x20000, scoped, tag = 'output window, operand 0']
    %23 = vsyncpa [#allocation10], 0
    %s24 = scalar_lea.sflag [#allocation10], 1
    %25 = vsyncpa %s24, 0
    %26 = vsyncpa [#allocation13], 0
    %s27 = scalar_lea.sflag [#allocation13], 1
    %28 = vsyncpa %s27, 0
    %29 = vsyncpa [#allocation11], 0
    %s30 = scalar_lea.sflag [#allocation11], 1
    %31 = vsyncpa %s30, 0
    loop: start=0, step=1, limit=10
    $region2: #{tpu_custom_call.1} parent=1 // loop_pre_header
      _
    $region3: #{tpu_custom_call.1} parent=1 // loop_header
      %s33 = sphi 0, %s37
      %p34 = scmp.ge.s32.totalorder %s33, 10
      %s40 = sphi 0, %s52
      %s41 = sphi 0, %s48
      %s42 = sphi 0, %s40
      %s43 = sphi 0, %s41
      %s44 = sphi 0, %s42
      %s45 = sphi 0, %s43
      %s59 = sphi 0, %s61
      %s62 = sphi 0, %s59
      %s63 = sphi 0, %s62
      %s79 = sphi 0, %s63
      %s89 = sphi 0, %s91
      %s92 = sphi 0, %s89
      %s93 = sphi 0, %s92
      %s109 = sphi 0, %s93
      %s119 = sphi 0, %s121
      %s122 = sphi 0, %s119
      %s123 = sphi 0, %s122
      %s139 = sphi 0, %s123
      %s149 = sphi 0, %s151
      %s152 = sphi 0, %s149
      %s153 = sphi 0, %s152
      %s169 = sphi 0, %s153
    $region4: #{tpu_custom_call.1} parent=1 // loop_header_branch
      %36 = sbr.rel (%p34) target = $region8
    $region5: #{tpu_custom_call.1} parent=1 // loop_body
      %s38 = ssub.s32 %s33, 1
      %s39 = ssub.s32 %s33, 2
      %s46 = sadd.s32 1, %s41
      %p47 = scmp.ge.s32.totalorder %s46, 2
      %s48 = scalar_select %p47, 0, %s46
      %s49 = sadd.s32 1, %s40
      %s50 = scalar_select %p47, %s49, %s40
      %p51 = scmp.ge.s32.totalorder %s50, 4
      %s52 = scalar_select %p51, 0, %s50
      %s53 = sld [smem:[#allocation7 + %s41]]
      %s54 = sld [smem:[#allocation7 + %s48]]
      %s55 = ssub.s32 %s40, %s52
      %s56 = ssub.s32 %s53, %s54
      %s57 = sor.u32 %s55, %s56
      %p58 = scmp.eq.s32.totalorder %s57, 0
      %s60 = sadd.s32 %s59, 1
      %s61 = scalar_select %p58, %s59, %s60
      %p64 = pneg %p58
      %p65 = scmp.eq.s32.totalorder %s33, 7
      %p66 = por %p64, %p65
      %p67 = scmp.ne.s32.totalorder %s59, %s62
      %p68 = scmp.eq.s32.totalorder %s33, 0
      %p69 = por %p67, %p68
      %p70 = scmp.ne.s32.totalorder %s59, %s62
      %p71 = scmp.eq.s32.totalorder %s38, 7
      %p72 = por %p70, %p71
      %p73 = scmp.ne.s32.totalorder %s62, %s63
      %p74 = scmp.eq.s32.totalorder %s38, 0
      %p75 = por %p73, %p74
      %p76 = scmp.ne.s32.totalorder %s62, %s63
      %p77 = scmp.eq.s32.totalorder %s39, 7
      %p78 = por %p76, %p77
      %p80 = scmp.ne.s32.totalorder %s63, %s79
      %p81 = scmp.eq.s32.totalorder %s39, 0
      %p82 = por %p80, %p81
      %s83 = sld [smem:[#allocation8 + %s41]]
      %s84 = sld [smem:[#allocation8 + %s48]]
      %s85 = ssub.s32 %s40, %s52
      %s86 = ssub.s32 %s83, %s84
      %s87 = sor.u32 %s85, %s86
      %p88 = scmp.eq.s32.totalorder %s87, 0
      %s90 = sadd.s32 %s89, 1
      %s91 = scalar_select %p88, %s89, %s90
      %p94 = pneg %p88
      %p95 = scmp.eq.s32.totalorder %s33, 7
      %p96 = por %p94, %p95
      %p97 = scmp.ne.s32.totalorder %s89, %s92
      %p98 = scmp.eq.s32.totalorder %s33, 0
      %p99 = por %p97, %p98
      %p100 = scmp.ne.s32.totalorder %s89, %s92
      %p101 = scmp.eq.s32.totalorder %s38, 7
      %p102 = por %p100, %p101
      %p103 = scmp.ne.s32.totalorder %s92, %s93
      %p104 = scmp.eq.s32.totalorder %s38, 0
      %p105 = por %p103, %p104
      %p106 = scmp.ne.s32.totalorder %s92, %s93
      %p107 = scmp.eq.s32.totalorder %s39, 7
      %p108 = por %p106, %p107
      %p110 = scmp.ne.s32.totalorder %s93, %s109
      %p111 = scmp.eq.s32.totalorder %s39, 0
      %p112 = por %p110, %p111
      %s113 = sld [smem:[#allocation8 + %s41]]
      %s114 = sld [smem:[#allocation8 + %s48]]
      %s115 = ssub.s32 %s40, %s52
      %s116 = ssub.s32 %s113, %s114
      %s117 = sor.u32 %s115, %s116
      %p118 = scmp.eq.s32.totalorder %s117, 0
      %s120 = sadd.s32 %s119, 1
      %s121 = scalar_select %p118, %s119, %s120
      %p124 = pneg %p118
      %p125 = scmp.eq.s32.totalorder %s33, 7
      %p126 = por %p124, %p125
      %p127 = scmp.ne.s32.totalorder %s119, %s122
      %p128 = scmp.eq.s32.totalorder %s33, 0
      %p129 = por %p127, %p128
      %p130 = scmp.ne.s32.totalorder %s119, %s122
      %p131 = scmp.eq.s32.totalorder %s38, 7
      %p132 = por %p130, %p131
      %p133 = scmp.ne.s32.totalorder %s122, %s123
      %p134 = scmp.eq.s32.totalorder %s38, 0
      %p135 = por %p133, %p134
      %p136 = scmp.ne.s32.totalorder %s122, %s123
      %p137 = scmp.eq.s32.totalorder %s39, 7
      %p138 = por %p136, %p137
      %p140 = scmp.ne.s32.totalorder %s123, %s139
      %p141 = scmp.eq.s32.totalorder %s39, 0
      %p142 = por %p140, %p141
      %s143 = sld [smem:[#allocation7 + %s41]]
      %s144 = sld [smem:[#allocation7 + %s48]]
      %s145 = ssub.s32 %s40, %s52
      %s146 = ssub.s32 %s143, %s144
      %s147 = sor.u32 %s145, %s146
      %p148 = scmp.eq.s32.totalorder %s147, 0
      %s150 = sadd.s32 %s149, 1
      %s151 = scalar_select %p148, %s149, %s150
      %p154 = pneg %p148
      %p155 = scmp.eq.s32.totalorder %s33, 7
      %p156 = por %p154, %p155
      %p157 = scmp.ne.s32.totalorder %s149, %s152
      %p158 = scmp.eq.s32.totalorder %s33, 0
      %p159 = por %p157, %p158
      %p160 = scmp.ne.s32.totalorder %s149, %s152
      %p161 = scmp.eq.s32.totalorder %s38, 7
      %p162 = por %p160, %p161
      %p163 = scmp.ne.s32.totalorder %s152, %s153
      %p164 = scmp.eq.s32.totalorder %s38, 0
      %p165 = por %p163, %p164
      %p166 = scmp.ne.s32.totalorder %s152, %s153
      %p167 = scmp.eq.s32.totalorder %s39, 7
      %p168 = por %p166, %p167
      %p170 = scmp.ne.s32.totalorder %s153, %s169
      %p171 = scmp.eq.s32.totalorder %s39, 0
      %p172 = por %p170, %p171
      %p173 = scmp.le.s32.totalorder 1, %s33
      %p174 = scmp.lt.s32.totalorder %s33, 9
      %p175 = pnand %p173, %p174
      %p176 = pneg %p175
      // Predicated region
      $region9: #{tpu_custom_call.1} parent=5 // pred_check
        _
      $region10: #{tpu_custom_call.1} parent=5 // pred_check_branch
        %178 = sbr.rel (%p175) target = $region12
      $region11: #{tpu_custom_call.1} parent=5 // pred_region
        %s179 = ssub.s32 %s33, 1
      $region12: #{tpu_custom_call.1} parent=5 // pred_fallthru
        _
      %p180 = scmp.lt.s32.totalorder %s33, 8
      // Predicated region
      $region13: #{tpu_custom_call.1} parent=5 // pred_check
        %p181 = pneg %p180
      $region14: #{tpu_custom_call.1} parent=5 // pred_check_branch
        %183 = sbr.rel (%p181) target = $region16
      $region15: #{tpu_custom_call.1} parent=5 // pred_region
        // Predicated region
        $region17: #{tpu_custom_call.1} parent=15 // pred_check
          %p184 = pneg %p69
        $region18: #{tpu_custom_call.1} parent=15 // pred_check_branch
          %186 = sbr.rel (%p184) target = $region20
        $region19: #{tpu_custom_call.1} parent=15 // pred_region
          %s187 = sand.u32 %s59, 1
          %s188 = scalar_lea.sflag [#allocation10], %s187
          %s189 = sand.u32 %s59, 1
          %s190 = smul.addr %s189, 128
          %s191 = scalar_lea.vmem [#allocation9], %s190
          %s192 = sld [smem:[#allocation7 + %s41]]
          %s193 = smul.u32 16, %s192
          %195 = vsyncadd %s188, 0
          %s196 = smul.addr %s40, 32
          %s197 = sadd.s32 %s193, %s196
          %s198 = smul.addr %s197, 8
          %s199 = scalar_lea.hbm %s2, %s198
          %s200 = sshll.u32 %s199, 4
          %s201 = int_to_ptr.hbm [resolvable:$true] %s200
          %s202 = sshll.u32 %s191, 4
          %s203 = int_to_ptr.vmem [resolvable:$true] %s202
          %208 = dma.hbm_to_vmem [thread:$0]  %s201, 2048, %s203, %s188, 128, 128, 8
        $region20: #{tpu_custom_call.1} parent=15 // pred_fallthru
          _
        // Predicated region
        $region21: #{tpu_custom_call.1} parent=15 // pred_check
          %p209 = pneg %p99
        $region22: #{tpu_custom_call.1} parent=15 // pred_check_branch
          %211 = sbr.rel (%p209) target = $region24
        $region23: #{tpu_custom_call.1} parent=15 // pred_region
          %s212 = sand.u32 %s33, 1
          %s213 = scalar_lea.sflag [#allocation13], %s212
          %s214 = sand.u32 %s89, 1
          %s215 = smul.addr %s214, 256
          %s216 = scalar_lea.vmem [#allocation12], %s215
          %s217 = sld [smem:[#allocation8 + %s41]]
          %s218 = smul.u32 32, %s217
          %220 = vsyncadd %s213, 0
          %s221 = smul.addr %s40, 32
          %s222 = sadd.s32 %s218, %s221
          %s223 = smul.addr %s222, 8
          %s224 = scalar_lea.hbm %s3, %s223
          %s225 = sshll.u32 %s224, 4
          %s226 = int_to_ptr.hbm [resolvable:$true] %s225
          %s227 = sshll.u32 %s216, 4
          %s228 = int_to_ptr.vmem [resolvable:$true] %s227
          %233 = dma.hbm_to_vmem [thread:$0]  %s226, 4096, %s228, %s213, 128, 128, 8
        $region24: #{tpu_custom_call.1} parent=15 // pred_fallthru
          _
        // Predicated region
        $region25: #{tpu_custom_call.1} parent=15 // pred_check
          %p234 = pneg %p129
        $region26: #{tpu_custom_call.1} parent=15 // pred_check_branch
          %236 = sbr.rel (%p234) target = $region28
        $region27: #{tpu_custom_call.1} parent=15 // pred_region
          %s237 = sand.u32 %s33, 1
          %s238 = scalar_lea.sflag [#allocation13], %s237
          %s239 = sand.u32 %s119, 1
          %s240 = smul.addr %s239, 256
          %s241 = scalar_lea.vmem [#allocation14], %s240
          %s242 = sld [smem:[#allocation8 + %s41]]
          %s243 = smul.u32 32, %s242
          %245 = vsyncadd %s238, 0
          %s246 = smul.addr %s40, 32
          %s247 = sadd.s32 %s243, %s246
          %s248 = smul.addr %s247, 8
          %s249 = scalar_lea.hbm %s4, %s248
          %s250 = sshll.u32 %s249, 4
          %s251 = int_to_ptr.hbm [resolvable:$true] %s250
          %s252 = sshll.u32 %s241, 4
          %s253 = int_to_ptr.vmem [resolvable:$true] %s252
          %258 = dma.hbm_to_vmem [thread:$0]  %s251, 4096, %s253, %s238, 128, 128, 8
        $region28: #{tpu_custom_call.1} parent=15 // pred_fallthru
          _
      $region16: #{tpu_custom_call.1} parent=5 // pred_fallthru
        _
      %p259 = scmp.le.s32.totalorder 1, %s33
      %p260 = scmp.lt.s32.totalorder %s33, 9
      %p261 = pnand %p259, %p260
      %p262 = pneg %p261
      // Predicated region
      $region29: #{tpu_custom_call.1} parent=5 // pred_check
        _
      $region30: #{tpu_custom_call.1} parent=5 // pred_check_branch
        %264 = sbr.rel (%p261) target = $region32
      $region31: #{tpu_custom_call.1} parent=5 // pred_region
        %s265 = ssub.s32 %s33, 1
        %s266 = sand.u32 %s62, 1
        %s267 = scalar_lea.sflag [#allocation10], %s266
        %s268 = sand.u32 %s62, 1
        %s269 = smul.addr %s268, 128
        %s270 = scalar_lea.vmem [#allocation9], %s269
        // Predicated region
        $region33: #{tpu_custom_call.1} parent=31 // pred_check
          %p271 = pneg %p75
        $region34: #{tpu_custom_call.1} parent=31 // pred_check_branch
          %273 = sbr.rel (%p271) target = $region36
        $region35: #{tpu_custom_call.1} parent=31 // pred_region
          %275 = dma.done %s267, 2048
        $region36: #{tpu_custom_call.1} parent=31 // pred_fallthru
          _
        %s276 = sand.u32 %s38, 1
        %s277 = scalar_lea.sflag [#allocation13], %s276
        %s278 = sand.u32 %s92, 1
        %s279 = smul.addr %s278, 256
        %s280 = scalar_lea.vmem [#allocation12], %s279
        // Predicated region
        $region37: #{tpu_custom_call.1} parent=31 // pred_check
          %p281 = pneg %p105
        $region38: #{tpu_custom_call.1} parent=31 // pred_check_branch
          %283 = sbr.rel (%p281) target = $region40
        $region39: #{tpu_custom_call.1} parent=31 // pred_region
          %285 = dma.done %s277, 4096
        $region40: #{tpu_custom_call.1} parent=31 // pred_fallthru
          _
        %s286 = sand.u32 %s38, 1
        %s287 = scalar_lea.sflag [#allocation13], %s286
        %s288 = sand.u32 %s122, 1
        %s289 = smul.addr %s288, 256
        %s290 = scalar_lea.vmem [#allocation14], %s289
        // Predicated region
        $region41: #{tpu_custom_call.1} parent=31 // pred_check
          %p291 = pneg %p135
        $region42: #{tpu_custom_call.1} parent=31 // pred_check_branch
          %293 = sbr.rel (%p291) target = $region44
        $region43: #{tpu_custom_call.1} parent=31 // pred_region
          %295 = dma.done %s287, 4096
        $region44: #{tpu_custom_call.1} parent=31 // pred_fallthru
          _
        %s296 = sand.u32 %s62, 1
        %s297 = scalar_lea.sflag [#allocation10], %s296
        %s298 = sand.u32 %s62, 1
        %s299 = smul.addr %s298, 128
        %s300 = scalar_lea.vmem [#allocation9], %s299
        %p301 = pneg %p75
        %p302 = pneg %p72
        %s303 = sand.u32 %s38, 1
        %s304 = scalar_lea.sflag [#allocation13], %s303
        %s305 = sand.u32 %s92, 1
        %s306 = smul.addr %s305, 256
        %s307 = scalar_lea.vmem [#allocation12], %s306
        %p308 = pneg %p105
        %p309 = pneg %p102
        %s310 = sand.u32 %s38, 1
        %s311 = scalar_lea.sflag [#allocation13], %s310
        %s312 = sand.u32 %s122, 1
        %s313 = smul.addr %s312, 256
        %s314 = scalar_lea.vmem [#allocation14], %s313
        %p315 = pneg %p135
        %p316 = pneg %p132
        %p317 = pneg %p165
        %p318 = pneg %p162
        %s319 = sand.u32 %s152, 1
        %s320 = scalar_lea.sflag [#allocation11], %s319
        %s321 = sand.u32 %s152, 1
        %s322 = smul.addr %s321, 128
        %s323 = scalar_lea.vmem [#allocation15], %s322
        %s324 = sld [smem:[#allocation7 + %s43]]
        %s325 = smul.u32 16, %s324
        %s326 = sld [smem:[#allocation8 + %s43]]
        %s327 = smul.u32 32, %s326
        %s328 = sld [smem:[#allocation8 + %s43]]
        %s329 = smul.u32 32, %s328
        %s330 = sld [smem:[#allocation7 + %s43]]
        %s331 = smul.u32 16, %s330
        %s332 = sld [smem:[#allocation7 + %s43]]
        %s333 = sld [smem:[#allocation8 + %s43]]
        %s334 = smul.u32 %s332, 128
        %s335 = smul.u32 %s333, 256
        %p336 = scmp.eq.s32.totalorder %s333, 0
        %s337 = sadd.s32 %s335, 256
        %s338 = sadd.s32 %s334, 128
        %p339 = scmp.ge.s32.totalorder %s337, %s338
        %s340 = sadd.s32 %s335, 255
        %p341 = scmp.gt.s32.totalorder %s340, %s334
        // Predicated region
        $region45: #{tpu_custom_call.1} parent=31 // pred_check
          %p342 = pneg %p336
        $region46: #{tpu_custom_call.1} parent=31 // pred_check_branch
          %344 = sbr.rel (%p342) target = $region48
        $region47: #{tpu_custom_call.1} parent=31 // pred_region
          %vm345 = vcmask 7168
          %346 = vst.msk [vmem:[#allocation2] sm:$0xff] %vm345, -inf
          %347 = vst.msk [vmem:[#allocation2 + $0x8] sm:$0xff] %vm345, -inf
          %348 = vst.msk [vmem:[#allocation2 + $0x10] sm:$0xff] %vm345, -inf
          %349 = vst.msk [vmem:[#allocation2 + $0x18] sm:$0xff] %vm345, -inf
          %350 = vst.msk [vmem:[#allocation2 + $0x20] sm:$0xff] %vm345, -inf
          %351 = vst.msk [vmem:[#allocation2 + $0x28] sm:$0xff] %vm345, -inf
          %352 = vst.msk [vmem:[#allocation2 + $0x30] sm:$0xff] %vm345, -inf
          %353 = vst.msk [vmem:[#allocation2 + $0x38] sm:$0xff] %vm345, -inf
          %354 = vst.msk [vmem:[#allocation2 + $0x40] sm:$0xff] %vm345, -inf
          %355 = vst.msk [vmem:[#allocation2 + $0x48] sm:$0xff] %vm345, -inf
          %356 = vst.msk [vmem:[#allocation2 + $0x50] sm:$0xff] %vm345, -inf
          %357 = vst.msk [vmem:[#allocation2 + $0x58] sm:$0xff] %vm345, -inf
          %358 = vst.msk [vmem:[#allocation2 + $0x60] sm:$0xff] %vm345, -inf
          %359 = vst.msk [vmem:[#allocation2 + $0x68] sm:$0xff] %vm345, -inf
          %360 = vst.msk [vmem:[#allocation2 + $0x70] sm:$0xff] %vm345, -inf
          %361 = vst.msk [vmem:[#allocation2 + $0x78] sm:$0xff] %vm345, -inf
          %362 = vst.msk [vmem:[#allocation3] sm:$0xff] %vm345, 0.0
          %363 = vst.msk [vmem:[#allocation3 + $0x8] sm:$0xff] %vm345, 0.0
          %364 = vst.msk [vmem:[#allocation3 + $0x10] sm:$0xff] %vm345, 0.0
          %365 = vst.msk [vmem:[#allocation3 + $0x18] sm:$0xff] %vm345, 0.0
          %366 = vst.msk [vmem:[#allocation3 + $0x20] sm:$0xff] %vm345, 0.0
          %367 = vst.msk [vmem:[#allocation3 + $0x28] sm:$0xff] %vm345, 0.0
          %368 = vst.msk [vmem:[#allocation3 + $0x30] sm:$0xff] %vm345, 0.0
          %369 = vst.msk [vmem:[#allocation3 + $0x38] sm:$0xff] %vm345, 0.0
          %370 = vst.msk [vmem:[#allocation3 + $0x40] sm:$0xff] %vm345, 0.0
          %371 = vst.msk [vmem:[#allocation3 + $0x48] sm:$0xff] %vm345, 0.0
          %372 = vst.msk [vmem:[#allocation3 + $0x50] sm:$0xff] %vm345, 0.0
          %373 = vst.msk [vmem:[#allocation3 + $0x58] sm:$0xff] %vm345, 0.0
          %374 = vst.msk [vmem:[#allocation3 + $0x60] sm:$0xff] %vm345, 0.0
          %375 = vst.msk [vmem:[#allocation3 + $0x68] sm:$0xff] %vm345, 0.0
          %376 = vst.msk [vmem:[#allocation3 + $0x70] sm:$0xff] %vm345, 0.0
          %377 = vst.msk [vmem:[#allocation3 + $0x78] sm:$0xff] %vm345, 0.0
          %378 = vst [vmem:[#allocation4] sm:$0xff] 0.0
          %379 = vst [vmem:[#allocation4 + $0x8] sm:$0xff] 0.0
          %380 = vst [vmem:[#allocation4 + $0x10] sm:$0xff] 0.0
          %381 = vst [vmem:[#allocation4 + $0x18] sm:$0xff] 0.0
          %382 = vst [vmem:[#allocation4 + $0x20] sm:$0xff] 0.0
          %383 = vst [vmem:[#allocation4 + $0x28] sm:$0xff] 0.0
          %384 = vst [vmem:[#allocation4 + $0x30] sm:$0xff] 0.0
          %385 = vst [vmem:[#allocation4 + $0x38] sm:$0xff] 0.0
          %386 = vst [vmem:[#allocation4 + $0x40] sm:$0xff] 0.0
          %387 = vst [vmem:[#allocation4 + $0x48] sm:$0xff] 0.0
          %388 = vst [vmem:[#allocation4 + $0x50] sm:$0xff] 0.0
          %389 = vst [vmem:[#allocation4 + $0x58] sm:$0xff] 0.0
          %390 = vst [vmem:[#allocation4 + $0x60] sm:$0xff] 0.0
          %391 = vst [vmem:[#allocation4 + $0x68] sm:$0xff] 0.0
          %392 = vst [vmem:[#allocation4 + $0x70] sm:$0xff] 0.0
          %393 = vst [vmem:[#allocation4 + $0x78] sm:$0xff] 0.0
          %v394 = vld [vmem:[%s270] sm:$0xff]
          %v395 = vld [vmem:[%s270 + $0x8] sm:$0xff]
          %v396 = vld [vmem:[%s270 + $0x10] sm:$0xff]
          %v397 = vld [vmem:[%s270 + $0x18] sm:$0xff]
          %v398 = vld [vmem:[%s270 + $0x20] sm:$0xff]
          %v399 = vld [vmem:[%s270 + $0x28] sm:$0xff]
          %v400 = vld [vmem:[%s270 + $0x30] sm:$0xff]
          %v401 = vld [vmem:[%s270 + $0x38] sm:$0xff]
          %v402 = vld [vmem:[%s270 + $0x40] sm:$0xff]
          %v403 = vld [vmem:[%s270 + $0x48] sm:$0xff]
          %v404 = vld [vmem:[%s270 + $0x50] sm:$0xff]
          %v405 = vld [vmem:[%s270 + $0x58] sm:$0xff]
          %v406 = vld [vmem:[%s270 + $0x60] sm:$0xff]
          %v407 = vld [vmem:[%s270 + $0x68] sm:$0xff]
          %v408 = vld [vmem:[%s270 + $0x70] sm:$0xff]
          %v409 = vld [vmem:[%s270 + $0x78] sm:$0xff]
          %v410 = vmul.f32 %v394, 0.088388346
          %v411 = vmul.f32 %v395, 0.088388346
          %v412 = vmul.f32 %v396, 0.088388346
          %v413 = vmul.f32 %v397, 0.088388346
          %v414 = vmul.f32 %v398, 0.088388346
          %v415 = vmul.f32 %v399, 0.088388346
          %v416 = vmul.f32 %v400, 0.088388346
          %v417 = vmul.f32 %v401, 0.088388346
          %v418 = vmul.f32 %v402, 0.088388346
          %v419 = vmul.f32 %v403, 0.088388346
          %v420 = vmul.f32 %v404, 0.088388346
          %v421 = vmul.f32 %v405, 0.088388346
          %v422 = vmul.f32 %v406, 0.088388346
          %v423 = vmul.f32 %v407, 0.088388346
          %v424 = vmul.f32 %v408, 0.088388346
          %v425 = vmul.f32 %v409, 0.088388346
          %426 = vst [vmem:[#allocation5] sm:$0xff] %v410
          %427 = vst [vmem:[#allocation5 + $0x8] sm:$0xff] %v411
          %428 = vst [vmem:[#allocation5 + $0x10] sm:$0xff] %v412
          %429 = vst [vmem:[#allocation5 + $0x18] sm:$0xff] %v413
          %430 = vst [vmem:[#allocation5 + $0x20] sm:$0xff] %v414
          %431 = vst [vmem:[#allocation5 + $0x28] sm:$0xff] %v415
          %432 = vst [vmem:[#allocation5 + $0x30] sm:$0xff] %v416
          %433 = vst [vmem:[#allocation5 + $0x38] sm:$0xff] %v417
          %434 = vst [vmem:[#allocation5 + $0x40] sm:$0xff] %v418
          %435 = vst [vmem:[#allocation5 + $0x48] sm:$0xff] %v419
          %436 = vst [vmem:[#allocation5 + $0x50] sm:$0xff] %v420
          %437 = vst [vmem:[#allocation5 + $0x58] sm:$0xff] %v421
          %438 = vst [vmem:[#allocation5 + $0x60] sm:$0xff] %v422
          %439 = vst [vmem:[#allocation5 + $0x68] sm:$0xff] %v423
          %440 = vst [vmem:[#allocation5 + $0x70] sm:$0xff] %v424
          %441 = vst [vmem:[#allocation5 + $0x78] sm:$0xff] %v425
        $region48: #{tpu_custom_call.1} parent=31 // pred_fallthru
          _
        %p442 = scmp.le.s32.totalorder %s340, %s334
        // Predicated region
        $region49: #{tpu_custom_call.1} parent=31 // pred_check
          %p443 = pneg %p442
        $region50: #{tpu_custom_call.1} parent=31 // pred_check_branch
          %445 = sbr.rel (%p443) target = $region52
        $region51: #{tpu_custom_call.1} parent=31 // pred_region
          %v446 = vld [vmem:[#allocation5] sm:$0xff]
          %v447 = vld [vmem:[#allocation5 + $0x8] sm:$0xff]
          %v448 = vld [vmem:[#allocation5 + $0x10] sm:$0xff]
          %v449 = vld [vmem:[#allocation5 + $0x18] sm:$0xff]
          %v450 = vld [vmem:[#allocation5 + $0x20] sm:$0xff]
          %v451 = vld [vmem:[#allocation5 + $0x28] sm:$0xff]
          %v452 = vld [vmem:[#allocation5 + $0x30] sm:$0xff]
          %v453 = vld [vmem:[#allocation5 + $0x38] sm:$0xff]
          %v454 = vld [vmem:[#allocation5 + $0x40] sm:$0xff]
          %v455 = vld [vmem:[#allocation5 + $0x48] sm:$0xff]
          %v456 = vld [vmem:[#allocation5 + $0x50] sm:$0xff]
          %v457 = vld [vmem:[#allocation5 + $0x58] sm:$0xff]
          %v458 = vld [vmem:[#allocation5 + $0x60] sm:$0xff]
          %v459 = vld [vmem:[#allocation5 + $0x68] sm:$0xff]
          %v460 = vld [vmem:[#allocation5 + $0x70] sm:$0xff]
          %v461 = vld [vmem:[#allocation5 + $0x78] sm:$0xff]
          %v462 = vld [vmem:[%s280] sm:$0xff]
          %v463 = vld [vmem:[%s280 + $0x8] sm:$0xff]
          %v464 = vld [vmem:[%s280 + $0x10] sm:$0xff]
          %v465 = vld [vmem:[%s280 + $0x18] sm:$0xff]
          %v466 = vld [vmem:[%s280 + $0x20] sm:$0xff]
          %v467 = vld [vmem:[%s280 + $0x28] sm:$0xff]
          %v468 = vld [vmem:[%s280 + $0x30] sm:$0xff]
          %v469 = vld [vmem:[%s280 + $0x38] sm:$0xff]
          %v470 = vld [vmem:[%s280 + $0x40] sm:$0xff]
          %v471 = vld [vmem:[%s280 + $0x48] sm:$0xff]
          %v472 = vld [vmem:[%s280 + $0x50] sm:$0xff]
          %v473 = vld [vmem:[%s280 + $0x58] sm:$0xff]
          %v474 = vld [vmem:[%s280 + $0x60] sm:$0xff]
          %v475 = vld [vmem:[%s280 + $0x68] sm:$0xff]
          %v476 = vld [vmem:[%s280 + $0x70] sm:$0xff]
          %v477 = vld [vmem:[%s280 + $0x78] sm:$0xff]
          %v478 = vld [vmem:[%s280 + $0x80] sm:$0xff]
          %v479 = vld [vmem:[%s280 + $0x88] sm:$0xff]
          %v480 = vld [vmem:[%s280 + $0x90] sm:$0xff]
          %v481 = vld [vmem:[%s280 + $0x98] sm:$0xff]
          %v482 = vld [vmem:[%s280 + $0xa0] sm:$0xff]
          %v483 = vld [vmem:[%s280 + $0xa8] sm:$0xff]
          %v484 = vld [vmem:[%s280 + $0xb0] sm:$0xff]
          %v485 = vld [vmem:[%s280 + $0xb8] sm:$0xff]
          %v486 = vld [vmem:[%s280 + $0xc0] sm:$0xff]
          %v487 = vld [vmem:[%s280 + $0xc8] sm:$0xff]
          %v488 = vld [vmem:[%s280 + $0xd0] sm:$0xff]
          %v489 = vld [vmem:[%s280 + $0xd8] sm:$0xff]
          %v490 = vld [vmem:[%s280 + $0xe0] sm:$0xff]
          %v491 = vld [vmem:[%s280 + $0xe8] sm:$0xff]
          %v492 = vld [vmem:[%s280 + $0xf0] sm:$0xff]
          %v493 = vld [vmem:[%s280 + $0xf8] sm:$0xff]
          %494 = vmatpush.xpose.msra.mxu0 %v477
          %495 = vmatpush.xpose.msra.mxu0 %v476
          %496 = vmatpush.xpose.msra.mxu0 %v475
          %497 = vmatpush.xpose.msra.mxu0 %v474
          %498 = vmatpush.xpose.msra.mxu0 %v473
          %499 = vmatpush.xpose.msra.mxu0 %v472
          %500 = vmatpush.xpose.msra.mxu0 %v471
          %501 = vmatpush.xpose.msra.mxu0 %v470
          %502 = vmatpush.xpose.msra.mxu0 %v469
          %503 = vmatpush.xpose.msra.mxu0 %v468
          %504 = vmatpush.xpose.msra.mxu0 %v467
          %505 = vmatpush.xpose.msra.mxu0 %v466
          %506 = vmatpush.xpose.msra.mxu0 %v465
          %507 = vmatpush.xpose.msra.mxu0 %v464
          %508 = vmatpush.xpose.msra.mxu0 %v463
          %509 = vmatpush.xpose.msra.mxu0 %v462
          %510 = vmatmul.f32.gmra.mxu0 %v446
          %v511 = vpop.f32.mrf.mxu0
          %v512 = vadd.f32 0.0, %v511
          %513 = vmatmul.f32.gmra.mxu0 %v447
          %v514 = vpop.f32.mrf.mxu0
          %v515 = vadd.f32 0.0, %v514
          %516 = vmatmul.f32.gmra.mxu0 %v448
          %v517 = vpop.f32.mrf.mxu0
          %v518 = vadd.f32 0.0, %v517
          %519 = vmatmul.f32.gmra.mxu0 %v449
          %v520 = vpop.f32.mrf.mxu0
          %v521 = vadd.f32 0.0, %v520
          %522 = vmatmul.f32.gmra.mxu0 %v450
          %v523 = vpop.f32.mrf.mxu0
          %v524 = vadd.f32 0.0, %v523
          %525 = vmatmul.f32.gmra.mxu0 %v451
          %v526 = vpop.f32.mrf.mxu0
          %v527 = vadd.f32 0.0, %v526
          %528 = vmatmul.f32.gmra.mxu0 %v452
          %v529 = vpop.f32.mrf.mxu0
          %v530 = vadd.f32 0.0, %v529
          %531 = vmatmul.f32.gmra.mxu0 %v453
          %v532 = vpop.f32.mrf.mxu0
          %v533 = vadd.f32 0.0, %v532
          %534 = vmatmul.f32.gmra.mxu0 %v454
          %v535 = vpop.f32.mrf.mxu0
          %v536 = vadd.f32 0.0, %v535
          %537 = vmatmul.f32.gmra.mxu0 %v455
          %v538 = vpop.f32.mrf.mxu0
          %v539 = vadd.f32 0.0, %v538
          %540 = vmatmul.f32.gmra.mxu0 %v456
          %v541 = vpop.f32.mrf.mxu0
          %v542 = vadd.f32 0.0, %v541
          %543 = vmatmul.f32.gmra.mxu0 %v457
          %v544 = vpop.f32.mrf.mxu0
          %v545 = vadd.f32 0.0, %v544
          %546 = vmatmul.f32.gmra.mxu0 %v458
          %v547 = vpop.f32.mrf.mxu0
          %v548 = vadd.f32 0.0, %v547
          %549 = vmatmul.f32.gmra.mxu0 %v459
          %v550 = vpop.f32.mrf.mxu0
          %v551 = vadd.f32 0.0, %v550
          %552 = vmatmul.f32.gmra.mxu0 %v460
          %v553 = vpop.f32.mrf.mxu0
          %v554 = vadd.f32 0.0, %v553
          %555 = vmatmul.f32.gmra.mxu0 %v461
          %v556 = vpop.f32.mrf.mxu0
          %v557 = vadd.f32 0.0, %v556
          %558 = vdwg.mxu0
          %559 = vmatpush.xpose.msra.mxu0 %v493
          %560 = vmatpush.xpose.msra.mxu0 %v492
          %561 = vmatpush.xpose.msra.mxu0 %v491
          %562 = vmatpush.xpose.msra.mxu0 %v490
          %563 = vmatpush.xpose.msra.mxu0 %v489
          %564 = vmatpush.xpose.msra.mxu0 %v488
          %565 = vmatpush.xpose.msra.mxu0 %v487
          %566 = vmatpush.xpose.msra.mxu0 %v486
          %567 = vmatpush.xpose.msra.mxu0 %v485
          %568 = vmatpush.xpose.msra.mxu0 %v484
          %569 = vmatpush.xpose.msra.mxu0 %v483
          %570 = vmatpush.xpose.msra.mxu0 %v482
          %571 = vmatpush.xpose.msra.mxu0 %v481
          %572 = vmatpush.xpose.msra.mxu0 %v480
          %573 = vmatpush.xpose.msra.mxu0 %v479
          %574 = vmatpush.xpose.msra.mxu0 %v478
          %575 = vmatmul.f32.gmra.mxu0 %v446
          %v576 = vpop.f32.mrf.mxu0
          %v577 = vadd.f32 0.0, %v576
          %578 = vmatmul.f32.gmra.mxu0 %v447
          %v579 = vpop.f32.mrf.mxu0
          %v580 = vadd.f32 0.0, %v579
          %581 = vmatmul.f32.gmra.mxu0 %v448
          %v582 = vpop.f32.mrf.mxu0
          %v583 = vadd.f32 0.0, %v582
          %584 = vmatmul.f32.gmra.mxu0 %v449
          %v585 = vpop.f32.mrf.mxu0
          %v586 = vadd.f32 0.0, %v585
          %587 = vmatmul.f32.gmra.mxu0 %v450
          %v588 = vpop.f32.mrf.mxu0
          %v589 = vadd.f32 0.0, %v588
          %590 = vmatmul.f32.gmra.mxu0 %v451
          %v591 = vpop.f32.mrf.mxu0
          %v592 = vadd.f32 0.0, %v591
          %593 = vmatmul.f32.gmra.mxu0 %v452
          %v594 = vpop.f32.mrf.mxu0
          %v595 = vadd.f32 0.0, %v594
          %596 = vmatmul.f32.gmra.mxu0 %v453
          %v597 = vpop.f32.mrf.mxu0
          %v598 = vadd.f32 0.0, %v597
          %599 = vmatmul.f32.gmra.mxu0 %v454
          %v600 = vpop.f32.mrf.mxu0
          %v601 = vadd.f32 0.0, %v600
          %602 = vmatmul.f32.gmra.mxu0 %v455
          %v603 = vpop.f32.mrf.mxu0
          %v604 = vadd.f32 0.0, %v603
          %605 = vmatmul.f32.gmra.mxu0 %v456
          %v606 = vpop.f32.mrf.mxu0
          %v607 = vadd.f32 0.0, %v606
          %608 = vmatmul.f32.gmra.mxu0 %v457
          %v609 = vpop.f32.mrf.mxu0
          %v610 = vadd.f32 0.0, %v609
          %611 = vmatmul.f32.gmra.mxu0 %v458
          %v612 = vpop.f32.mrf.mxu0
          %v613 = vadd.f32 0.0, %v612
          %614 = vmatmul.f32.gmra.mxu0 %v459
          %v615 = vpop.f32.mrf.mxu0
          %v616 = vadd.f32 0.0, %v615
          %617 = vmatmul.f32.gmra.mxu0 %v460
          %v618 = vpop.f32.mrf.mxu0
          %v619 = vadd.f32 0.0, %v618
          %620 = vmatmul.f32.gmra.mxu0 %v461
          %v621 = vpop.f32.mrf.mxu0
          %v622 = vadd.f32 0.0, %v621
          %623 = vdwg.mxu0
          %v624 = vld [vmem:[#allocation2] sm:$0xff]
          %v625 = vld [vmem:[#allocation2 + $0x8] sm:$0xff]
          %v626 = vld [vmem:[#allocation2 + $0x10] sm:$0xff]
          %v627 = vld [vmem:[#allocation2 + $0x18] sm:$0xff]
          %v628 = vld [vmem:[#allocation2 + $0x20] sm:$0xff]
          %v629 = vld [vmem:[#allocation2 + $0x28] sm:$0xff]
          %v630 = vld [vmem:[#allocation2 + $0x30] sm:$0xff]
          %v631 = vld [vmem:[#allocation2 + $0x38] sm:$0xff]
          %v632 = vld [vmem:[#allocation2 + $0x40] sm:$0xff]
          %v633 = vld [vmem:[#allocation2 + $0x48] sm:$0xff]
          %v634 = vld [vmem:[#allocation2 + $0x50] sm:$0xff]
          %v635 = vld [vmem:[#allocation2 + $0x58] sm:$0xff]
          %v636 = vld [vmem:[#allocation2 + $0x60] sm:$0xff]
          %v637 = vld [vmem:[#allocation2 + $0x68] sm:$0xff]
          %v638 = vld [vmem:[#allocation2 + $0x70] sm:$0xff]
          %v639 = vld [vmem:[#allocation2 + $0x78] sm:$0xff]
          %v640 = vmax.f32 %v512, %v577
          %641 = vmax.xlane.f32.xlu0 %v640
          %v642 = vpop.xlane.xlu0 %641
          %v643 = vmax.f32 %v515, %v580
          %644 = vmax.xlane.f32.xlu0 %v643
          %v645 = vpop.xlane.xlu0 %644
          %v646 = vmax.f32 %v518, %v583
          %647 = vmax.xlane.f32.xlu0 %v646
          %v648 = vpop.xlane.xlu0 %647
          %v649 = vmax.f32 %v521, %v586
          %650 = vmax.xlane.f32.xlu0 %v649
          %v651 = vpop.xlane.xlu0 %650
          %v652 = vmax.f32 %v524, %v589
          %653 = vmax.xlane.f32.xlu0 %v652
          %v654 = vpop.xlane.xlu0 %653
          %v655 = vmax.f32 %v527, %v592
          %656 = vmax.xlane.f32.xlu0 %v655
          %v657 = vpop.xlane.xlu0 %656
          %v658 = vmax.f32 %v530, %v595
          %659 = vmax.xlane.f32.xlu0 %v658
          %v660 = vpop.xlane.xlu0 %659
          %v661 = vmax.f32 %v533, %v598
          %662 = vmax.xlane.f32.xlu0 %v661
          %v663 = vpop.xlane.xlu0 %662
          %v664 = vmax.f32 %v536, %v601
          %665 = vmax.xlane.f32.xlu0 %v664
          %v666 = vpop.xlane.xlu0 %665
          %v667 = vmax.f32 %v539, %v604
          %668 = vmax.xlane.f32.xlu0 %v667
          %v669 = vpop.xlane.xlu0 %668
          %v670 = vmax.f32 %v542, %v607
          %671 = vmax.xlane.f32.xlu0 %v670
          %v672 = vpop.xlane.xlu0 %671
          %v673 = vmax.f32 %v545, %v610
          %674 = vmax.xlane.f32.xlu0 %v673
          %v675 = vpop.xlane.xlu0 %674
          %v676 = vmax.f32 %v548, %v613
          %677 = vmax.xlane.f32.xlu0 %v676
          %v678 = vpop.xlane.xlu0 %677
          %v679 = vmax.f32 %v551, %v616
          %680 = vmax.xlane.f32.xlu0 %v679
          %v681 = vpop.xlane.xlu0 %680
          %v682 = vmax.f32 %v554, %v619
          %683 = vmax.xlane.f32.xlu0 %v682
          %v684 = vpop.xlane.xlu0 %683
          %v685 = vmax.f32 %v557, %v622
          %686 = vmax.xlane.f32.xlu0 %v685
          %v687 = vpop.xlane.xlu0 %686
          %v688 = vmax.f32 %v624, %v642
          %v689 = vmax.f32 %v625, %v645
          %v690 = vmax.f32 %v626, %v648
          %v691 = vmax.f32 %v627, %v651
          %v692 = vmax.f32 %v628, %v654
          %v693 = vmax.f32 %v629, %v657
          %v694 = vmax.f32 %v630, %v660
          %v695 = vmax.f32 %v631, %v663
          %v696 = vmax.f32 %v632, %v666
          %v697 = vmax.f32 %v633, %v669
          %v698 = vmax.f32 %v634, %v672
          %v699 = vmax.f32 %v635, %v675
          %v700 = vmax.f32 %v636, %v678
          %v701 = vmax.f32 %v637, %v681
          %v702 = vmax.f32 %v638, %v684
          %v703 = vmax.f32 %v639, %v687
          %v704 = vsub.f32 %v624, %v688
          %v705 = vsub.f32 %v625, %v689
          %v706 = vsub.f32 %v626, %v690
          %v707 = vsub.f32 %v627, %v691
          %v708 = vsub.f32 %v628, %v692
          %v709 = vsub.f32 %v629, %v693
          %v710 = vsub.f32 %v630, %v694
          %v711 = vsub.f32 %v631, %v695
          %v712 = vsub.f32 %v632, %v696
          %v713 = vsub.f32 %v633, %v697
          %v714 = vsub.f32 %v634, %v698
          %v715 = vsub.f32 %v635, %v699
          %v716 = vsub.f32 %v636, %v700
          %v717 = vsub.f32 %v637, %v701
          %v718 = vsub.f32 %v638, %v702
          %v719 = vsub.f32 %v639, %v703
          %v720 = vmul.f32 %v704, 1.442695
          %v721 = vpow.pop %v720
          %v722 = vmul.f32 %v705, 1.442695
          %v723 = vpow.pop %v722
          %v724 = vmul.f32 %v706, 1.442695
          %v725 = vpow.pop %v724
          %v726 = vmul.f32 %v707, 1.442695
          %v727 = vpow.pop %v726
          %v728 = vmul.f32 %v708, 1.442695
          %v729 = vpow.pop %v728
          %v730 = vmul.f32 %v709, 1.442695
          %v731 = vpow.pop %v730
          %v732 = vmul.f32 %v710, 1.442695
          %v733 = vpow.pop %v732
          %v734 = vmul.f32 %v711, 1.442695
          %v735 = vpow.pop %v734
          %v736 = vmul.f32 %v712, 1.442695
          %v737 = vpow.pop %v736
          %v738 = vmul.f32 %v713, 1.442695
          %v739 = vpow.pop %v738
          %v740 = vmul.f32 %v714, 1.442695
          %v741 = vpow.pop %v740
          %v742 = vmul.f32 %v715, 1.442695
          %v743 = vpow.pop %v742
          %v744 = vmul.f32 %v716, 1.442695
          %v745 = vpow.pop %v744
          %v746 = vmul.f32 %v717, 1.442695
          %v747 = vpow.pop %v746
          %v748 = vmul.f32 %v718, 1.442695
          %v749 = vpow.pop %v748
          %v750 = vmul.f32 %v719, 1.442695
          %v751 = vpow.pop %v750
          %753 = vset.pattern.permute.xlu0 0
          %754 = vperm.xlu0 %753, %v688
          %v755 = vpop.permute.xlu0 %754
          %758 = vset.pattern.permute.xlu0 0
          %759 = vperm.xlu0 %758, %v689
          %v760 = vpop.permute.xlu0 %759
          %763 = vset.pattern.permute.xlu0 0
          %764 = vperm.xlu0 %763, %v690
          %v765 = vpop.permute.xlu0 %764
          %768 = vset.pattern.permute.xlu0 0
          %769 = vperm.xlu0 %768, %v691
          %v770 = vpop.permute.xlu0 %769
          %773 = vset.pattern.permute.xlu0 0
          %774 = vperm.xlu0 %773, %v692
          %v775 = vpop.permute.xlu0 %774
          %778 = vset.pattern.permute.xlu0 0
          %779 = vperm.xlu0 %778, %v693
          %v780 = vpop.permute.xlu0 %779
          %783 = vset.pattern.permute.xlu0 0
          %784 = vperm.xlu0 %783, %v694
          %v785 = vpop.permute.xlu0 %784
          %788 = vset.pattern.permute.xlu0 0
          %789 = vperm.xlu0 %788, %v695
          %v790 = vpop.permute.xlu0 %789
          %793 = vset.pattern.permute.xlu0 0
          %794 = vperm.xlu0 %793, %v696
          %v795 = vpop.permute.xlu0 %794
          %798 = vset.pattern.permute.xlu0 0
          %799 = vperm.xlu0 %798, %v697
          %v800 = vpop.permute.xlu0 %799
          %803 = vset.pattern.permute.xlu0 0
          %804 = vperm.xlu0 %803, %v698
          %v805 = vpop.permute.xlu0 %804
          %808 = vset.pattern.permute.xlu0 0
          %809 = vperm.xlu0 %808, %v699
          %v810 = vpop.permute.xlu0 %809
          %813 = vset.pattern.permute.xlu0 0
          %814 = vperm.xlu0 %813, %v700
          %v815 = vpop.permute.xlu0 %814
          %818 = vset.pattern.permute.xlu0 0
          %819 = vperm.xlu0 %818, %v701
          %v820 = vpop.permute.xlu0 %819
          %823 = vset.pattern.permute.xlu0 0
          %824 = vperm.xlu0 %823, %v702
          %v825 = vpop.permute.xlu0 %824
          %828 = vset.pattern.permute.xlu0 0
          %829 = vperm.xlu0 %828, %v703
          %v830 = vpop.permute.xlu0 %829
          %v832 = vsub.f32 %v512, %v755
          %v833 = vsub.f32 %v577, %v755
          %v834 = vsub.f32 %v515, %v760
          %v835 = vsub.f32 %v580, %v760
          %v836 = vsub.f32 %v518, %v765
          %v837 = vsub.f32 %v583, %v765
          %v838 = vsub.f32 %v521, %v770
          %v839 = vsub.f32 %v586, %v770
          %v840 = vsub.f32 %v524, %v775
          %v841 = vsub.f32 %v589, %v775
          %v842 = vsub.f32 %v527, %v780
          %v843 = vsub.f32 %v592, %v780
          %v844 = vsub.f32 %v530, %v785
          %v845 = vsub.f32 %v595, %v785
          %v846 = vsub.f32 %v533, %v790
          %v847 = vsub.f32 %v598, %v790
          %v848 = vsub.f32 %v536, %v795
          %v849 = vsub.f32 %v601, %v795
          %v850 = vsub.f32 %v539, %v800
          %v851 = vsub.f32 %v604, %v800
          %v852 = vsub.f32 %v542, %v805
          %v853 = vsub.f32 %v607, %v805
          %v854 = vsub.f32 %v545, %v810
          %v855 = vsub.f32 %v610, %v810
          %v856 = vsub.f32 %v548, %v815
          %v857 = vsub.f32 %v613, %v815
          %v858 = vsub.f32 %v551, %v820
          %v859 = vsub.f32 %v616, %v820
          %v860 = vsub.f32 %v554, %v825
          %v861 = vsub.f32 %v619, %v825
          %v862 = vsub.f32 %v557, %v830
          %v863 = vsub.f32 %v622, %v830
          %v864 = vmul.f32 %v832, 1.442695
          %v865 = vpow.pop %v864
          %v866 = vmul.f32 %v833, 1.442695
          %v867 = vpow.pop %v866
          %v868 = vmul.f32 %v834, 1.442695
          %v869 = vpow.pop %v868
          %v870 = vmul.f32 %v835, 1.442695
          %v871 = vpow.pop %v870
          %v872 = vmul.f32 %v836, 1.442695
          %v873 = vpow.pop %v872
          %v874 = vmul.f32 %v837, 1.442695
          %v875 = vpow.pop %v874
          %v876 = vmul.f32 %v838, 1.442695
          %v877 = vpow.pop %v876
          %v878 = vmul.f32 %v839, 1.442695
          %v879 = vpow.pop %v878
          %v880 = vmul.f32 %v840, 1.442695
          %v881 = vpow.pop %v880
          %v882 = vmul.f32 %v841, 1.442695
          %v883 = vpow.pop %v882
          %v884 = vmul.f32 %v842, 1.442695
          %v885 = vpow.pop %v884
          %v886 = vmul.f32 %v843, 1.442695
          %v887 = vpow.pop %v886
          %v888 = vmul.f32 %v844, 1.442695
          %v889 = vpow.pop %v888
          %v890 = vmul.f32 %v845, 1.442695
          %v891 = vpow.pop %v890
          %v892 = vmul.f32 %v846, 1.442695
          %v893 = vpow.pop %v892
          %v894 = vmul.f32 %v847, 1.442695
          %v895 = vpow.pop %v894
          %v896 = vmul.f32 %v848, 1.442695
          %v897 = vpow.pop %v896
          %v898 = vmul.f32 %v849, 1.442695
          %v899 = vpow.pop %v898
          %v900 = vmul.f32 %v850, 1.442695
          %v901 = vpow.pop %v900
          %v902 = vmul.f32 %v851, 1.442695
          %v903 = vpow.pop %v902
          %v904 = vmul.f32 %v852, 1.442695
          %v905 = vpow.pop %v904
          %v906 = vmul.f32 %v853, 1.442695
          %v907 = vpow.pop %v906
          %v908 = vmul.f32 %v854, 1.442695
          %v909 = vpow.pop %v908
          %v910 = vmul.f32 %v855, 1.442695
          %v911 = vpow.pop %v910
          %v912 = vmul.f32 %v856, 1.442695
          %v913 = vpow.pop %v912
          %v914 = vmul.f32 %v857, 1.442695
          %v915 = vpow.pop %v914
          %v916 = vmul.f32 %v858, 1.442695
          %v917 = vpow.pop %v916
          %v918 = vmul.f32 %v859, 1.442695
          %v919 = vpow.pop %v918
          %v920 = vmul.f32 %v860, 1.442695
          %v921 = vpow.pop %v920
          %v922 = vmul.f32 %v861, 1.442695
          %v923 = vpow.pop %v922
          %v924 = vmul.f32 %v862, 1.442695
          %v925 = vpow.pop %v924
          %v926 = vmul.f32 %v863, 1.442695
          %v927 = vpow.pop %v926
          %v928 = vld [vmem:[#allocation3] sm:$0xff]
          %v929 = vld [vmem:[#allocation3 + $0x8] sm:$0xff]
          %v930 = vld [vmem:[#allocation3 + $0x10] sm:$0xff]
          %v931 = vld [vmem:[#allocation3 + $0x18] sm:$0xff]
          %v932 = vld [vmem:[#allocation3 + $0x20] sm:$0xff]
          %v933 = vld [vmem:[#allocation3 + $0x28] sm:$0xff]
          %v934 = vld [vmem:[#allocation3 + $0x30] sm:$0xff]
          %v935 = vld [vmem:[#allocation3 + $0x38] sm:$0xff]
          %v936 = vld [vmem:[#allocation3 + $0x40] sm:$0xff]
          %v937 = vld [vmem:[#allocation3 + $0x48] sm:$0xff]
          %v938 = vld [vmem:[#allocation3 + $0x50] sm:$0xff]
          %v939 = vld [vmem:[#allocation3 + $0x58] sm:$0xff]
          %v940 = vld [vmem:[#allocation3 + $0x60] sm:$0xff]
          %v941 = vld [vmem:[#allocation3 + $0x68] sm:$0xff]
          %v942 = vld [vmem:[#allocation3 + $0x70] sm:$0xff]
          %v943 = vld [vmem:[#allocation3 + $0x78] sm:$0xff]
          %v944 = vmul.f32 %v721, %v928
          %v945 = vmul.f32 %v723, %v929
          %v946 = vmul.f32 %v725, %v930
          %v947 = vmul.f32 %v727, %v931
          %v948 = vmul.f32 %v729, %v932
          %v949 = vmul.f32 %v731, %v933
          %v950 = vmul.f32 %v733, %v934
          %v951 = vmul.f32 %v735, %v935
          %v952 = vmul.f32 %v737, %v936
          %v953 = vmul.f32 %v739, %v937
          %v954 = vmul.f32 %v741, %v938
          %v955 = vmul.f32 %v743, %v939
          %v956 = vmul.f32 %v745, %v940
          %v957 = vmul.f32 %v747, %v941
          %v958 = vmul.f32 %v749, %v942
          %v959 = vmul.f32 %v751, %v943
          %v960 = vadd.f32 %v865, %v867
          %961 = vadd.xlane.f32.xlu0 %v960
          %v962 = vpop.xlane.xlu0 %961
          %v963 = vadd.f32 %v869, %v871
          %964 = vadd.xlane.f32.xlu0 %v963
          %v965 = vpop.xlane.xlu0 %964
          %v966 = vadd.f32 %v873, %v875
          %967 = vadd.xlane.f32.xlu0 %v966
          %v968 = vpop.xlane.xlu0 %967
          %v969 = vadd.f32 %v877, %v879
          %970 = vadd.xlane.f32.xlu0 %v969
          %v971 = vpop.xlane.xlu0 %970
          %v972 = vadd.f32 %v881, %v883
          %973 = vadd.xlane.f32.xlu0 %v972
          %v974 = vpop.xlane.xlu0 %973
          %v975 = vadd.f32 %v885, %v887
          %976 = vadd.xlane.f32.xlu0 %v975
          %v977 = vpop.xlane.xlu0 %976
          %v978 = vadd.f32 %v889, %v891
          %979 = vadd.xlane.f32.xlu0 %v978
          %v980 = vpop.xlane.xlu0 %979
          %v981 = vadd.f32 %v893, %v895
          %982 = vadd.xlane.f32.xlu0 %v981
          %v983 = vpop.xlane.xlu0 %982
          %v984 = vadd.f32 %v897, %v899
          %985 = vadd.xlane.f32.xlu0 %v984
          %v986 = vpop.xlane.xlu0 %985
          %v987 = vadd.f32 %v901, %v903
          %988 = vadd.xlane.f32.xlu0 %v987
          %v989 = vpop.xlane.xlu0 %988
          %v990 = vadd.f32 %v905, %v907
          %991 = vadd.xlane.f32.xlu0 %v990
          %v992 = vpop.xlane.xlu0 %991
          %v993 = vadd.f32 %v909, %v911
          %994 = vadd.xlane.f32.xlu0 %v993
          %v995 = vpop.xlane.xlu0 %994
          %v996 = vadd.f32 %v913, %v915
          %997 = vadd.xlane.f32.xlu0 %v996
          %v998 = vpop.xlane.xlu0 %997
          %v999 = vadd.f32 %v917, %v919
          %1000 = vadd.xlane.f32.xlu0 %v999
          %v1001 = vpop.xlane.xlu0 %1000
          %v1002 = vadd.f32 %v921, %v923
          %1003 = vadd.xlane.f32.xlu0 %v1002
          %v1004 = vpop.xlane.xlu0 %1003
          %v1005 = vadd.f32 %v925, %v927
          %1006 = vadd.xlane.f32.xlu0 %v1005
          %v1007 = vpop.xlane.xlu0 %1006
          %v1008 = vadd.f32 %v944, %v962
          %v1009 = vadd.f32 %v945, %v965
          %v1010 = vadd.f32 %v946, %v968
          %v1011 = vadd.f32 %v947, %v971
          %v1012 = vadd.f32 %v948, %v974
          %v1013 = vadd.f32 %v949, %v977
          %v1014 = vadd.f32 %v950, %v980
          %v1015 = vadd.f32 %v951, %v983
          %v1016 = vadd.f32 %v952, %v986
          %v1017 = vadd.f32 %v953, %v989
          %v1018 = vadd.f32 %v954, %v992
          %v1019 = vadd.f32 %v955, %v995
          %v1020 = vadd.f32 %v956, %v998
          %v1021 = vadd.f32 %v957, %v1001
          %v1022 = vadd.f32 %v958, %v1004
          %v1023 = vadd.f32 %v959, %v1007
          %vm1024 = vcmask 7168
          %1025 = vst.msk [vmem:[#allocation3] sm:$0xff] %vm1024, %v1008
          %1026 = vst.msk [vmem:[#allocation3 + $0x8] sm:$0xff] %vm1024, %v1009
          %1027 = vst.msk [vmem:[#allocation3 + $0x10] sm:$0xff] %vm1024, %v1010
          %1028 = vst.msk [vmem:[#allocation3 + $0x18] sm:$0xff] %vm1024, %v1011
          %1029 = vst.msk [vmem:[#allocation3 + $0x20] sm:$0xff] %vm1024, %v1012
          %1030 = vst.msk [vmem:[#allocation3 + $0x28] sm:$0xff] %vm1024, %v1013
          %1031 = vst.msk [vmem:[#allocation3 + $0x30] sm:$0xff] %vm1024, %v1014
          %1032 = vst.msk [vmem:[#allocation3 + $0x38] sm:$0xff] %vm1024, %v1015
          %1033 = vst.msk [vmem:[#allocation3 + $0x40] sm:$0xff] %vm1024, %v1016
          %1034 = vst.msk [vmem:[#allocation3 + $0x48] sm:$0xff] %vm1024, %v1017
          %1035 = vst.msk [vmem:[#allocation3 + $0x50] sm:$0xff] %vm1024, %v1018
          %1036 = vst.msk [vmem:[#allocation3 + $0x58] sm:$0xff] %vm1024, %v1019
          %1037 = vst.msk [vmem:[#allocation3 + $0x60] sm:$0xff] %vm1024, %v1020
          %1038 = vst.msk [vmem:[#allocation3 + $0x68] sm:$0xff] %vm1024, %v1021
          %1039 = vst.msk [vmem:[#allocation3 + $0x70] sm:$0xff] %vm1024, %v1022
          %1040 = vst.msk [vmem:[#allocation3 + $0x78] sm:$0xff] %vm1024, %v1023
          %v1041 = vld [vmem:[#allocation4] sm:$0xff]
          %v1042 = vld [vmem:[#allocation4 + $0x8] sm:$0xff]
          %v1043 = vld [vmem:[#allocation4 + $0x10] sm:$0xff]
          %v1044 = vld [vmem:[#allocation4 + $0x18] sm:$0xff]
          %v1045 = vld [vmem:[#allocation4 + $0x20] sm:$0xff]
          %v1046 = vld [vmem:[#allocation4 + $0x28] sm:$0xff]
          %v1047 = vld [vmem:[#allocation4 + $0x30] sm:$0xff]
          %v1048 = vld [vmem:[#allocation4 + $0x38] sm:$0xff]
          %v1049 = vld [vmem:[#allocation4 + $0x40] sm:$0xff]
          %v1050 = vld [vmem:[#allocation4 + $0x48] sm:$0xff]
          %v1051 = vld [vmem:[#allocation4 + $0x50] sm:$0xff]
          %v1052 = vld [vmem:[#allocation4 + $0x58] sm:$0xff]
          %v1053 = vld [vmem:[#allocation4 + $0x60] sm:$0xff]
          %v1054 = vld [vmem:[#allocation4 + $0x68] sm:$0xff]
          %v1055 = vld [vmem:[#allocation4 + $0x70] sm:$0xff]
          %v1056 = vld [vmem:[#allocation4 + $0x78] sm:$0xff]
          %1058 = vset.pattern.permute.xlu0 0
          %1059 = vperm.xlu0 %1058, %v721
          %v1060 = vpop.permute.xlu0 %1059
          %1063 = vset.pattern.permute.xlu0 0
          %1064 = vperm.xlu0 %1063, %v723
          %v1065 = vpop.permute.xlu0 %1064
          %1068 = vset.pattern.permute.xlu0 0
          %1069 = vperm.xlu0 %1068, %v725
          %v1070 = vpop.permute.xlu0 %1069
          %1073 = vset.pattern.permute.xlu0 0
          %1074 = vperm.xlu0 %1073, %v727
          %v1075 = vpop.permute.xlu0 %1074
          %1078 = vset.pattern.permute.xlu0 0
          %1079 = vperm.xlu0 %1078, %v729
          %v1080 = vpop.permute.xlu0 %1079
          %1083 = vset.pattern.permute.xlu0 0
          %1084 = vperm.xlu0 %1083, %v731
          %v1085 = vpop.permute.xlu0 %1084
          %1088 = vset.pattern.permute.xlu0 0
          %1089 = vperm.xlu0 %1088, %v733
          %v1090 = vpop.permute.xlu0 %1089
          %1093 = vset.pattern.permute.xlu0 0
          %1094 = vperm.xlu0 %1093, %v735
          %v1095 = vpop.permute.xlu0 %1094
          %1098 = vset.pattern.permute.xlu0 0
          %1099 = vperm.xlu0 %1098, %v737
          %v1100 = vpop.permute.xlu0 %1099
          %1103 = vset.pattern.permute.xlu0 0
          %1104 = vperm.xlu0 %1103, %v739
          %v1105 = vpop.permute.xlu0 %1104
          %1108 = vset.pattern.permute.xlu0 0
          %1109 = vperm.xlu0 %1108, %v741
          %v1110 = vpop.permute.xlu0 %1109
          %1113 = vset.pattern.permute.xlu0 0
          %1114 = vperm.xlu0 %1113, %v743
          %v1115 = vpop.permute.xlu0 %1114
          %1118 = vset.pattern.permute.xlu0 0
          %1119 = vperm.xlu0 %1118, %v745
          %v1120 = vpop.permute.xlu0 %1119
          %1123 = vset.pattern.permute.xlu0 0
          %1124 = vperm.xlu0 %1123, %v747
          %v1125 = vpop.permute.xlu0 %1124
          %1128 = vset.pattern.permute.xlu0 0
          %1129 = vperm.xlu0 %1128, %v749
          %v1130 = vpop.permute.xlu0 %1129
          %1133 = vset.pattern.permute.xlu0 0
          %1134 = vperm.xlu0 %1133, %v751
          %v1135 = vpop.permute.xlu0 %1134
          %v1137 = vmul.f32 %v1060, %v1041
          %v1138 = vmul.f32 %v1065, %v1042
          %v1139 = vmul.f32 %v1070, %v1043
          %v1140 = vmul.f32 %v1075, %v1044
          %v1141 = vmul.f32 %v1080, %v1045
          %v1142 = vmul.f32 %v1085, %v1046
          %v1143 = vmul.f32 %v1090, %v1047
          %v1144 = vmul.f32 %v1095, %v1048
          %v1145 = vmul.f32 %v1100, %v1049
          %v1146 = vmul.f32 %v1105, %v1050
          %v1147 = vmul.f32 %v1110, %v1051
          %v1148 = vmul.f32 %v1115, %v1052
          %v1149 = vmul.f32 %v1120, %v1053
          %v1150 = vmul.f32 %v1125, %v1054
          %v1151 = vmul.f32 %v1130, %v1055
          %v1152 = vmul.f32 %v1135, %v1056
          %v1153 = vld [vmem:[%s290] sm:$0xff]
          %v1154 = vld [vmem:[%s290 + $0x8] sm:$0xff]
          %v1155 = vld [vmem:[%s290 + $0x10] sm:$0xff]
          %v1156 = vld [vmem:[%s290 + $0x18] sm:$0xff]
          %v1157 = vld [vmem:[%s290 + $0x20] sm:$0xff]
          %v1158 = vld [vmem:[%s290 + $0x28] sm:$0xff]
          %v1159 = vld [vmem:[%s290 + $0x30] sm:$0xff]
          %v1160 = vld [vmem:[%s290 + $0x38] sm:$0xff]
          %v1161 = vld [vmem:[%s290 + $0x40] sm:$0xff]
          %v1162 = vld [vmem:[%s290 + $0x48] sm:$0xff]
          %v1163 = vld [vmem:[%s290 + $0x50] sm:$0xff]
          %v1164 = vld [vmem:[%s290 + $0x58] sm:$0xff]
          %v1165 = vld [vmem:[%s290 + $0x60] sm:$0xff]
          %v1166 = vld [vmem:[%s290 + $0x68] sm:$0xff]
          %v1167 = vld [vmem:[%s290 + $0x70] sm:$0xff]
          %v1168 = vld [vmem:[%s290 + $0x78] sm:$0xff]
          %v1169 = vld [vmem:[%s290 + $0x80] sm:$0xff]
          %v1170 = vld [vmem:[%s290 + $0x88] sm:$0xff]
          %v1171 = vld [vmem:[%s290 + $0x90] sm:$0xff]
          %v1172 = vld [vmem:[%s290 + $0x98] sm:$0xff]
          %v1173 = vld [vmem:[%s290 + $0xa0] sm:$0xff]
          %v1174 = vld [vmem:[%s290 + $0xa8] sm:$0xff]
          %v1175 = vld [vmem:[%s290 + $0xb0] sm:$0xff]
          %v1176 = vld [vmem:[%s290 + $0xb8] sm:$0xff]
          %v1177 = vld [vmem:[%s290 + $0xc0] sm:$0xff]
          %v1178 = vld [vmem:[%s290 + $0xc8] sm:$0xff]
          %v1179 = vld [vmem:[%s290 + $0xd0] sm:$0xff]
          %v1180 = vld [vmem:[%s290 + $0xd8] sm:$0xff]
          %v1181 = vld [vmem:[%s290 + $0xe0] sm:$0xff]
          %v1182 = vld [vmem:[%s290 + $0xe8] sm:$0xff]
          %v1183 = vld [vmem:[%s290 + $0xf0] sm:$0xff]
          %v1184 = vld [vmem:[%s290 + $0xf8] sm:$0xff]
          %1185 = vmatpush.msra.mxu0 %v1168
          %1186 = vmatpush.msra.mxu0 %v1167
          %1187 = vmatpush.msra.mxu0 %v1166
          %1188 = vmatpush.msra.mxu0 %v1165
          %1189 = vmatpush.msra.mxu0 %v1164
          %1190 = vmatpush.msra.mxu0 %v1163
          %1191 = vmatpush.msra.mxu0 %v1162
          %1192 = vmatpush.msra.mxu0 %v1161
          %1193 = vmatpush.msra.mxu0 %v1160
          %1194 = vmatpush.msra.mxu0 %v1159
          %1195 = vmatpush.msra.mxu0 %v1158
          %1196 = vmatpush.msra.mxu0 %v1157
          %1197 = vmatpush.msra.mxu0 %v1156
          %1198 = vmatpush.msra.mxu0 %v1155
          %1199 = vmatpush.msra.mxu0 %v1154
          %1200 = vmatpush.msra.mxu0 %v1153
          %1201 = vmatmul.f32.gmra.mxu0 %v865
          %v1202 = vpop.f32.mrf.mxu0
          %v1203 = vadd.f32 0.0, %v1202
          %1204 = vmatmul.f32.gmra.mxu0 %v869
          %v1205 = vpop.f32.mrf.mxu0
          %v1206 = vadd.f32 0.0, %v1205
          %1207 = vmatmul.f32.gmra.mxu0 %v873
          %v1208 = vpop.f32.mrf.mxu0
          %v1209 = vadd.f32 0.0, %v1208
          %1210 = vmatmul.f32.gmra.mxu0 %v877
          %v1211 = vpop.f32.mrf.mxu0
          %v1212 = vadd.f32 0.0, %v1211
          %1213 = vmatmul.f32.gmra.mxu0 %v881
          %v1214 = vpop.f32.mrf.mxu0
          %v1215 = vadd.f32 0.0, %v1214
          %1216 = vmatmul.f32.gmra.mxu0 %v885
          %v1217 = vpop.f32.mrf.mxu0
          %v1218 = vadd.f32 0.0, %v1217
          %1219 = vmatmul.f32.gmra.mxu0 %v889
          %v1220 = vpop.f32.mrf.mxu0
          %v1221 = vadd.f32 0.0, %v1220
          %1222 = vmatmul.f32.gmra.mxu0 %v893
          %v1223 = vpop.f32.mrf.mxu0
          %v1224 = vadd.f32 0.0, %v1223
          %1225 = vmatmul.f32.gmra.mxu0 %v897
          %v1226 = vpop.f32.mrf.mxu0
          %v1227 = vadd.f32 0.0, %v1226
          %1228 = vmatmul.f32.gmra.mxu0 %v901
          %v1229 = vpop.f32.mrf.mxu0
          %v1230 = vadd.f32 0.0, %v1229
          %1231 = vmatmul.f32.gmra.mxu0 %v905
          %v1232 = vpop.f32.mrf.mxu0
          %v1233 = vadd.f32 0.0, %v1232
          %1234 = vmatmul.f32.gmra.mxu0 %v909
          %v1235 = vpop.f32.mrf.mxu0
          %v1236 = vadd.f32 0.0, %v1235
          %1237 = vmatmul.f32.gmra.mxu0 %v913
          %v1238 = vpop.f32.mrf.mxu0
          %v1239 = vadd.f32 0.0, %v1238
          %1240 = vmatmul.f32.gmra.mxu0 %v917
          %v1241 = vpop.f32.mrf.mxu0
          %v1242 = vadd.f32 0.0, %v1241
          %1243 = vmatmul.f32.gmra.mxu0 %v921
          %v1244 = vpop.f32.mrf.mxu0
          %v1245 = vadd.f32 0.0, %v1244
          %1246 = vmatmul.f32.gmra.mxu0 %v925
          %v1247 = vpop.f32.mrf.mxu0
          %v1248 = vadd.f32 0.0, %v1247
          %1249 = vdwg.mxu0
          %1250 = vmatpush.msra.mxu0 %v1184
          %1251 = vmatpush.msra.mxu0 %v1183
          %1252 = vmatpush.msra.mxu0 %v1182
          %1253 = vmatpush.msra.mxu0 %v1181
          %1254 = vmatpush.msra.mxu0 %v1180
          %1255 = vmatpush.msra.mxu0 %v1179
          %1256 = vmatpush.msra.mxu0 %v1178
          %1257 = vmatpush.msra.mxu0 %v1177
          %1258 = vmatpush.msra.mxu0 %v1176
          %1259 = vmatpush.msra.mxu0 %v1175
          %1260 = vmatpush.msra.mxu0 %v1174
          %1261 = vmatpush.msra.mxu0 %v1173
          %1262 = vmatpush.msra.mxu0 %v1172
          %1263 = vmatpush.msra.mxu0 %v1171
          %1264 = vmatpush.msra.mxu0 %v1170
          %1265 = vmatpush.msra.mxu0 %v1169
          %1266 = vmatmul.f32.gmra.mxu0 %v867
          %v1267 = vpop.f32.mrf.mxu0
          %v1268 = vadd.f32 %v1203, %v1267
          %1269 = vmatmul.f32.gmra.mxu0 %v871
          %v1270 = vpop.f32.mrf.mxu0
          %v1271 = vadd.f32 %v1206, %v1270
          %1272 = vmatmul.f32.gmra.mxu0 %v875
          %v1273 = vpop.f32.mrf.mxu0
          %v1274 = vadd.f32 %v1209, %v1273
          %1275 = vmatmul.f32.gmra.mxu0 %v879
          %v1276 = vpop.f32.mrf.mxu0
          %v1277 = vadd.f32 %v1212, %v1276
          %1278 = vmatmul.f32.gmra.mxu0 %v883
          %v1279 = vpop.f32.mrf.mxu0
          %v1280 = vadd.f32 %v1215, %v1279
          %1281 = vmatmul.f32.gmra.mxu0 %v887
          %v1282 = vpop.f32.mrf.mxu0
          %v1283 = vadd.f32 %v1218, %v1282
          %1284 = vmatmul.f32.gmra.mxu0 %v891
          %v1285 = vpop.f32.mrf.mxu0
          %v1286 = vadd.f32 %v1221, %v1285
          %1287 = vmatmul.f32.gmra.mxu0 %v895
          %v1288 = vpop.f32.mrf.mxu0
          %v1289 = vadd.f32 %v1224, %v1288
          %1290 = vmatmul.f32.gmra.mxu0 %v899
          %v1291 = vpop.f32.mrf.mxu0
          %v1292 = vadd.f32 %v1227, %v1291
          %1293 = vmatmul.f32.gmra.mxu0 %v903
          %v1294 = vpop.f32.mrf.mxu0
          %v1295 = vadd.f32 %v1230, %v1294
          %1296 = vmatmul.f32.gmra.mxu0 %v907
          %v1297 = vpop.f32.mrf.mxu0
          %v1298 = vadd.f32 %v1233, %v1297
          %1299 = vmatmul.f32.gmra.mxu0 %v911
          %v1300 = vpop.f32.mrf.mxu0
          %v1301 = vadd.f32 %v1236, %v1300
          %1302 = vmatmul.f32.gmra.mxu0 %v915
          %v1303 = vpop.f32.mrf.mxu0
          %v1304 = vadd.f32 %v1239, %v1303
          %1305 = vmatmul.f32.gmra.mxu0 %v919
          %v1306 = vpop.f32.mrf.mxu0
          %v1307 = vadd.f32 %v1242, %v1306
          %1308 = vmatmul.f32.gmra.mxu0 %v923
          %v1309 = vpop.f32.mrf.mxu0
          %v1310 = vadd.f32 %v1245, %v1309
          %1311 = vmatmul.f32.gmra.mxu0 %v927
          %v1312 = vpop.f32.mrf.mxu0
          %v1313 = vadd.f32 %v1248, %v1312
          %1314 = vdwg.mxu0
          %v1315 = vadd.f32 %v1137, %v1268
          %v1316 = vadd.f32 %v1138, %v1271
          %v1317 = vadd.f32 %v1139, %v1274
          %v1318 = vadd.f32 %v1140, %v1277
          %v1319 = vadd.f32 %v1141, %v1280
          %v1320 = vadd.f32 %v1142, %v1283
          %v1321 = vadd.f32 %v1143, %v1286
          %v1322 = vadd.f32 %v1144, %v1289
          %v1323 = vadd.f32 %v1145, %v1292
          %v1324 = vadd.f32 %v1146, %v1295
          %v1325 = vadd.f32 %v1147, %v1298
          %v1326 = vadd.f32 %v1148, %v1301
          %v1327 = vadd.f32 %v1149, %v1304
          %v1328 = vadd.f32 %v1150, %v1307
          %v1329 = vadd.f32 %v1151, %v1310
          %v1330 = vadd.f32 %v1152, %v1313
          %1331 = vst [vmem:[#allocation4] sm:$0xff] %v1315
          %1332 = vst [vmem:[#allocation4 + $0x8] sm:$0xff] %v1316
          %1333 = vst [vmem:[#allocation4 + $0x10] sm:$0xff] %v1317
          %1334 = vst [vmem:[#allocation4 + $0x18] sm:$0xff] %v1318
          %1335 = vst [vmem:[#allocation4 + $0x20] sm:$0xff] %v1319
          %1336 = vst [vmem:[#allocation4 + $0x28] sm:$0xff] %v1320
          %1337 = vst [vmem:[#allocation4 + $0x30] sm:$0xff] %v1321
          %1338 = vst [vmem:[#allocation4 + $0x38] sm:$0xff] %v1322
          %1339 = vst [vmem:[#allocation4 + $0x40] sm:$0xff] %v1323
          %1340 = vst [vmem:[#allocation4 + $0x48] sm:$0xff] %v1324
          %1341 = vst [vmem:[#allocation4 + $0x50] sm:$0xff] %v1325
          %1342 = vst [vmem:[#allocation4 + $0x58] sm:$0xff] %v1326
          %1343 = vst [vmem:[#allocation4 + $0x60] sm:$0xff] %v1327
          %1344 = vst [vmem:[#allocation4 + $0x68] sm:$0xff] %v1328
          %1345 = vst [vmem:[#allocation4 + $0x70] sm:$0xff] %v1329
          %1346 = vst [vmem:[#allocation4 + $0x78] sm:$0xff] %v1330
          %1347 = vst.msk [vmem:[#allocation2] sm:$0xff] %vm1024, %v688
          %1348 = vst.msk [vmem:[#allocation2 + $0x8] sm:$0xff] %vm1024, %v689
          %1349 = vst.msk [vmem:[#allocation2 + $0x10] sm:$0xff] %vm1024, %v690
          %1350 = vst.msk [vmem:[#allocation2 + $0x18] sm:$0xff] %vm1024, %v691
          %1351 = vst.msk [vmem:[#allocation2 + $0x20] sm:$0xff] %vm1024, %v692
          %1352 = vst.msk [vmem:[#allocation2 + $0x28] sm:$0xff] %vm1024, %v693
          %1353 = vst.msk [vmem:[#allocation2 + $0x30] sm:$0xff] %vm1024, %v694
          %1354 = vst.msk [vmem:[#allocation2 + $0x38] sm:$0xff] %vm1024, %v695
          %1355 = vst.msk [vmem:[#allocation2 + $0x40] sm:$0xff] %vm1024, %v696
          %1356 = vst.msk [vmem:[#allocation2 + $0x48] sm:$0xff] %vm1024, %v697
          %1357 = vst.msk [vmem:[#allocation2 + $0x50] sm:$0xff] %vm1024, %v698
          %1358 = vst.msk [vmem:[#allocation2 + $0x58] sm:$0xff] %vm1024, %v699
          %1359 = vst.msk [vmem:[#allocation2 + $0x60] sm:$0xff] %vm1024, %v700
          %1360 = vst.msk [vmem:[#allocation2 + $0x68] sm:$0xff] %vm1024, %v701
          %1361 = vst.msk [vmem:[#allocation2 + $0x70] sm:$0xff] %vm1024, %v702
          %1362 = vst.msk [vmem:[#allocation2 + $0x78] sm:$0xff] %vm1024, %v703
        $region52: #{tpu_custom_call.1} parent=31 // pred_fallthru
          _
        // Predicated region
        $region53: #{tpu_custom_call.1} parent=31 // pred_check
          %p1363 = pneg %p341
        $region54: #{tpu_custom_call.1} parent=31 // pred_check_branch
          %1365 = sbr.rel (%p1363) target = $region56
        $region55: #{tpu_custom_call.1} parent=31 // pred_region
          %v1366 = vld [vmem:[#allocation5] sm:$0xff]
          %v1367 = vld [vmem:[#allocation5 + $0x8] sm:$0xff]
          %v1368 = vld [vmem:[#allocation5 + $0x10] sm:$0xff]
          %v1369 = vld [vmem:[#allocation5 + $0x18] sm:$0xff]
          %v1370 = vld [vmem:[#allocation5 + $0x20] sm:$0xff]
          %v1371 = vld [vmem:[#allocation5 + $0x28] sm:$0xff]
          %v1372 = vld [vmem:[#allocation5 + $0x30] sm:$0xff]
          %v1373 = vld [vmem:[#allocation5 + $0x38] sm:$0xff]
          %v1374 = vld [vmem:[#allocation5 + $0x40] sm:$0xff]
          %v1375 = vld [vmem:[#allocation5 + $0x48] sm:$0xff]
          %v1376 = vld [vmem:[#allocation5 + $0x50] sm:$0xff]
          %v1377 = vld [vmem:[#allocation5 + $0x58] sm:$0xff]
          %v1378 = vld [vmem:[#allocation5 + $0x60] sm:$0xff]
          %v1379 = vld [vmem:[#allocation5 + $0x68] sm:$0xff]
          %v1380 = vld [vmem:[#allocation5 + $0x70] sm:$0xff]
          %v1381 = vld [vmem:[#allocation5 + $0x78] sm:$0xff]
          %v1382 = vld [vmem:[%s280] sm:$0xff]
          %v1383 = vld [vmem:[%s280 + $0x8] sm:$0xff]
          %v1384 = vld [vmem:[%s280 + $0x10] sm:$0xff]
          %v1385 = vld [vmem:[%s280 + $0x18] sm:$0xff]
          %v1386 = vld [vmem:[%s280 + $0x20] sm:$0xff]
          %v1387 = vld [vmem:[%s280 + $0x28] sm:$0xff]
          %v1388 = vld [vmem:[%s280 + $0x30] sm:$0xff]
          %v1389 = vld [vmem:[%s280 + $0x38] sm:$0xff]
          %v1390 = vld [vmem:[%s280 + $0x40] sm:$0xff]
          %v1391 = vld [vmem:[%s280 + $0x48] sm:$0xff]
          %v1392 = vld [vmem:[%s280 + $0x50] sm:$0xff]
          %v1393 = vld [vmem:[%s280 + $0x58] sm:$0xff]
          %v1394 = vld [vmem:[%s280 + $0x60] sm:$0xff]
          %v1395 = vld [vmem:[%s280 + $0x68] sm:$0xff]
          %v1396 = vld [vmem:[%s280 + $0x70] sm:$0xff]
          %v1397 = vld [vmem:[%s280 + $0x78] sm:$0xff]
          %v1398 = vld [vmem:[%s280 + $0x80] sm:$0xff]
          %v1399 = vld [vmem:[%s280 + $0x88] sm:$0xff]
          %v1400 = vld [vmem:[%s280 + $0x90] sm:$0xff]
          %v1401 = vld [vmem:[%s280 + $0x98] sm:$0xff]
          %v1402 = vld [vmem:[%s280 + $0xa0] sm:$0xff]
          %v1403 = vld [vmem:[%s280 + $0xa8] sm:$0xff]
          %v1404 = vld [vmem:[%s280 + $0xb0] sm:$0xff]
          %v1405 = vld [vmem:[%s280 + $0xb8] sm:$0xff]
          %v1406 = vld [vmem:[%s280 + $0xc0] sm:$0xff]
          %v1407 = vld [vmem:[%s280 + $0xc8] sm:$0xff]
          %v1408 = vld [vmem:[%s280 + $0xd0] sm:$0xff]
          %v1409 = vld [vmem:[%s280 + $0xd8] sm:$0xff]
          %v1410 = vld [vmem:[%s280 + $0xe0] sm:$0xff]
          %v1411 = vld [vmem:[%s280 + $0xe8] sm:$0xff]
          %v1412 = vld [vmem:[%s280 + $0xf0] sm:$0xff]
          %v1413 = vld [vmem:[%s280 + $0xf8] sm:$0xff]
          %1414 = vmatpush.xpose.msra.mxu0 %v1397
          %1415 = vmatpush.xpose.msra.mxu0 %v1396
          %1416 = vmatpush.xpose.msra.mxu0 %v1395
          %1417 = vmatpush.xpose.msra.mxu0 %v1394
          %1418 = vmatpush.xpose.msra.mxu0 %v1393
          %1419 = vmatpush.xpose.msra.mxu0 %v1392
          %1420 = vmatpush.xpose.msra.mxu0 %v1391
          %1421 = vmatpush.xpose.msra.mxu0 %v1390
          %1422 = vmatpush.xpose.msra.mxu0 %v1389
          %1423 = vmatpush.xpose.msra.mxu0 %v1388
          %1424 = vmatpush.xpose.msra.mxu0 %v1387
          %1425 = vmatpush.xpose.msra.mxu0 %v1386
          %1426 = vmatpush.xpose.msra.mxu0 %v1385
          %1427 = vmatpush.xpose.msra.mxu0 %v1384
          %1428 = vmatpush.xpose.msra.mxu0 %v1383
          %1429 = vmatpush.xpose.msra.mxu0 %v1382
          %1430 = vmatmul.f32.gmra.mxu0 %v1366
          %v1431 = vpop.f32.mrf.mxu0
          %v1432 = vadd.f32 0.0, %v1431
          %1433 = vmatmul.f32.gmra.mxu0 %v1367
          %v1434 = vpop.f32.mrf.mxu0
          %v1435 = vadd.f32 0.0, %v1434
          %1436 = vmatmul.f32.gmra.mxu0 %v1368
          %v1437 = vpop.f32.mrf.mxu0
          %v1438 = vadd.f32 0.0, %v1437
          %1439 = vmatmul.f32.gmra.mxu0 %v1369
          %v1440 = vpop.f32.mrf.mxu0
          %v1441 = vadd.f32 0.0, %v1440
          %1442 = vmatmul.f32.gmra.mxu0 %v1370
          %v1443 = vpop.f32.mrf.mxu0
          %v1444 = vadd.f32 0.0, %v1443
          %1445 = vmatmul.f32.gmra.mxu0 %v1371
          %v1446 = vpop.f32.mrf.mxu0
          %v1447 = vadd.f32 0.0, %v1446
          %1448 = vmatmul.f32.gmra.mxu0 %v1372
          %v1449 = vpop.f32.mrf.mxu0
          %v1450 = vadd.f32 0.0, %v1449
          %1451 = vmatmul.f32.gmra.mxu0 %v1373
          %v1452 = vpop.f32.mrf.mxu0
          %v1453 = vadd.f32 0.0, %v1452
          %1454 = vmatmul.f32.gmra.mxu0 %v1374
          %v1455 = vpop.f32.mrf.mxu0
          %v1456 = vadd.f32 0.0, %v1455
          %1457 = vmatmul.f32.gmra.mxu0 %v1375
          %v1458 = vpop.f32.mrf.mxu0
          %v1459 = vadd.f32 0.0, %v1458
          %1460 = vmatmul.f32.gmra.mxu0 %v1376
          %v1461 = vpop.f32.mrf.mxu0
          %v1462 = vadd.f32 0.0, %v1461
          %1463 = vmatmul.f32.gmra.mxu0 %v1377
          %v1464 = vpop.f32.mrf.mxu0
          %v1465 = vadd.f32 0.0, %v1464
          %1466 = vmatmul.f32.gmra.mxu0 %v1378
          %v1467 = vpop.f32.mrf.mxu0
          %v1468 = vadd.f32 0.0, %v1467
          %1469 = vmatmul.f32.gmra.mxu0 %v1379
          %v1470 = vpop.f32.mrf.mxu0
          %v1471 = vadd.f32 0.0, %v1470
          %1472 = vmatmul.f32.gmra.mxu0 %v1380
          %v1473 = vpop.f32.mrf.mxu0
          %v1474 = vadd.f32 0.0, %v1473
          %1475 = vmatmul.f32.gmra.mxu0 %v1381
          %v1476 = vpop.f32.mrf.mxu0
          %v1477 = vadd.f32 0.0, %v1476
          %1478 = vdwg.mxu0
          %1479 = vmatpush.xpose.msra.mxu0 %v1413
          %1480 = vmatpush.xpose.msra.mxu0 %v1412
          %1481 = vmatpush.xpose.msra.mxu0 %v1411
          %1482 = vmatpush.xpose.msra.mxu0 %v1410
          %1483 = vmatpush.xpose.msra.mxu0 %v1409
          %1484 = vmatpush.xpose.msra.mxu0 %v1408
          %1485 = vmatpush.xpose.msra.mxu0 %v1407
          %1486 = vmatpush.xpose.msra.mxu0 %v1406
          %1487 = vmatpush.xpose.msra.mxu0 %v1405
          %1488 = vmatpush.xpose.msra.mxu0 %v1404
          %1489 = vmatpush.xpose.msra.mxu0 %v1403
          %1490 = vmatpush.xpose.msra.mxu0 %v1402
          %1491 = vmatpush.xpose.msra.mxu0 %v1401
          %1492 = vmatpush.xpose.msra.mxu0 %v1400
          %1493 = vmatpush.xpose.msra.mxu0 %v1399
          %1494 = vmatpush.xpose.msra.mxu0 %v1398
          %1495 = vmatmul.f32.gmra.mxu0 %v1366
          %v1496 = vpop.f32.mrf.mxu0
          %v1497 = vadd.f32 0.0, %v1496
          %1498 = vmatmul.f32.gmra.mxu0 %v1367
          %v1499 = vpop.f32.mrf.mxu0
          %v1500 = vadd.f32 0.0, %v1499
          %1501 = vmatmul.f32.gmra.mxu0 %v1368
          %v1502 = vpop.f32.mrf.mxu0
          %v1503 = vadd.f32 0.0, %v1502
          %1504 = vmatmul.f32.gmra.mxu0 %v1369
          %v1505 = vpop.f32.mrf.mxu0
          %v1506 = vadd.f32 0.0, %v1505
          %1507 = vmatmul.f32.gmra.mxu0 %v1370
          %v1508 = vpop.f32.mrf.mxu0
          %v1509 = vadd.f32 0.0, %v1508
          %1510 = vmatmul.f32.gmra.mxu0 %v1371
          %v1511 = vpop.f32.mrf.mxu0
          %v1512 = vadd.f32 0.0, %v1511
          %1513 = vmatmul.f32.gmra.mxu0 %v1372
          %v1514 = vpop.f32.mrf.mxu0
          %v1515 = vadd.f32 0.0, %v1514
          %1516 = vmatmul.f32.gmra.mxu0 %v1373
          %v1517 = vpop.f32.mrf.mxu0
          %v1518 = vadd.f32 0.0, %v1517
          %1519 = vmatmul.f32.gmra.mxu0 %v1374
          %v1520 = vpop.f32.mrf.mxu0
          %v1521 = vadd.f32 0.0, %v1520
          %1522 = vmatmul.f32.gmra.mxu0 %v1375
          %v1523 = vpop.f32.mrf.mxu0
          %v1524 = vadd.f32 0.0, %v1523
          %1525 = vmatmul.f32.gmra.mxu0 %v1376
          %v1526 = vpop.f32.mrf.mxu0
          %v1527 = vadd.f32 0.0, %v1526
          %1528 = vmatmul.f32.gmra.mxu0 %v1377
          %v1529 = vpop.f32.mrf.mxu0
          %v1530 = vadd.f32 0.0, %v1529
          %1531 = vmatmul.f32.gmra.mxu0 %v1378
          %v1532 = vpop.f32.mrf.mxu0
          %v1533 = vadd.f32 0.0, %v1532
          %1534 = vmatmul.f32.gmra.mxu0 %v1379
          %v1535 = vpop.f32.mrf.mxu0
          %v1536 = vadd.f32 0.0, %v1535
          %1537 = vmatmul.f32.gmra.mxu0 %v1380
          %v1538 = vpop.f32.mrf.mxu0
          %v1539 = vadd.f32 0.0, %v1538
          %1540 = vmatmul.f32.gmra.mxu0 %v1381
          %v1541 = vpop.f32.mrf.mxu0
          %v1542 = vadd.f32 0.0, %v1541
          %1543 = vdwg.mxu0
          %v1544 = vlaneseq
          %v1545 = vshrl.u32 %v1544, 7
          %v1546 = vadd.s32 %v1545, 8
          %v1547 = vadd.s32 %v1545, 16
          %v1548 = vadd.s32 %v1545, 24
          %v1549 = vadd.s32 %v1545, 32
          %v1550 = vadd.s32 %v1545, 40
          %v1551 = vadd.s32 %v1545, 48
          %v1552 = vadd.s32 %v1545, 56
          %v1553 = vadd.s32 %v1545, 64
          %v1554 = vadd.s32 %v1545, 72
          %v1555 = vadd.s32 %v1545, 80
          %v1556 = vadd.s32 %v1545, 88
          %v1557 = vadd.s32 %v1545, 96
          %v1558 = vadd.s32 %v1545, 104
          %v1559 = vadd.s32 %v1545, 112
          %v1560 = vadd.s32 %v1545, 120
          %v1561 = vstv %s334
          %v1562 = vadd.s32 %v1561, %v1545
          %v1563 = vadd.s32 %v1561, %v1546
          %v1564 = vadd.s32 %v1561, %v1547
          %v1565 = vadd.s32 %v1561, %v1548
          %v1566 = vadd.s32 %v1561, %v1549
          %v1567 = vadd.s32 %v1561, %v1550
          %v1568 = vadd.s32 %v1561, %v1551
          %v1569 = vadd.s32 %v1561, %v1552
          %v1570 = vadd.s32 %v1561, %v1553
          %v1571 = vadd.s32 %v1561, %v1554
          %v1572 = vadd.s32 %v1561, %v1555
          %v1573 = vadd.s32 %v1561, %v1556
          %v1574 = vadd.s32 %v1561, %v1557
          %v1575 = vadd.s32 %v1561, %v1558
          %v1576 = vadd.s32 %v1561, %v1559
          %v1577 = vadd.s32 %v1561, %v1560
          %v1578 = vlaneseq
          %v1579 = vand.u32 %v1578, 127
          %v1580 = vadd.s32 %v1579, 128
          %v1581 = vstv %s335
          %v1582 = vadd.s32 %v1581, %v1579
          %v1583 = vadd.s32 %v1581, %v1580
          %vm1584 = vcmp.le.s32.totalorder %v1582, %v1562
          %vm1585 = vcmp.le.s32.totalorder %v1583, %v1562
          %vm1586 = vcmp.le.s32.totalorder %v1582, %v1563
          %vm1587 = vcmp.le.s32.totalorder %v1583, %v1563
          %vm1588 = vcmp.le.s32.totalorder %v1582, %v1564
          %vm1589 = vcmp.le.s32.totalorder %v1583, %v1564
          %vm1590 = vcmp.le.s32.totalorder %v1582, %v1565
          %vm1591 = vcmp.le.s32.totalorder %v1583, %v1565
          %vm1592 = vcmp.le.s32.totalorder %v1582, %v1566
          %vm1593 = vcmp.le.s32.totalorder %v1583, %v1566
          %vm1594 = vcmp.le.s32.totalorder %v1582, %v1567
          %vm1595 = vcmp.le.s32.totalorder %v1583, %v1567
          %vm1596 = vcmp.le.s32.totalorder %v1582, %v1568
          %vm1597 = vcmp.le.s32.totalorder %v1583, %v1568
          %vm1598 = vcmp.le.s32.totalorder %v1582, %v1569
          %vm1599 = vcmp.le.s32.totalorder %v1583, %v1569
          %vm1600 = vcmp.le.s32.totalorder %v1582, %v1570
          %vm1601 = vcmp.le.s32.totalorder %v1583, %v1570
          %vm1602 = vcmp.le.s32.totalorder %v1582, %v1571
          %vm1603 = vcmp.le.s32.totalorder %v1583, %v1571
          %vm1604 = vcmp.le.s32.totalorder %v1582, %v1572
          %vm1605 = vcmp.le.s32.totalorder %v1583, %v1572
          %vm1606 = vcmp.le.s32.totalorder %v1582, %v1573
          %vm1607 = vcmp.le.s32.totalorder %v1583, %v1573
          %vm1608 = vcmp.le.s32.totalorder %v1582, %v1574
          %vm1609 = vcmp.le.s32.totalorder %v1583, %v1574
          %vm1610 = vcmp.le.s32.totalorder %v1582, %v1575
          %vm1611 = vcmp.le.s32.totalorder %v1583, %v1575
          %vm1612 = vcmp.le.s32.totalorder %v1582, %v1576
          %vm1613 = vcmp.le.s32.totalorder %v1583, %v1576
          %vm1614 = vcmp.le.s32.totalorder %v1582, %v1577
          %vm1615 = vcmp.le.s32.totalorder %v1583, %v1577
          %v1616 = vsel %vm1584, %v1432, -inf
          %v1617 = vsel %vm1585, %v1497, -inf
          %v1618 = vsel %vm1586, %v1435, -inf
          %v1619 = vsel %vm1587, %v1500, -inf
          %v1620 = vsel %vm1588, %v1438, -inf
          %v1621 = vsel %vm1589, %v1503, -inf
          %v1622 = vsel %vm1590, %v1441, -inf
          %v1623 = vsel %vm1591, %v1506, -inf
          %v1624 = vsel %vm1592, %v1444, -inf
          %v1625 = vsel %vm1593, %v1509, -inf
          %v1626 = vsel %vm1594, %v1447, -inf
          %v1627 = vsel %vm1595, %v1512, -inf
          %v1628 = vsel %vm1596, %v1450, -inf
          %v1629 = vsel %vm1597, %v1515, -inf
          %v1630 = vsel %vm1598, %v1453, -inf
          %v1631 = vsel %vm1599, %v1518, -inf
          %v1632 = vsel %vm1600, %v1456, -inf
          %v1633 = vsel %vm1601, %v1521, -inf
          %v1634 = vsel %vm1602, %v1459, -inf
          %v1635 = vsel %vm1603, %v1524, -inf
          %v1636 = vsel %vm1604, %v1462, -inf
          %v1637 = vsel %vm1605, %v1527, -inf
          %v1638 = vsel %vm1606, %v1465, -inf
          %v1639 = vsel %vm1607, %v1530, -inf
          %v1640 = vsel %vm1608, %v1468, -inf
          %v1641 = vsel %vm1609, %v1533, -inf
          %v1642 = vsel %vm1610, %v1471, -inf
          %v1643 = vsel %vm1611, %v1536, -inf
          %v1644 = vsel %vm1612, %v1474, -inf
          %v1645 = vsel %vm1613, %v1539, -inf
          %v1646 = vsel %vm1614, %v1477, -inf
          %v1647 = vsel %vm1615, %v1542, -inf
          %v1648 = vld [vmem:[#allocation2] sm:$0xff]
          %v1649 = vld [vmem:[#allocation2 + $0x8] sm:$0xff]
          %v1650 = vld [vmem:[#allocation2 + $0x10] sm:$0xff]
          %v1651 = vld [vmem:[#allocation2 + $0x18] sm:$0xff]
          %v1652 = vld [vmem:[#allocation2 + $0x20] sm:$0xff]
          %v1653 = vld [vmem:[#allocation2 + $0x28] sm:$0xff]
          %v1654 = vld [vmem:[#allocation2 + $0x30] sm:$0xff]
          %v1655 = vld [vmem:[#allocation2 + $0x38] sm:$0xff]
          %v1656 = vld [vmem:[#allocation2 + $0x40] sm:$0xff]
          %v1657 = vld [vmem:[#allocation2 + $0x48] sm:$0xff]
          %v1658 = vld [vmem:[#allocation2 + $0x50] sm:$0xff]
          %v1659 = vld [vmem:[#allocation2 + $0x58] sm:$0xff]
          %v1660 = vld [vmem:[#allocation2 + $0x60] sm:$0xff]
          %v1661 = vld [vmem:[#allocation2 + $0x68] sm:$0xff]
          %v1662 = vld [vmem:[#allocation2 + $0x70] sm:$0xff]
          %v1663 = vld [vmem:[#allocation2 + $0x78] sm:$0xff]
          %v1664 = vmax.f32 %v1616, %v1617
          %1665 = vmax.xlane.f32.xlu0 %v1664
          %v1666 = vpop.xlane.xlu0 %1665
          %v1667 = vmax.f32 %v1618, %v1619
          %1668 = vmax.xlane.f32.xlu0 %v1667
          %v1669 = vpop.xlane.xlu0 %1668
          %v1670 = vmax.f32 %v1620, %v1621
          %1671 = vmax.xlane.f32.xlu0 %v1670
          %v1672 = vpop.xlane.xlu0 %1671
          %v1673 = vmax.f32 %v1622, %v1623
          %1674 = vmax.xlane.f32.xlu0 %v1673
          %v1675 = vpop.xlane.xlu0 %1674
          %v1676 = vmax.f32 %v1624, %v1625
          %1677 = vmax.xlane.f32.xlu0 %v1676
          %v1678 = vpop.xlane.xlu0 %1677
          %v1679 = vmax.f32 %v1626, %v1627
          %1680 = vmax.xlane.f32.xlu0 %v1679
          %v1681 = vpop.xlane.xlu0 %1680
          %v1682 = vmax.f32 %v1628, %v1629
          %1683 = vmax.xlane.f32.xlu0 %v1682
          %v1684 = vpop.xlane.xlu0 %1683
          %v1685 = vmax.f32 %v1630, %v1631
          %1686 = vmax.xlane.f32.xlu0 %v1685
          %v1687 = vpop.xlane.xlu0 %1686
          %v1688 = vmax.f32 %v1632, %v1633
          %1689 = vmax.xlane.f32.xlu0 %v1688
          %v1690 = vpop.xlane.xlu0 %1689
          %v1691 = vmax.f32 %v1634, %v1635
          %1692 = vmax.xlane.f32.xlu0 %v1691
          %v1693 = vpop.xlane.xlu0 %1692
          %v1694 = vmax.f32 %v1636, %v1637
          %1695 = vmax.xlane.f32.xlu0 %v1694
          %v1696 = vpop.xlane.xlu0 %1695
          %v1697 = vmax.f32 %v1638, %v1639
          %1698 = vmax.xlane.f32.xlu0 %v1697
          %v1699 = vpop.xlane.xlu0 %1698
          %v1700 = vmax.f32 %v1640, %v1641
          %1701 = vmax.xlane.f32.xlu0 %v1700
          %v1702 = vpop.xlane.xlu0 %1701
          %v1703 = vmax.f32 %v1642, %v1643
          %1704 = vmax.xlane.f32.xlu0 %v1703
          %v1705 = vpop.xlane.xlu0 %1704
          %v1706 = vmax.f32 %v1644, %v1645
          %1707 = vmax.xlane.f32.xlu0 %v1706
          %v1708 = vpop.xlane.xlu0 %1707
          %v1709 = vmax.f32 %v1646, %v1647
          %1710 = vmax.xlane.f32.xlu0 %v1709
          %v1711 = vpop.xlane.xlu0 %1710
          %v1712 = vmax.f32 %v1648, %v1666
          %v1713 = vmax.f32 %v1649, %v1669
          %v1714 = vmax.f32 %v1650, %v1672
          %v1715 = vmax.f32 %v1651, %v1675
          %v1716 = vmax.f32 %v1652, %v1678
          %v1717 = vmax.f32 %v1653, %v1681
          %v1718 = vmax.f32 %v1654, %v1684
          %v1719 = vmax.f32 %v1655, %v1687
          %v1720 = vmax.f32 %v1656, %v1690
          %v1721 = vmax.f32 %v1657, %v1693
          %v1722 = vmax.f32 %v1658, %v1696
          %v1723 = vmax.f32 %v1659, %v1699
          %v1724 = vmax.f32 %v1660, %v1702
          %v1725 = vmax.f32 %v1661, %v1705
          %v1726 = vmax.f32 %v1662, %v1708
          %v1727 = vmax.f32 %v1663, %v1711
          %v1728 = vsub.f32 %v1648, %v1712
          %v1729 = vsub.f32 %v1649, %v1713
          %v1730 = vsub.f32 %v1650, %v1714
          %v1731 = vsub.f32 %v1651, %v1715
          %v1732 = vsub.f32 %v1652, %v1716
          %v1733 = vsub.f32 %v1653, %v1717
          %v1734 = vsub.f32 %v1654, %v1718
          %v1735 = vsub.f32 %v1655, %v1719
          %v1736 = vsub.f32 %v1656, %v1720
          %v1737 = vsub.f32 %v1657, %v1721
          %v1738 = vsub.f32 %v1658, %v1722
          %v1739 = vsub.f32 %v1659, %v1723
          %v1740 = vsub.f32 %v1660, %v1724
          %v1741 = vsub.f32 %v1661, %v1725
          %v1742 = vsub.f32 %v1662, %v1726
          %v1743 = vsub.f32 %v1663, %v1727
          %v1744 = vmul.f32 %v1728, 1.442695
          %v1745 = vpow.pop %v1744
          %v1746 = vmul.f32 %v1729, 1.442695
          %v1747 = vpow.pop %v1746
          %v1748 = vmul.f32 %v1730, 1.442695
          %v1749 = vpow.pop %v1748
          %v1750 = vmul.f32 %v1731, 1.442695
          %v1751 = vpow.pop %v1750
          %v1752 = vmul.f32 %v1732, 1.442695
          %v1753 = vpow.pop %v1752
          %v1754 = vmul.f32 %v1733, 1.442695
          %v1755 = vpow.pop %v1754
          %v1756 = vmul.f32 %v1734, 1.442695
          %v1757 = vpow.pop %v1756
          %v1758 = vmul.f32 %v1735, 1.442695
          %v1759 = vpow.pop %v1758
          %v1760 = vmul.f32 %v1736, 1.442695
          %v1761 = vpow.pop %v1760
          %v1762 = vmul.f32 %v1737, 1.442695
          %v1763 = vpow.pop %v1762
          %v1764 = vmul.f32 %v1738, 1.442695
          %v1765 = vpow.pop %v1764
          %v1766 = vmul.f32 %v1739, 1.442695
          %v1767 = vpow.pop %v1766
          %v1768 = vmul.f32 %v1740, 1.442695
          %v1769 = vpow.pop %v1768
          %v1770 = vmul.f32 %v1741, 1.442695
          %v1771 = vpow.pop %v1770
          %v1772 = vmul.f32 %v1742, 1.442695
          %v1773 = vpow.pop %v1772
          %v1774 = vmul.f32 %v1743, 1.442695
          %v1775 = vpow.pop %v1774
          %1777 = vset.pattern.permute.xlu0 0
          %1778 = vperm.xlu0 %1777, %v1712
          %v1779 = vpop.permute.xlu0 %1778
          %1782 = vset.pattern.permute.xlu0 0
          %1783 = vperm.xlu0 %1782, %v1713
          %v1784 = vpop.permute.xlu0 %1783
          %1787 = vset.pattern.permute.xlu0 0
          %1788 = vperm.xlu0 %1787, %v1714
          %v1789 = vpop.permute.xlu0 %1788
          %1792 = vset.pattern.permute.xlu0 0
          %1793 = vperm.xlu0 %1792, %v1715
          %v1794 = vpop.permute.xlu0 %1793
          %1797 = vset.pattern.permute.xlu0 0
          %1798 = vperm.xlu0 %1797, %v1716
          %v1799 = vpop.permute.xlu0 %1798
          %1802 = vset.pattern.permute.xlu0 0
          %1803 = vperm.xlu0 %1802, %v1717
          %v1804 = vpop.permute.xlu0 %1803
          %1807 = vset.pattern.permute.xlu0 0
          %1808 = vperm.xlu0 %1807, %v1718
          %v1809 = vpop.permute.xlu0 %1808
          %1812 = vset.pattern.permute.xlu0 0
          %1813 = vperm.xlu0 %1812, %v1719
          %v1814 = vpop.permute.xlu0 %1813
          %1817 = vset.pattern.permute.xlu0 0
          %1818 = vperm.xlu0 %1817, %v1720
          %v1819 = vpop.permute.xlu0 %1818
          %1822 = vset.pattern.permute.xlu0 0
          %1823 = vperm.xlu0 %1822, %v1721
          %v1824 = vpop.permute.xlu0 %1823
          %1827 = vset.pattern.permute.xlu0 0
          %1828 = vperm.xlu0 %1827, %v1722
          %v1829 = vpop.permute.xlu0 %1828
          %1832 = vset.pattern.permute.xlu0 0
          %1833 = vperm.xlu0 %1832, %v1723
          %v1834 = vpop.permute.xlu0 %1833
          %1837 = vset.pattern.permute.xlu0 0
          %1838 = vperm.xlu0 %1837, %v1724
          %v1839 = vpop.permute.xlu0 %1838
          %1842 = vset.pattern.permute.xlu0 0
          %1843 = vperm.xlu0 %1842, %v1725
          %v1844 = vpop.permute.xlu0 %1843
          %1847 = vset.pattern.permute.xlu0 0
          %1848 = vperm.xlu0 %1847, %v1726
          %v1849 = vpop.permute.xlu0 %1848
          %1852 = vset.pattern.permute.xlu0 0
          %1853 = vperm.xlu0 %1852, %v1727
          %v1854 = vpop.permute.xlu0 %1853
          %v1856 = vsub.f32 %v1616, %v1779
          %v1857 = vsub.f32 %v1617, %v1779
          %v1858 = vsub.f32 %v1618, %v1784
          %v1859 = vsub.f32 %v1619, %v1784
          %v1860 = vsub.f32 %v1620, %v1789
          %v1861 = vsub.f32 %v1621, %v1789
          %v1862 = vsub.f32 %v1622, %v1794
          %v1863 = vsub.f32 %v1623, %v1794
          %v1864 = vsub.f32 %v1624, %v1799
          %v1865 = vsub.f32 %v1625, %v1799
          %v1866 = vsub.f32 %v1626, %v1804
          %v1867 = vsub.f32 %v1627, %v1804
          %v1868 = vsub.f32 %v1628, %v1809
          %v1869 = vsub.f32 %v1629, %v1809
          %v1870 = vsub.f32 %v1630, %v1814
          %v1871 = vsub.f32 %v1631, %v1814
          %v1872 = vsub.f32 %v1632, %v1819
          %v1873 = vsub.f32 %v1633, %v1819
          %v1874 = vsub.f32 %v1634, %v1824
          %v1875 = vsub.f32 %v1635, %v1824
          %v1876 = vsub.f32 %v1636, %v1829
          %v1877 = vsub.f32 %v1637, %v1829
          %v1878 = vsub.f32 %v1638, %v1834
          %v1879 = vsub.f32 %v1639, %v1834
          %v1880 = vsub.f32 %v1640, %v1839
          %v1881 = vsub.f32 %v1641, %v1839
          %v1882 = vsub.f32 %v1642, %v1844
          %v1883 = vsub.f32 %v1643, %v1844
          %v1884 = vsub.f32 %v1644, %v1849
          %v1885 = vsub.f32 %v1645, %v1849
          %v1886 = vsub.f32 %v1646, %v1854
          %v1887 = vsub.f32 %v1647, %v1854
          %v1888 = vmul.f32 %v1856, 1.442695
          %v1889 = vpow.pop %v1888
          %v1890 = vmul.f32 %v1857, 1.442695
          %v1891 = vpow.pop %v1890
          %v1892 = vmul.f32 %v1858, 1.442695
          %v1893 = vpow.pop %v1892
          %v1894 = vmul.f32 %v1859, 1.442695
          %v1895 = vpow.pop %v1894
          %v1896 = vmul.f32 %v1860, 1.442695
          %v1897 = vpow.pop %v1896
          %v1898 = vmul.f32 %v1861, 1.442695
          %v1899 = vpow.pop %v1898
          %v1900 = vmul.f32 %v1862, 1.442695
          %v1901 = vpow.pop %v1900
          %v1902 = vmul.f32 %v1863, 1.442695
          %v1903 = vpow.pop %v1902
          %v1904 = vmul.f32 %v1864, 1.442695
          %v1905 = vpow.pop %v1904
          %v1906 = vmul.f32 %v1865, 1.442695
          %v1907 = vpow.pop %v1906
          %v1908 = vmul.f32 %v1866, 1.442695
          %v1909 = vpow.pop %v1908
          %v1910 = vmul.f32 %v1867, 1.442695
          %v1911 = vpow.pop %v1910
          %v1912 = vmul.f32 %v1868, 1.442695
          %v1913 = vpow.pop %v1912
          %v1914 = vmul.f32 %v1869, 1.442695
          %v1915 = vpow.pop %v1914
          %v1916 = vmul.f32 %v1870, 1.442695
          %v1917 = vpow.pop %v1916
          %v1918 = vmul.f32 %v1871, 1.442695
          %v1919 = vpow.pop %v1918
          %v1920 = vmul.f32 %v1872, 1.442695
          %v1921 = vpow.pop %v1920
          %v1922 = vmul.f32 %v1873, 1.442695
          %v1923 = vpow.pop %v1922
          %v1924 = vmul.f32 %v1874, 1.442695
          %v1925 = vpow.pop %v1924
          %v1926 = vmul.f32 %v1875, 1.442695
          %v1927 = vpow.pop %v1926
          %v1928 = vmul.f32 %v1876, 1.442695
          %v1929 = vpow.pop %v1928
          %v1930 = vmul.f32 %v1877, 1.442695
          %v1931 = vpow.pop %v1930
          %v1932 = vmul.f32 %v1878, 1.442695
          %v1933 = vpow.pop %v1932
          %v1934 = vmul.f32 %v1879, 1.442695
          %v1935 = vpow.pop %v1934
          %v1936 = vmul.f32 %v1880, 1.442695
          %v1937 = vpow.pop %v1936
          %v1938 = vmul.f32 %v1881, 1.442695
          %v1939 = vpow.pop %v1938
          %v1940 = vmul.f32 %v1882, 1.442695
          %v1941 = vpow.pop %v1940
          %v1942 = vmul.f32 %v1883, 1.442695
          %v1943 = vpow.pop %v1942
          %v1944 = vmul.f32 %v1884, 1.442695
          %v1945 = vpow.pop %v1944
          %v1946 = vmul.f32 %v1885, 1.442695
          %v1947 = vpow.pop %v1946
          %v1948 = vmul.f32 %v1886, 1.442695
          %v1949 = vpow.pop %v1948
          %v1950 = vmul.f32 %v1887, 1.442695
          %v1951 = vpow.pop %v1950
          %v1952 = vld [vmem:[#allocation3] sm:$0xff]
          %v1953 = vld [vmem:[#allocation3 + $0x8] sm:$0xff]
          %v1954 = vld [vmem:[#allocation3 + $0x10] sm:$0xff]
          %v1955 = vld [vmem:[#allocation3 + $0x18] sm:$0xff]
          %v1956 = vld [vmem:[#allocation3 + $0x20] sm:$0xff]
          %v1957 = vld [vmem:[#allocation3 + $0x28] sm:$0xff]
          %v1958 = vld [vmem:[#allocation3 + $0x30] sm:$0xff]
          %v1959 = vld [vmem:[#allocation3 + $0x38] sm:$0xff]
          %v1960 = vld [vmem:[#allocation3 + $0x40] sm:$0xff]
          %v1961 = vld [vmem:[#allocation3 + $0x48] sm:$0xff]
          %v1962 = vld [vmem:[#allocation3 + $0x50] sm:$0xff]
          %v1963 = vld [vmem:[#allocation3 + $0x58] sm:$0xff]
          %v1964 = vld [vmem:[#allocation3 + $0x60] sm:$0xff]
          %v1965 = vld [vmem:[#allocation3 + $0x68] sm:$0xff]
          %v1966 = vld [vmem:[#allocation3 + $0x70] sm:$0xff]
          %v1967 = vld [vmem:[#allocation3 + $0x78] sm:$0xff]
          %v1968 = vmul.f32 %v1745, %v1952
          %v1969 = vmul.f32 %v1747, %v1953
          %v1970 = vmul.f32 %v1749, %v1954
          %v1971 = vmul.f32 %v1751, %v1955
          %v1972 = vmul.f32 %v1753, %v1956
          %v1973 = vmul.f32 %v1755, %v1957
          %v1974 = vmul.f32 %v1757, %v1958
          %v1975 = vmul.f32 %v1759, %v1959
          %v1976 = vmul.f32 %v1761, %v1960
          %v1977 = vmul.f32 %v1763, %v1961
          %v1978 = vmul.f32 %v1765, %v1962
          %v1979 = vmul.f32 %v1767, %v1963
          %v1980 = vmul.f32 %v1769, %v1964
          %v1981 = vmul.f32 %v1771, %v1965
          %v1982 = vmul.f32 %v1773, %v1966
          %v1983 = vmul.f32 %v1775, %v1967
          %v1984 = vadd.f32 %v1889, %v1891
          %1985 = vadd.xlane.f32.xlu0 %v1984
          %v1986 = vpop.xlane.xlu0 %1985
          %v1987 = vadd.f32 %v1893, %v1895
          %1988 = vadd.xlane.f32.xlu0 %v1987
          %v1989 = vpop.xlane.xlu0 %1988
          %v1990 = vadd.f32 %v1897, %v1899
          %1991 = vadd.xlane.f32.xlu0 %v1990
          %v1992 = vpop.xlane.xlu0 %1991
          %v1993 = vadd.f32 %v1901, %v1903
          %1994 = vadd.xlane.f32.xlu0 %v1993
          %v1995 = vpop.xlane.xlu0 %1994
          %v1996 = vadd.f32 %v1905, %v1907
          %1997 = vadd.xlane.f32.xlu0 %v1996
          %v1998 = vpop.xlane.xlu0 %1997
          %v1999 = vadd.f32 %v1909, %v1911
          %2000 = vadd.xlane.f32.xlu0 %v1999
          %v2001 = vpop.xlane.xlu0 %2000
          %v2002 = vadd.f32 %v1913, %v1915
          %2003 = vadd.xlane.f32.xlu0 %v2002
          %v2004 = vpop.xlane.xlu0 %2003
          %v2005 = vadd.f32 %v1917, %v1919
          %2006 = vadd.xlane.f32.xlu0 %v2005
          %v2007 = vpop.xlane.xlu0 %2006
          %v2008 = vadd.f32 %v1921, %v1923
          %2009 = vadd.xlane.f32.xlu0 %v2008
          %v2010 = vpop.xlane.xlu0 %2009
          %v2011 = vadd.f32 %v1925, %v1927
          %2012 = vadd.xlane.f32.xlu0 %v2011
          %v2013 = vpop.xlane.xlu0 %2012
          %v2014 = vadd.f32 %v1929, %v1931
          %2015 = vadd.xlane.f32.xlu0 %v2014
          %v2016 = vpop.xlane.xlu0 %2015
          %v2017 = vadd.f32 %v1933, %v1935
          %2018 = vadd.xlane.f32.xlu0 %v2017
          %v2019 = vpop.xlane.xlu0 %2018
          %v2020 = vadd.f32 %v1937, %v1939
          %2021 = vadd.xlane.f32.xlu0 %v2020
          %v2022 = vpop.xlane.xlu0 %2021
          %v2023 = vadd.f32 %v1941, %v1943
          %2024 = vadd.xlane.f32.xlu0 %v2023
          %v2025 = vpop.xlane.xlu0 %2024
          %v2026 = vadd.f32 %v1945, %v1947
          %2027 = vadd.xlane.f32.xlu0 %v2026
          %v2028 = vpop.xlane.xlu0 %2027
          %v2029 = vadd.f32 %v1949, %v1951
          %2030 = vadd.xlane.f32.xlu0 %v2029
          %v2031 = vpop.xlane.xlu0 %2030
          %v2032 = vadd.f32 %v1968, %v1986
          %v2033 = vadd.f32 %v1969, %v1989
          %v2034 = vadd.f32 %v1970, %v1992
          %v2035 = vadd.f32 %v1971, %v1995
          %v2036 = vadd.f32 %v1972, %v1998
          %v2037 = vadd.f32 %v1973, %v2001
          %v2038 = vadd.f32 %v1974, %v2004
          %v2039 = vadd.f32 %v1975, %v2007
          %v2040 = vadd.f32 %v1976, %v2010
          %v2041 = vadd.f32 %v1977, %v2013
          %v2042 = vadd.f32 %v1978, %v2016
          %v2043 = vadd.f32 %v1979, %v2019
          %v2044 = vadd.f32 %v1980, %v2022
          %v2045 = vadd.f32 %v1981, %v2025
          %v2046 = vadd.f32 %v1982, %v2028
          %v2047 = vadd.f32 %v1983, %v2031
          %vm2048 = vcmask 7168
          %2049 = vst.msk [vmem:[#allocation3] sm:$0xff] %vm2048, %v2032
          %2050 = vst.msk [vmem:[#allocation3 + $0x8] sm:$0xff] %vm2048, %v2033
          %2051 = vst.msk [vmem:[#allocation3 + $0x10] sm:$0xff] %vm2048, %v2034
          %2052 = vst.msk [vmem:[#allocation3 + $0x18] sm:$0xff] %vm2048, %v2035
          %2053 = vst.msk [vmem:[#allocation3 + $0x20] sm:$0xff] %vm2048, %v2036
          %2054 = vst.msk [vmem:[#allocation3 + $0x28] sm:$0xff] %vm2048, %v2037
          %2055 = vst.msk [vmem:[#allocation3 + $0x30] sm:$0xff] %vm2048, %v2038
          %2056 = vst.msk [vmem:[#allocation3 + $0x38] sm:$0xff] %vm2048, %v2039
          %2057 = vst.msk [vmem:[#allocation3 + $0x40] sm:$0xff] %vm2048, %v2040
          %2058 = vst.msk [vmem:[#allocation3 + $0x48] sm:$0xff] %vm2048, %v2041
          %2059 = vst.msk [vmem:[#allocation3 + $0x50] sm:$0xff] %vm2048, %v2042
          %2060 = vst.msk [vmem:[#allocation3 + $0x58] sm:$0xff] %vm2048, %v2043
          %2061 = vst.msk [vmem:[#allocation3 + $0x60] sm:$0xff] %vm2048, %v2044
          %2062 = vst.msk [vmem:[#allocation3 + $0x68] sm:$0xff] %vm2048, %v2045
          %2063 = vst.msk [vmem:[#allocation3 + $0x70] sm:$0xff] %vm2048, %v2046
          %2064 = vst.msk [vmem:[#allocation3 + $0x78] sm:$0xff] %vm2048, %v2047
          %v2065 = vld [vmem:[#allocation4] sm:$0xff]
          %v2066 = vld [vmem:[#allocation4 + $0x8] sm:$0xff]
          %v2067 = vld [vmem:[#allocation4 + $0x10] sm:$0xff]
          %v2068 = vld [vmem:[#allocation4 + $0x18] sm:$0xff]
          %v2069 = vld [vmem:[#allocation4 + $0x20] sm:$0xff]
          %v2070 = vld [vmem:[#allocation4 + $0x28] sm:$0xff]
          %v2071 = vld [vmem:[#allocation4 + $0x30] sm:$0xff]
          %v2072 = vld [vmem:[#allocation4 + $0x38] sm:$0xff]
          %v2073 = vld [vmem:[#allocation4 + $0x40] sm:$0xff]
          %v2074 = vld [vmem:[#allocation4 + $0x48] sm:$0xff]
          %v2075 = vld [vmem:[#allocation4 + $0x50] sm:$0xff]
          %v2076 = vld [vmem:[#allocation4 + $0x58] sm:$0xff]
          %v2077 = vld [vmem:[#allocation4 + $0x60] sm:$0xff]
          %v2078 = vld [vmem:[#allocation4 + $0x68] sm:$0xff]
          %v2079 = vld [vmem:[#allocation4 + $0x70] sm:$0xff]
          %v2080 = vld [vmem:[#allocation4 + $0x78] sm:$0xff]
          %2082 = vset.pattern.permute.xlu0 0
          %2083 = vperm.xlu0 %2082, %v1745
          %v2084 = vpop.permute.xlu0 %2083
          %2087 = vset.pattern.permute.xlu0 0
          %2088 = vperm.xlu0 %2087, %v1747
          %v2089 = vpop.permute.xlu0 %2088
          %2092 = vset.pattern.permute.xlu0 0
          %2093 = vperm.xlu0 %2092, %v1749
          %v2094 = vpop.permute.xlu0 %2093
          %2097 = vset.pattern.permute.xlu0 0
          %2098 = vperm.xlu0 %2097, %v1751
          %v2099 = vpop.permute.xlu0 %2098
          %2102 = vset.pattern.permute.xlu0 0
          %2103 = vperm.xlu0 %2102, %v1753
          %v2104 = vpop.permute.xlu0 %2103
          %2107 = vset.pattern.permute.xlu0 0
          %2108 = vperm.xlu0 %2107, %v1755
          %v2109 = vpop.permute.xlu0 %2108
          %2112 = vset.pattern.permute.xlu0 0
          %2113 = vperm.xlu0 %2112, %v1757
          %v2114 = vpop.permute.xlu0 %2113
          %2117 = vset.pattern.permute.xlu0 0
          %2118 = vperm.xlu0 %2117, %v1759
          %v2119 = vpop.permute.xlu0 %2118
          %2122 = vset.pattern.permute.xlu0 0
          %2123 = vperm.xlu0 %2122, %v1761
          %v2124 = vpop.permute.xlu0 %2123
          %2127 = vset.pattern.permute.xlu0 0
          %2128 = vperm.xlu0 %2127, %v1763
          %v2129 = vpop.permute.xlu0 %2128
          %2132 = vset.pattern.permute.xlu0 0
          %2133 = vperm.xlu0 %2132, %v1765
          %v2134 = vpop.permute.xlu0 %2133
          %2137 = vset.pattern.permute.xlu0 0
          %2138 = vperm.xlu0 %2137, %v1767
          %v2139 = vpop.permute.xlu0 %2138
          %2142 = vset.pattern.permute.xlu0 0
          %2143 = vperm.xlu0 %2142, %v1769
          %v2144 = vpop.permute.xlu0 %2143
          %2147 = vset.pattern.permute.xlu0 0
          %2148 = vperm.xlu0 %2147, %v1771
          %v2149 = vpop.permute.xlu0 %2148
          %2152 = vset.pattern.permute.xlu0 0
          %2153 = vperm.xlu0 %2152, %v1773
          %v2154 = vpop.permute.xlu0 %2153
          %2157 = vset.pattern.permute.xlu0 0
          %2158 = vperm.xlu0 %2157, %v1775
          %v2159 = vpop.permute.xlu0 %2158
          %v2161 = vmul.f32 %v2084, %v2065
          %v2162 = vmul.f32 %v2089, %v2066
          %v2163 = vmul.f32 %v2094, %v2067
          %v2164 = vmul.f32 %v2099, %v2068
          %v2165 = vmul.f32 %v2104, %v2069
          %v2166 = vmul.f32 %v2109, %v2070
          %v2167 = vmul.f32 %v2114, %v2071
          %v2168 = vmul.f32 %v2119, %v2072
          %v2169 = vmul.f32 %v2124, %v2073
          %v2170 = vmul.f32 %v2129, %v2074
          %v2171 = vmul.f32 %v2134, %v2075
          %v2172 = vmul.f32 %v2139, %v2076
          %v2173 = vmul.f32 %v2144, %v2077
          %v2174 = vmul.f32 %v2149, %v2078
          %v2175 = vmul.f32 %v2154, %v2079
          %v2176 = vmul.f32 %v2159, %v2080
          %v2177 = vld [vmem:[%s290] sm:$0xff]
          %v2178 = vld [vmem:[%s290 + $0x8] sm:$0xff]
          %v2179 = vld [vmem:[%s290 + $0x10] sm:$0xff]
          %v2180 = vld [vmem:[%s290 + $0x18] sm:$0xff]
          %v2181 = vld [vmem:[%s290 + $0x20] sm:$0xff]
          %v2182 = vld [vmem:[%s290 + $0x28] sm:$0xff]
          %v2183 = vld [vmem:[%s290 + $0x30] sm:$0xff]
          %v2184 = vld [vmem:[%s290 + $0x38] sm:$0xff]
          %v2185 = vld [vmem:[%s290 + $0x40] sm:$0xff]
          %v2186 = vld [vmem:[%s290 + $0x48] sm:$0xff]
          %v2187 = vld [vmem:[%s290 + $0x50] sm:$0xff]
          %v2188 = vld [vmem:[%s290 + $0x58] sm:$0xff]
          %v2189 = vld [vmem:[%s290 + $0x60] sm:$0xff]
          %v2190 = vld [vmem:[%s290 + $0x68] sm:$0xff]
          %v2191 = vld [vmem:[%s290 + $0x70] sm:$0xff]
          %v2192 = vld [vmem:[%s290 + $0x78] sm:$0xff]
          %v2193 = vld [vmem:[%s290 + $0x80] sm:$0xff]
          %v2194 = vld [vmem:[%s290 + $0x88] sm:$0xff]
          %v2195 = vld [vmem:[%s290 + $0x90] sm:$0xff]
          %v2196 = vld [vmem:[%s290 + $0x98] sm:$0xff]
          %v2197 = vld [vmem:[%s290 + $0xa0] sm:$0xff]
          %v2198 = vld [vmem:[%s290 + $0xa8] sm:$0xff]
          %v2199 = vld [vmem:[%s290 + $0xb0] sm:$0xff]
          %v2200 = vld [vmem:[%s290 + $0xb8] sm:$0xff]
          %v2201 = vld [vmem:[%s290 + $0xc0] sm:$0xff]
          %v2202 = vld [vmem:[%s290 + $0xc8] sm:$0xff]
          %v2203 = vld [vmem:[%s290 + $0xd0] sm:$0xff]
          %v2204 = vld [vmem:[%s290 + $0xd8] sm:$0xff]
          %v2205 = vld [vmem:[%s290 + $0xe0] sm:$0xff]
          %v2206 = vld [vmem:[%s290 + $0xe8] sm:$0xff]
          %v2207 = vld [vmem:[%s290 + $0xf0] sm:$0xff]
          %v2208 = vld [vmem:[%s290 + $0xf8] sm:$0xff]
          %2209 = vmatpush.msra.mxu0 %v2192
          %2210 = vmatpush.msra.mxu0 %v2191
          %2211 = vmatpush.msra.mxu0 %v2190
          %2212 = vmatpush.msra.mxu0 %v2189
          %2213 = vmatpush.msra.mxu0 %v2188
          %2214 = vmatpush.msra.mxu0 %v2187
          %2215 = vmatpush.msra.mxu0 %v2186
          %2216 = vmatpush.msra.mxu0 %v2185
          %2217 = vmatpush.msra.mxu0 %v2184
          %2218 = vmatpush.msra.mxu0 %v2183
          %2219 = vmatpush.msra.mxu0 %v2182
          %2220 = vmatpush.msra.mxu0 %v2181
          %2221 = vmatpush.msra.mxu0 %v2180
          %2222 = vmatpush.msra.mxu0 %v2179
          %2223 = vmatpush.msra.mxu0 %v2178
          %2224 = vmatpush.msra.mxu0 %v2177
          %2225 = vmatmul.f32.gmra.mxu0 %v1889
          %v2226 = vpop.f32.mrf.mxu0
          %v2227 = vadd.f32 0.0, %v2226
          %2228 = vmatmul.f32.gmra.mxu0 %v1893
          %v2229 = vpop.f32.mrf.mxu0
          %v2230 = vadd.f32 0.0, %v2229
          %2231 = vmatmul.f32.gmra.mxu0 %v1897
          %v2232 = vpop.f32.mrf.mxu0
          %v2233 = vadd.f32 0.0, %v2232
          %2234 = vmatmul.f32.gmra.mxu0 %v1901
          %v2235 = vpop.f32.mrf.mxu0
          %v2236 = vadd.f32 0.0, %v2235
          %2237 = vmatmul.f32.gmra.mxu0 %v1905
          %v2238 = vpop.f32.mrf.mxu0
          %v2239 = vadd.f32 0.0, %v2238
          %2240 = vmatmul.f32.gmra.mxu0 %v1909
          %v2241 = vpop.f32.mrf.mxu0
          %v2242 = vadd.f32 0.0, %v2241
          %2243 = vmatmul.f32.gmra.mxu0 %v1913
          %v2244 = vpop.f32.mrf.mxu0
          %v2245 = vadd.f32 0.0, %v2244
          %2246 = vmatmul.f32.gmra.mxu0 %v1917
          %v2247 = vpop.f32.mrf.mxu0
          %v2248 = vadd.f32 0.0, %v2247
          %2249 = vmatmul.f32.gmra.mxu0 %v1921
          %v2250 = vpop.f32.mrf.mxu0
          %v2251 = vadd.f32 0.0, %v2250
          %2252 = vmatmul.f32.gmra.mxu0 %v1925
          %v2253 = vpop.f32.mrf.mxu0
          %v2254 = vadd.f32 0.0, %v2253
          %2255 = vmatmul.f32.gmra.mxu0 %v1929
          %v2256 = vpop.f32.mrf.mxu0
          %v2257 = vadd.f32 0.0, %v2256
          %2258 = vmatmul.f32.gmra.mxu0 %v1933
          %v2259 = vpop.f32.mrf.mxu0
          %v2260 = vadd.f32 0.0, %v2259
          %2261 = vmatmul.f32.gmra.mxu0 %v1937
          %v2262 = vpop.f32.mrf.mxu0
          %v2263 = vadd.f32 0.0, %v2262
          %2264 = vmatmul.f32.gmra.mxu0 %v1941
          %v2265 = vpop.f32.mrf.mxu0
          %v2266 = vadd.f32 0.0, %v2265
          %2267 = vmatmul.f32.gmra.mxu0 %v1945
          %v2268 = vpop.f32.mrf.mxu0
          %v2269 = vadd.f32 0.0, %v2268
          %2270 = vmatmul.f32.gmra.mxu0 %v1949
          %v2271 = vpop.f32.mrf.mxu0
          %v2272 = vadd.f32 0.0, %v2271
          %2273 = vdwg.mxu0
          %2274 = vmatpush.msra.mxu0 %v2208
          %2275 = vmatpush.msra.mxu0 %v2207
          %2276 = vmatpush.msra.mxu0 %v2206
          %2277 = vmatpush.msra.mxu0 %v2205
          %2278 = vmatpush.msra.mxu0 %v2204
          %2279 = vmatpush.msra.mxu0 %v2203
          %2280 = vmatpush.msra.mxu0 %v2202
          %2281 = vmatpush.msra.mxu0 %v2201
          %2282 = vmatpush.msra.mxu0 %v2200
          %2283 = vmatpush.msra.mxu0 %v2199
          %2284 = vmatpush.msra.mxu0 %v2198
          %2285 = vmatpush.msra.mxu0 %v2197
          %2286 = vmatpush.msra.mxu0 %v2196
          %2287 = vmatpush.msra.mxu0 %v2195
          %2288 = vmatpush.msra.mxu0 %v2194
          %2289 = vmatpush.msra.mxu0 %v2193
          %2290 = vmatmul.f32.gmra.mxu0 %v1891
          %v2291 = vpop.f32.mrf.mxu0
          %v2292 = vadd.f32 %v2227, %v2291
          %2293 = vmatmul.f32.gmra.mxu0 %v1895
          %v2294 = vpop.f32.mrf.mxu0
          %v2295 = vadd.f32 %v2230, %v2294
          %2296 = vmatmul.f32.gmra.mxu0 %v1899
          %v2297 = vpop.f32.mrf.mxu0
          %v2298 = vadd.f32 %v2233, %v2297
          %2299 = vmatmul.f32.gmra.mxu0 %v1903
          %v2300 = vpop.f32.mrf.mxu0
          %v2301 = vadd.f32 %v2236, %v2300
          %2302 = vmatmul.f32.gmra.mxu0 %v1907
          %v2303 = vpop.f32.mrf.mxu0
          %v2304 = vadd.f32 %v2239, %v2303
          %2305 = vmatmul.f32.gmra.mxu0 %v1911
          %v2306 = vpop.f32.mrf.mxu0
          %v2307 = vadd.f32 %v2242, %v2306
          %2308 = vmatmul.f32.gmra.mxu0 %v1915
          %v2309 = vpop.f32.mrf.mxu0
          %v2310 = vadd.f32 %v2245, %v2309
          %2311 = vmatmul.f32.gmra.mxu0 %v1919
          %v2312 = vpop.f32.mrf.mxu0
          %v2313 = vadd.f32 %v2248, %v2312
          %2314 = vmatmul.f32.gmra.mxu0 %v1923
          %v2315 = vpop.f32.mrf.mxu0
          %v2316 = vadd.f32 %v2251, %v2315
          %2317 = vmatmul.f32.gmra.mxu0 %v1927
          %v2318 = vpop.f32.mrf.mxu0
          %v2319 = vadd.f32 %v2254, %v2318
          %2320 = vmatmul.f32.gmra.mxu0 %v1931
          %v2321 = vpop.f32.mrf.mxu0
          %v2322 = vadd.f32 %v2257, %v2321
          %2323 = vmatmul.f32.gmra.mxu0 %v1935
          %v2324 = vpop.f32.mrf.mxu0
          %v2325 = vadd.f32 %v2260, %v2324
          %2326 = vmatmul.f32.gmra.mxu0 %v1939
          %v2327 = vpop.f32.mrf.mxu0
          %v2328 = vadd.f32 %v2263, %v2327
          %2329 = vmatmul.f32.gmra.mxu0 %v1943
          %v2330 = vpop.f32.mrf.mxu0
          %v2331 = vadd.f32 %v2266, %v2330
          %2332 = vmatmul.f32.gmra.mxu0 %v1947
          %v2333 = vpop.f32.mrf.mxu0
          %v2334 = vadd.f32 %v2269, %v2333
          %2335 = vmatmul.f32.gmra.mxu0 %v1951
          %v2336 = vpop.f32.mrf.mxu0
          %v2337 = vadd.f32 %v2272, %v2336
          %2338 = vdwg.mxu0
          %v2339 = vadd.f32 %v2161, %v2292
          %v2340 = vadd.f32 %v2162, %v2295
          %v2341 = vadd.f32 %v2163, %v2298
          %v2342 = vadd.f32 %v2164, %v2301
          %v2343 = vadd.f32 %v2165, %v2304
          %v2344 = vadd.f32 %v2166, %v2307
          %v2345 = vadd.f32 %v2167, %v2310
          %v2346 = vadd.f32 %v2168, %v2313
          %v2347 = vadd.f32 %v2169, %v2316
          %v2348 = vadd.f32 %v2170, %v2319
          %v2349 = vadd.f32 %v2171, %v2322
          %v2350 = vadd.f32 %v2172, %v2325
          %v2351 = vadd.f32 %v2173, %v2328
          %v2352 = vadd.f32 %v2174, %v2331
          %v2353 = vadd.f32 %v2175, %v2334
          %v2354 = vadd.f32 %v2176, %v2337
          %2355 = vst [vmem:[#allocation4] sm:$0xff] %v2339
          %2356 = vst [vmem:[#allocation4 + $0x8] sm:$0xff] %v2340
          %2357 = vst [vmem:[#allocation4 + $0x10] sm:$0xff] %v2341
          %2358 = vst [vmem:[#allocation4 + $0x18] sm:$0xff] %v2342
          %2359 = vst [vmem:[#allocation4 + $0x20] sm:$0xff] %v2343
          %2360 = vst [vmem:[#allocation4 + $0x28] sm:$0xff] %v2344
          %2361 = vst [vmem:[#allocation4 + $0x30] sm:$0xff] %v2345
          %2362 = vst [vmem:[#allocation4 + $0x38] sm:$0xff] %v2346
          %2363 = vst [vmem:[#allocation4 + $0x40] sm:$0xff] %v2347
          %2364 = vst [vmem:[#allocation4 + $0x48] sm:$0xff] %v2348
          %2365 = vst [vmem:[#allocation4 + $0x50] sm:$0xff] %v2349
          %2366 = vst [vmem:[#allocation4 + $0x58] sm:$0xff] %v2350
          %2367 = vst [vmem:[#allocation4 + $0x60] sm:$0xff] %v2351
          %2368 = vst [vmem:[#allocation4 + $0x68] sm:$0xff] %v2352
          %2369 = vst [vmem:[#allocation4 + $0x70] sm:$0xff] %v2353
          %2370 = vst [vmem:[#allocation4 + $0x78] sm:$0xff] %v2354
          %2371 = vst.msk [vmem:[#allocation2] sm:$0xff] %vm2048, %v1712
          %2372 = vst.msk [vmem:[#allocation2 + $0x8] sm:$0xff] %vm2048, %v1713
          %2373 = vst.msk [vmem:[#allocation2 + $0x10] sm:$0xff] %vm2048, %v1714
          %2374 = vst.msk [vmem:[#allocation2 + $0x18] sm:$0xff] %vm2048, %v1715
          %2375 = vst.msk [vmem:[#allocation2 + $0x20] sm:$0xff] %vm2048, %v1716
          %2376 = vst.msk [vmem:[#allocation2 + $0x28] sm:$0xff] %vm2048, %v1717
          %2377 = vst.msk [vmem:[#allocation2 + $0x30] sm:$0xff] %vm2048, %v1718
          %2378 = vst.msk [vmem:[#allocation2 + $0x38] sm:$0xff] %vm2048, %v1719
          %2379 = vst.msk [vmem:[#allocation2 + $0x40] sm:$0xff] %vm2048, %v1720
          %2380 = vst.msk [vmem:[#allocation2 + $0x48] sm:$0xff] %vm2048, %v1721
          %2381 = vst.msk [vmem:[#allocation2 + $0x50] sm:$0xff] %vm2048, %v1722
          %2382 = vst.msk [vmem:[#allocation2 + $0x58] sm:$0xff] %vm2048, %v1723
          %2383 = vst.msk [vmem:[#allocation2 + $0x60] sm:$0xff] %vm2048, %v1724
          %2384 = vst.msk [vmem:[#allocation2 + $0x68] sm:$0xff] %vm2048, %v1725
          %2385 = vst.msk [vmem:[#allocation2 + $0x70] sm:$0xff] %vm2048, %v1726
          %2386 = vst.msk [vmem:[#allocation2 + $0x78] sm:$0xff] %vm2048, %v1727
        $region56: #{tpu_custom_call.1} parent=31 // pred_fallthru
          _
        // Predicated region
        $region57: #{tpu_custom_call.1} parent=31 // pred_check
          %p2387 = pneg %p339
        $region58: #{tpu_custom_call.1} parent=31 // pred_check_branch
          %2389 = sbr.rel (%p2387) target = $region60
        $region59: #{tpu_custom_call.1} parent=31 // pred_region
          %v2390 = vld [vmem:[#allocation4] sm:$0xff]
          %v2391 = vld [vmem:[#allocation4 + $0x8] sm:$0xff]
          %v2392 = vld [vmem:[#allocation4 + $0x10] sm:$0xff]
          %v2393 = vld [vmem:[#allocation4 + $0x18] sm:$0xff]
          %v2394 = vld [vmem:[#allocation4 + $0x20] sm:$0xff]
          %v2395 = vld [vmem:[#allocation4 + $0x28] sm:$0xff]
          %v2396 = vld [vmem:[#allocation4 + $0x30] sm:$0xff]
          %v2397 = vld [vmem:[#allocation4 + $0x38] sm:$0xff]
          %v2398 = vld [vmem:[#allocation4 + $0x40] sm:$0xff]
          %v2399 = vld [vmem:[#allocation4 + $0x48] sm:$0xff]
          %v2400 = vld [vmem:[#allocation4 + $0x50] sm:$0xff]
          %v2401 = vld [vmem:[#allocation4 + $0x58] sm:$0xff]
          %v2402 = vld [vmem:[#allocation4 + $0x60] sm:$0xff]
          %v2403 = vld [vmem:[#allocation4 + $0x68] sm:$0xff]
          %v2404 = vld [vmem:[#allocation4 + $0x70] sm:$0xff]
          %v2405 = vld [vmem:[#allocation4 + $0x78] sm:$0xff]
          %v2406 = vld [vmem:[#allocation3] sm:$0xff]
          %v2407 = vld [vmem:[#allocation3 + $0x8] sm:$0xff]
          %v2408 = vld [vmem:[#allocation3 + $0x10] sm:$0xff]
          %v2409 = vld [vmem:[#allocation3 + $0x18] sm:$0xff]
          %v2410 = vld [vmem:[#allocation3 + $0x20] sm:$0xff]
          %v2411 = vld [vmem:[#allocation3 + $0x28] sm:$0xff]
          %v2412 = vld [vmem:[#allocation3 + $0x30] sm:$0xff]
          %v2413 = vld [vmem:[#allocation3 + $0x38] sm:$0xff]
          %v2414 = vld [vmem:[#allocation3 + $0x40] sm:$0xff]
          %v2415 = vld [vmem:[#allocation3 + $0x48] sm:$0xff]
          %v2416 = vld [vmem:[#allocation3 + $0x50] sm:$0xff]
          %v2417 = vld [vmem:[#allocation3 + $0x58] sm:$0xff]
          %v2418 = vld [vmem:[#allocation3 + $0x60] sm:$0xff]
          %v2419 = vld [vmem:[#allocation3 + $0x68] sm:$0xff]
          %v2420 = vld [vmem:[#allocation3 + $0x70] sm:$0xff]
          %v2421 = vld [vmem:[#allocation3 + $0x78] sm:$0xff]
          %2423 = vset.pattern.permute.xlu0 0
          %2424 = vperm.xlu0 %2423, %v2406
          %v2425 = vpop.permute.xlu0 %2424
          %2428 = vset.pattern.permute.xlu0 0
          %2429 = vperm.xlu0 %2428, %v2407
          %v2430 = vpop.permute.xlu0 %2429
          %2433 = vset.pattern.permute.xlu0 0
          %2434 = vperm.xlu0 %2433, %v2408
          %v2435 = vpop.permute.xlu0 %2434
          %2438 = vset.pattern.permute.xlu0 0
          %2439 = vperm.xlu0 %2438, %v2409
          %v2440 = vpop.permute.xlu0 %2439
          %2443 = vset.pattern.permute.xlu0 0
          %2444 = vperm.xlu0 %2443, %v2410
          %v2445 = vpop.permute.xlu0 %2444
          %2448 = vset.pattern.permute.xlu0 0
          %2449 = vperm.xlu0 %2448, %v2411
          %v2450 = vpop.permute.xlu0 %2449
          %2453 = vset.pattern.permute.xlu0 0
          %2454 = vperm.xlu0 %2453, %v2412
          %v2455 = vpop.permute.xlu0 %2454
          %2458 = vset.pattern.permute.xlu0 0
          %2459 = vperm.xlu0 %2458, %v2413
          %v2460 = vpop.permute.xlu0 %2459
          %2463 = vset.pattern.permute.xlu0 0
          %2464 = vperm.xlu0 %2463, %v2414
          %v2465 = vpop.permute.xlu0 %2464
          %2468 = vset.pattern.permute.xlu0 0
          %2469 = vperm.xlu0 %2468, %v2415
          %v2470 = vpop.permute.xlu0 %2469
          %2473 = vset.pattern.permute.xlu0 0
          %2474 = vperm.xlu0 %2473, %v2416
          %v2475 = vpop.permute.xlu0 %2474
          %2478 = vset.pattern.permute.xlu0 0
          %2479 = vperm.xlu0 %2478, %v2417
          %v2480 = vpop.permute.xlu0 %2479
          %2483 = vset.pattern.permute.xlu0 0
          %2484 = vperm.xlu0 %2483, %v2418
          %v2485 = vpop.permute.xlu0 %2484
          %2488 = vset.pattern.permute.xlu0 0
          %2489 = vperm.xlu0 %2488, %v2419
          %v2490 = vpop.permute.xlu0 %2489
          %2493 = vset.pattern.permute.xlu0 0
          %2494 = vperm.xlu0 %2493, %v2420
          %v2495 = vpop.permute.xlu0 %2494
          %2498 = vset.pattern.permute.xlu0 0
          %2499 = vperm.xlu0 %2498, %v2421
          %v2500 = vpop.permute.xlu0 %2499
          %v2502 = vrcp.pop %v2425
          %v2503 = vmul.f32 %v2425, %v2502
          %v2504 = vsub.f32 1.0, %v2503
          %v2505 = vmul.f32 %v2502, %v2504
          %v2506 = vadd.f32 %v2502, %v2505
          %vm2507 = vweird.f32 %v2425
          %vm2508 = vweird.f32 %v2502
          %vm2509 = vmor %vm2507, %vm2508
          %v2510 = vsel %vm2509, %v2502, %v2506
          %v2511 = vand.u32 2147483647, %v2425
          %vm2512 = vcmp.eq.f32.partialorder %v2511, 8.507059e+37
          %v2513 = vand.u32 %v2425, 2147483648
          %v2514 = vor.u32 1.1754944e-38, %v2513
          %v2515 = vsel %vm2512, %v2514, %v2510
          %v2516 = vmul.f32 %v2390, %v2515
          %v2517 = vrcp.pop %v2430
          %v2518 = vmul.f32 %v2430, %v2517
          %v2519 = vsub.f32 1.0, %v2518
          %v2520 = vmul.f32 %v2517, %v2519
          %v2521 = vadd.f32 %v2517, %v2520
          %vm2522 = vweird.f32 %v2430
          %vm2523 = vweird.f32 %v2517
          %vm2524 = vmor %vm2522, %vm2523
          %v2525 = vsel %vm2524, %v2517, %v2521
          %v2526 = vand.u32 2147483647, %v2430
          %vm2527 = vcmp.eq.f32.partialorder %v2526, 8.507059e+37
          %v2528 = vand.u32 %v2430, 2147483648
          %v2529 = vor.u32 1.1754944e-38, %v2528
          %v2530 = vsel %vm2527, %v2529, %v2525
          %v2531 = vmul.f32 %v2391, %v2530
          %v2532 = vrcp.pop %v2435
          %v2533 = vmul.f32 %v2435, %v2532
          %v2534 = vsub.f32 1.0, %v2533
          %v2535 = vmul.f32 %v2532, %v2534
          %v2536 = vadd.f32 %v2532, %v2535
          %vm2537 = vweird.f32 %v2435
          %vm2538 = vweird.f32 %v2532
          %vm2539 = vmor %vm2537, %vm2538
          %v2540 = vsel %vm2539, %v2532, %v2536
          %v2541 = vand.u32 2147483647, %v2435
          %vm2542 = vcmp.eq.f32.partialorder %v2541, 8.507059e+37
          %v2543 = vand.u32 %v2435, 2147483648
          %v2544 = vor.u32 1.1754944e-38, %v2543
          %v2545 = vsel %vm2542, %v2544, %v2540
          %v2546 = vmul.f32 %v2392, %v2545
          %v2547 = vrcp.pop %v2440
          %v2548 = vmul.f32 %v2440, %v2547
          %v2549 = vsub.f32 1.0, %v2548
          %v2550 = vmul.f32 %v2547, %v2549
          %v2551 = vadd.f32 %v2547, %v2550
          %vm2552 = vweird.f32 %v2440
          %vm2553 = vweird.f32 %v2547
          %vm2554 = vmor %vm2552, %vm2553
          %v2555 = vsel %vm2554, %v2547, %v2551
          %v2556 = vand.u32 2147483647, %v2440
          %vm2557 = vcmp.eq.f32.partialorder %v2556, 8.507059e+37
          %v2558 = vand.u32 %v2440, 2147483648
          %v2559 = vor.u32 1.1754944e-38, %v2558
          %v2560 = vsel %vm2557, %v2559, %v2555
          %v2561 = vmul.f32 %v2393, %v2560
          %v2562 = vrcp.pop %v2445
          %v2563 = vmul.f32 %v2445, %v2562
          %v2564 = vsub.f32 1.0, %v2563
          %v2565 = vmul.f32 %v2562, %v2564
          %v2566 = vadd.f32 %v2562, %v2565
          %vm2567 = vweird.f32 %v2445
          %vm2568 = vweird.f32 %v2562
          %vm2569 = vmor %vm2567, %vm2568
          %v2570 = vsel %vm2569, %v2562, %v2566
          %v2571 = vand.u32 2147483647, %v2445
          %vm2572 = vcmp.eq.f32.partialorder %v2571, 8.507059e+37
          %v2573 = vand.u32 %v2445, 2147483648
          %v2574 = vor.u32 1.1754944e-38, %v2573
          %v2575 = vsel %vm2572, %v2574, %v2570
          %v2576 = vmul.f32 %v2394, %v2575
          %v2577 = vrcp.pop %v2450
          %v2578 = vmul.f32 %v2450, %v2577
          %v2579 = vsub.f32 1.0, %v2578
          %v2580 = vmul.f32 %v2577, %v2579
          %v2581 = vadd.f32 %v2577, %v2580
          %vm2582 = vweird.f32 %v2450
          %vm2583 = vweird.f32 %v2577
          %vm2584 = vmor %vm2582, %vm2583
          %v2585 = vsel %vm2584, %v2577, %v2581
          %v2586 = vand.u32 2147483647, %v2450
          %vm2587 = vcmp.eq.f32.partialorder %v2586, 8.507059e+37
          %v2588 = vand.u32 %v2450, 2147483648
          %v2589 = vor.u32 1.1754944e-38, %v2588
          %v2590 = vsel %vm2587, %v2589, %v2585
          %v2591 = vmul.f32 %v2395, %v2590
          %v2592 = vrcp.pop %v2455
          %v2593 = vmul.f32 %v2455, %v2592
          %v2594 = vsub.f32 1.0, %v2593
          %v2595 = vmul.f32 %v2592, %v2594
          %v2596 = vadd.f32 %v2592, %v2595
          %vm2597 = vweird.f32 %v2455
          %vm2598 = vweird.f32 %v2592
          %vm2599 = vmor %vm2597, %vm2598
          %v2600 = vsel %vm2599, %v2592, %v2596
          %v2601 = vand.u32 2147483647, %v2455
          %vm2602 = vcmp.eq.f32.partialorder %v2601, 8.507059e+37
          %v2603 = vand.u32 %v2455, 2147483648
          %v2604 = vor.u32 1.1754944e-38, %v2603
          %v2605 = vsel %vm2602, %v2604, %v2600
          %v2606 = vmul.f32 %v2396, %v2605
          %v2607 = vrcp.pop %v2460
          %v2608 = vmul.f32 %v2460, %v2607
          %v2609 = vsub.f32 1.0, %v2608
          %v2610 = vmul.f32 %v2607, %v2609
          %v2611 = vadd.f32 %v2607, %v2610
          %vm2612 = vweird.f32 %v2460
          %vm2613 = vweird.f32 %v2607
          %vm2614 = vmor %vm2612, %vm2613
          %v2615 = vsel %vm2614, %v2607, %v2611
          %v2616 = vand.u32 2147483647, %v2460
          %vm2617 = vcmp.eq.f32.partialorder %v2616, 8.507059e+37
          %v2618 = vand.u32 %v2460, 2147483648
          %v2619 = vor.u32 1.1754944e-38, %v2618
          %v2620 = vsel %vm2617, %v2619, %v2615
          %v2621 = vmul.f32 %v2397, %v2620
          %v2622 = vrcp.pop %v2465
          %v2623 = vmul.f32 %v2465, %v2622
          %v2624 = vsub.f32 1.0, %v2623
          %v2625 = vmul.f32 %v2622, %v2624
          %v2626 = vadd.f32 %v2622, %v2625
          %vm2627 = vweird.f32 %v2465
          %vm2628 = vweird.f32 %v2622
          %vm2629 = vmor %vm2627, %vm2628
          %v2630 = vsel %vm2629, %v2622, %v2626
          %v2631 = vand.u32 2147483647, %v2465
          %vm2632 = vcmp.eq.f32.partialorder %v2631, 8.507059e+37
          %v2633 = vand.u32 %v2465, 2147483648
          %v2634 = vor.u32 1.1754944e-38, %v2633
          %v2635 = vsel %vm2632, %v2634, %v2630
          %v2636 = vmul.f32 %v2398, %v2635
          %v2637 = vrcp.pop %v2470
          %v2638 = vmul.f32 %v2470, %v2637
          %v2639 = vsub.f32 1.0, %v2638
          %v2640 = vmul.f32 %v2637, %v2639
          %v2641 = vadd.f32 %v2637, %v2640
          %vm2642 = vweird.f32 %v2470
          %vm2643 = vweird.f32 %v2637
          %vm2644 = vmor %vm2642, %vm2643
          %v2645 = vsel %vm2644, %v2637, %v2641
          %v2646 = vand.u32 2147483647, %v2470
          %vm2647 = vcmp.eq.f32.partialorder %v2646, 8.507059e+37
          %v2648 = vand.u32 %v2470, 2147483648
          %v2649 = vor.u32 1.1754944e-38, %v2648
          %v2650 = vsel %vm2647, %v2649, %v2645
          %v2651 = vmul.f32 %v2399, %v2650
          %v2652 = vrcp.pop %v2475
          %v2653 = vmul.f32 %v2475, %v2652
          %v2654 = vsub.f32 1.0, %v2653
          %v2655 = vmul.f32 %v2652, %v2654
          %v2656 = vadd.f32 %v2652, %v2655
          %vm2657 = vweird.f32 %v2475
          %vm2658 = vweird.f32 %v2652
          %vm2659 = vmor %vm2657, %vm2658
          %v2660 = vsel %vm2659, %v2652, %v2656
          %v2661 = vand.u32 2147483647, %v2475
          %vm2662 = vcmp.eq.f32.partialorder %v2661, 8.507059e+37
          %v2663 = vand.u32 %v2475, 2147483648
          %v2664 = vor.u32 1.1754944e-38, %v2663
          %v2665 = vsel %vm2662, %v2664, %v2660
          %v2666 = vmul.f32 %v2400, %v2665
          %v2667 = vrcp.pop %v2480
          %v2668 = vmul.f32 %v2480, %v2667
          %v2669 = vsub.f32 1.0, %v2668
          %v2670 = vmul.f32 %v2667, %v2669
          %v2671 = vadd.f32 %v2667, %v2670
          %vm2672 = vweird.f32 %v2480
          %vm2673 = vweird.f32 %v2667
          %vm2674 = vmor %vm2672, %vm2673
          %v2675 = vsel %vm2674, %v2667, %v2671
          %v2676 = vand.u32 2147483647, %v2480
          %vm2677 = vcmp.eq.f32.partialorder %v2676, 8.507059e+37
          %v2678 = vand.u32 %v2480, 2147483648
          %v2679 = vor.u32 1.1754944e-38, %v2678
          %v2680 = vsel %vm2677, %v2679, %v2675
          %v2681 = vmul.f32 %v2401, %v2680
          %v2682 = vrcp.pop %v2485
          %v2683 = vmul.f32 %v2485, %v2682
          %v2684 = vsub.f32 1.0, %v2683
          %v2685 = vmul.f32 %v2682, %v2684
          %v2686 = vadd.f32 %v2682, %v2685
          %vm2687 = vweird.f32 %v2485
          %vm2688 = vweird.f32 %v2682
          %vm2689 = vmor %vm2687, %vm2688
          %v2690 = vsel %vm2689, %v2682, %v2686
          %v2691 = vand.u32 2147483647, %v2485
          %vm2692 = vcmp.eq.f32.partialorder %v2691, 8.507059e+37
          %v2693 = vand.u32 %v2485, 2147483648
          %v2694 = vor.u32 1.1754944e-38, %v2693
          %v2695 = vsel %vm2692, %v2694, %v2690
          %v2696 = vmul.f32 %v2402, %v2695
          %v2697 = vrcp.pop %v2490
          %v2698 = vmul.f32 %v2490, %v2697
          %v2699 = vsub.f32 1.0, %v2698
          %v2700 = vmul.f32 %v2697, %v2699
          %v2701 = vadd.f32 %v2697, %v2700
          %vm2702 = vweird.f32 %v2490
          %vm2703 = vweird.f32 %v2697
          %vm2704 = vmor %vm2702, %vm2703
          %v2705 = vsel %vm2704, %v2697, %v2701
          %v2706 = vand.u32 2147483647, %v2490
          %vm2707 = vcmp.eq.f32.partialorder %v2706, 8.507059e+37
          %v2708 = vand.u32 %v2490, 2147483648
          %v2709 = vor.u32 1.1754944e-38, %v2708
          %v2710 = vsel %vm2707, %v2709, %v2705
          %v2711 = vmul.f32 %v2403, %v2710
          %v2712 = vrcp.pop %v2495
          %v2713 = vmul.f32 %v2495, %v2712
          %v2714 = vsub.f32 1.0, %v2713
          %v2715 = vmul.f32 %v2712, %v2714
          %v2716 = vadd.f32 %v2712, %v2715
          %vm2717 = vweird.f32 %v2495
          %vm2718 = vweird.f32 %v2712
          %vm2719 = vmor %vm2717, %vm2718
          %v2720 = vsel %vm2719, %v2712, %v2716
          %v2721 = vand.u32 2147483647, %v2495
          %vm2722 = vcmp.eq.f32.partialorder %v2721, 8.507059e+37
          %v2723 = vand.u32 %v2495, 2147483648
          %v2724 = vor.u32 1.1754944e-38, %v2723
          %v2725 = vsel %vm2722, %v2724, %v2720
          %v2726 = vmul.f32 %v2404, %v2725
          %v2727 = vrcp.pop %v2500
          %v2728 = vmul.f32 %v2500, %v2727
          %v2729 = vsub.f32 1.0, %v2728
          %v2730 = vmul.f32 %v2727, %v2729
          %v2731 = vadd.f32 %v2727, %v2730
          %vm2732 = vweird.f32 %v2500
          %vm2733 = vweird.f32 %v2727
          %vm2734 = vmor %vm2732, %vm2733
          %v2735 = vsel %vm2734, %v2727, %v2731
          %v2736 = vand.u32 2147483647, %v2500
          %vm2737 = vcmp.eq.f32.partialorder %v2736, 8.507059e+37
          %v2738 = vand.u32 %v2500, 2147483648
          %v2739 = vor.u32 1.1754944e-38, %v2738
          %v2740 = vsel %vm2737, %v2739, %v2735
          %v2741 = vmul.f32 %v2405, %v2740
          %2742 = vst [vmem:[%s323] sm:$0xff] %v2516
          %2743 = vst [vmem:[%s323 + $0x8] sm:$0xff] %v2531
          %2744 = vst [vmem:[%s323 + $0x10] sm:$0xff] %v2546
          %2745 = vst [vmem:[%s323 + $0x18] sm:$0xff] %v2561
          %2746 = vst [vmem:[%s323 + $0x20] sm:$0xff] %v2576
          %2747 = vst [vmem:[%s323 + $0x28] sm:$0xff] %v2591
          %2748 = vst [vmem:[%s323 + $0x30] sm:$0xff] %v2606
          %2749 = vst [vmem:[%s323 + $0x38] sm:$0xff] %v2621
          %2750 = vst [vmem:[%s323 + $0x40] sm:$0xff] %v2636
          %2751 = vst [vmem:[%s323 + $0x48] sm:$0xff] %v2651
          %2752 = vst [vmem:[%s323 + $0x50] sm:$0xff] %v2666
          %2753 = vst [vmem:[%s323 + $0x58] sm:$0xff] %v2681
          %2754 = vst [vmem:[%s323 + $0x60] sm:$0xff] %v2696
          %2755 = vst [vmem:[%s323 + $0x68] sm:$0xff] %v2711
          %2756 = vst [vmem:[%s323 + $0x70] sm:$0xff] %v2726
          %2757 = vst [vmem:[%s323 + $0x78] sm:$0xff] %v2741
        $region60: #{tpu_custom_call.1} parent=31 // pred_fallthru
          _
        %s2758 = sand.u32 %s152, 1
        %s2759 = scalar_lea.sflag [#allocation11], %s2758
        %s2760 = sand.u32 %s152, 1
        %s2761 = smul.addr %s2760, 128
        %s2762 = scalar_lea.vmem [#allocation15], %s2761
        // Predicated region
        $region61: #{tpu_custom_call.1} parent=31 // pred_check
          %p2763 = pneg %p162
        $region62: #{tpu_custom_call.1} parent=31 // pred_check_branch
          %2765 = sbr.rel (%p2763) target = $region64
        $region63: #{tpu_custom_call.1} parent=31 // pred_region
          %s2766 = sld [smem:[#allocation7 + %s43]]
          %s2767 = smul.u32 16, %s2766
          %2769 = vsyncadd %s2759, 0
          %s2770 = smul.addr %s42, 32
          %s2771 = sadd.s32 %s2767, %s2770
          %s2772 = smul.addr %s2771, 8
          %s2773 = scalar_lea.hbm %s5, %s2772
          %s2774 = sshll.u32 %s2762, 4
          %s2775 = int_to_ptr.vmem [resolvable:$true] %s2774
          %s2776 = sshll.u32 %s2773, 4
          %s2777 = int_to_ptr.hbm [resolvable:$true] %s2776
          %2782 = dma.vmem_to_hbm [thread:$0]  %s2775, 2048, %s2777, %s2759, 128, 128, 8
        $region64: #{tpu_custom_call.1} parent=31 // pred_fallthru
          _
      $region32: #{tpu_custom_call.1} parent=5 // pred_fallthru
        _
      %p2783 = scmp.le.s32.totalorder 2, %s33
      // Predicated region
      $region65: #{tpu_custom_call.1} parent=5 // pred_check
        %p2784 = pneg %p2783
      $region66: #{tpu_custom_call.1} parent=5 // pred_check_branch
        %2786 = sbr.rel (%p2784) target = $region68
      $region67: #{tpu_custom_call.1} parent=5 // pred_region
        %s2787 = ssub.s32 %s33, 2
        // Predicated region
        $region69: #{tpu_custom_call.1} parent=67 // pred_check
          %p2788 = pneg %p168
        $region70: #{tpu_custom_call.1} parent=67 // pred_check_branch
          %2790 = sbr.rel (%p2788) target = $region72
        $region71: #{tpu_custom_call.1} parent=67 // pred_region
          %s2791 = sand.u32 %s153, 1
          %s2792 = scalar_lea.sflag [#allocation11], %s2791
          %s2793 = sand.u32 %s153, 1
          %s2794 = smul.addr %s2793, 128
          %s2795 = scalar_lea.vmem [#allocation15], %s2794
          %2797 = dma.done %s2792, 2048
        $region72: #{tpu_custom_call.1} parent=67 // pred_fallthru
          _
      $region68: #{tpu_custom_call.1} parent=5 // pred_fallthru
        _
    $region6: #{tpu_custom_call.1} parent=1 // loop_footer
      %s37 = sadd.s32 1, %s33
    $region7: #{tpu_custom_call.1} parent=1 // loop_footer_branch
      %32 = sbr.rel target = $region3
    $region8: #{tpu_custom_call.1} parent=1 // loop_exit
      _
    %2798 = vsyncpa [#allocation10], 1
    %s2799 = scalar_lea.sflag [#allocation10], 1
    %2800 = vsyncpa %s2799, 1
    %2801 = vsyncpa [#allocation13], 1
    %s2802 = scalar_lea.sflag [#allocation13], 1
    %2803 = vsyncpa %s2802, 1
    %2804 = vsyncpa [#allocation11], 1
    %s2805 = scalar_lea.sflag [#allocation11], 1
    %2806 = vsyncpa %s2805, 1

</llo_original>
